<compile_context>
chip_gen: v7x
topology: tpu7x:2x2x1
jax: 0.10.0
libtpu: 0.0.40
codegen_flags: <defaults>
</compile_context>

<pallas_src>
import functools
import math

import jax
import jax.numpy as jnp
from jax import lax
from jax.experimental import pallas as pl
from jax.experimental.pallas import tpu as pltpu


def _round_up(x, m):
    return ((x + m - 1) // m) * m


def _flash_kernel(*refs, sm_scale, is_causal, block_q, block_k,
                  kv_len, kv_len_padded, has_mask):
    if has_mask:
        q_ref, k_ref, v_ref, mask_ref, o_ref, m_sc, l_sc, acc_sc = refs
    else:
        q_ref, k_ref, v_ref, o_ref, m_sc, l_sc, acc_sc = refs
        mask_ref = None

    qi = pl.program_id(2)
    kv = pl.program_id(3)

    @pl.when(kv == 0)
    def _init():
        m_sc[...] = jnp.full_like(m_sc, -jnp.inf)
        l_sc[...] = jnp.zeros_like(l_sc)
        acc_sc[...] = jnp.zeros_like(acc_sc)

    def _compute():
        q = q_ref[0, 0]                      # (block_q, D), input dtype
        k = k_ref[0, 0]                      # (block_k, D), input dtype
        v = v_ref[0, 0]                      # (block_k, D), input dtype

        # MXU matmul in the input dtype (bf16 in production), f32 accumulation.
        s = lax.dot_general(q, k, (((1,), (1,)), ((), ())),
                            preferred_element_type=jnp.float32)
        s = s * sm_scale

        if has_mask:
            s = s + mask_ref[0, 0].astype(jnp.float32)

        keep = None
        if is_causal:
            row = qi * block_q + lax.broadcasted_iota(jnp.int32, (block_q, block_k), 0)
            col = kv * block_k + lax.broadcasted_iota(jnp.int32, (block_q, block_k), 1)
            keep = col <= row
        if kv_len_padded != kv_len:
            col = kv * block_k + lax.broadcasted_iota(jnp.int32, (block_q, block_k), 1)
            valid = col < kv_len
            keep = valid if keep is None else (keep & valid)
        if keep is not None:
            s = jnp.where(keep, s, -1e30)

        # Online softmax update (f32 state).
        m_prev = m_sc[...]
        m_new = jnp.maximum(m_prev, s.max(axis=-1, keepdims=True))
        alpha = jnp.exp(m_prev - m_new)
        p = jnp.exp(s - m_new)
        l_sc[...] = alpha * l_sc[...] + p.sum(axis=-1, keepdims=True)
        acc_sc[...] = alpha * acc_sc[...] + jnp.dot(
            p.astype(v.dtype), v, preferred_element_type=jnp.float32)
        m_sc[...] = m_new

    if is_causal:
        # Skip KV blocks entirely above the causal diagonal.
        # TODO(synk): restructure the grid (scalar-prefetch per-qi kv counts) so
        # the skipped blocks' K/V/mask DMAs are elided as well.
        @pl.when(kv * block_k <= qi * block_q + block_q - 1)
        def _():
            _compute()
    else:
        _compute()

    @pl.when(kv == pl.num_programs(3) - 1)
    def _finalize():
        inv = pl.reciprocal(l_sc[...], approx=True)   # EUP vrcp, ~free
        o_ref[0, 0] = (acc_sc[...] * inv).astype(o_ref.dtype)


def fused_sdpa_pallas(query, key, value, attn_mask=None, dropout_p=0.0,
                      is_causal=False, scale=None, softmax_mode="None",
                      recompute_mode=False, valid_sequence_lengths=None,
                      padding_side="left", *, block_q=256, block_k=256):
    """Pallas equivalent of Gaudi FusedSDPA.apply (inference, dropout_p == 0)."""
    B, H, Sq, D = query.shape
    Sk = key.shape[2]
    if scale is None:
        scale = 1.0 / math.sqrt(D)
    assert dropout_p == 0.0, "dropout not supported in this kernel"
    # TODO(synk): valid_sequence_lengths / padding_side / fp8 & 'fast' softmax_mode /
    # recompute_mode are accepted for interface parity but have no effect here.

    # Tile sizes: clamp to (padded) sequence extents; keep the (8,128) rule.
    # Note for v5e: 128x128 tiles already match its 4x128 MXU; 256 tiles still
    # fit VMEM comfortably (double-buffered tiles < 1 MiB).
    block_q = min(block_q, _round_up(Sq, 8))
    block_k = min(block_k, _round_up(Sk, 128))
    Sq_pad = _round_up(Sq, block_q)
    Sk_pad = _round_up(Sk, block_k)

    q, k, v = query, key, value
    if Sq_pad != Sq:
        q = jnp.pad(q, ((0, 0), (0, 0), (0, Sq_pad - Sq), (0, 0)))
    if Sk_pad != Sk:
        k = jnp.pad(k, ((0, 0), (0, 0), (0, Sk_pad - Sk), (0, 0)))
        v = jnp.pad(v, ((0, 0), (0, 0), (0, Sk_pad - Sk), (0, 0)))

    inputs = [q, k, v]
    in_specs = [
        pl.BlockSpec((1, 1, block_q, D), lambda b, h, qi, kv: (b, h, qi, 0)),
        pl.BlockSpec((1, 1, block_k, D), lambda b, h, qi, kv: (b, h, kv, 0)),
        pl.BlockSpec((1, 1, block_k, D), lambda b, h, qi, kv: (b, h, kv, 0)),
    ]

    has_mask = attn_mask is not None
    if has_mask:
        am = attn_mask
        if am.ndim == 2:
            am = am[None, None]
        elif am.ndim == 3:
            am = am[:, None]
        Bm, Hm = int(am.shape[0]), int(am.shape[1])
        assert Bm in (1, B) and Hm in (1, H), "attn_mask not broadcastable"
        # Broadcast only the seq dims; keep batch/head dims un-duplicated and
        # keep the mask in its original dtype (no H-times blowup in HBM).
        am = jnp.broadcast_to(am, (Bm, Hm, Sq, Sk))
        if Sq_pad != Sq or Sk_pad != Sk:
            am = jnp.pad(am, ((0, 0), (0, 0), (0, Sq_pad - Sq), (0, Sk_pad - Sk)))

        def _mask_index(b, h, qi, kv, _Bm=Bm, _Hm=Hm):
            return (b if _Bm == B else 0, h if _Hm == H else 0, qi, kv)

        in_specs.append(pl.BlockSpec((1, 1, block_q, block_k), _mask_index))
        inputs.append(am)

    kernel = functools.partial(
        _flash_kernel, sm_scale=float(scale), is_causal=bool(is_causal),
        block_q=block_q, block_k=block_k, kv_len=Sk, kv_len_padded=Sk_pad,
        has_mask=has_mask)

    out = pl.pallas_call(
        kernel,
        out_shape=jax.ShapeDtypeStruct((B, H, Sq_pad, D), query.dtype),
        grid_spec=pltpu.PrefetchScalarGridSpec(
            num_scalar_prefetch=0,
            grid=(B, H, Sq_pad // block_q, Sk_pad // block_k),
            in_specs=in_specs,
            out_specs=pl.BlockSpec((1, 1, block_q, D),
                                   lambda b, h, qi, kv: (b, h, qi, 0)),
            scratch_shapes=[
                pltpu.VMEM((block_q, 1), jnp.float32),   # running max
                pltpu.VMEM((block_q, 1), jnp.float32),   # running denom
                pltpu.VMEM((block_q, D), jnp.float32),   # output accumulator
            ],
        ),
        compiler_params=pltpu.CompilerParams(
            dimension_semantics=("parallel", "parallel", "parallel", "arbitrary")),
    )(*inputs)

    if Sq_pad != Sq:
        out = out[:, :, :Sq, :]
    return out


class GaudiDistributedAttention:
    """Mirror of the PyTorch module (single-device / no sequence-parallel)."""
    # TODO(synk): the DeepSpeed sequence-parallel DistributedAttention branch
    # (all-to-all over a sequence-parallel group) is not implemented here.

    def __init__(self, scale, attention_dropout, enable_recompute=False,
                 flash_attention_fp8=False):
        self.scale = scale
        self.attention_dropout = attention_dropout
        self.enable_recompute = enable_recompute
        self.flash_attention_fp8 = flash_attention_fp8

    def __call__(self, query, key, value, attn_mask, dropout_p, is_causal,
                 scale, softmax_mode, recompute_mode, valid_sequence_lengths,
                 padding_side="left"):
        # sequence-parallel world size == 1 -> plain fused SDPA path
        return fused_sdpa_pallas(query, key, value, attn_mask, dropout_p,
                                 is_causal, scale, softmax_mode, recompute_mode,
                                 valid_sequence_lengths, padding_side)


def _reference_sdpa(q, k, v, attn_mask, is_causal, scale):
    Sq, Sk = q.shape[2], k.shape[2]
    s = jnp.einsum("bhqd,bhkd->bhqk", q.astype(jnp.float32),
                   k.astype(jnp.float32)) * scale
    if attn_mask is not None:
        s = s + attn_mask.astype(jnp.float32)
    if is_causal:
        row = jnp.arange(Sq)[:, None]
        col = jnp.arange(Sk)[None, :]
        s = jnp.where(col <= row, s, -1e30)
    p = jax.nn.softmax(s, axis=-1)
    return jnp.einsum("bhqk,bhkd->bhqd", p, v.astype(jnp.float32)).astype(q.dtype)


if __name__ == "__main__":
    root = jax.random.PRNGKey(0)
    kq, kk, kv_, km = jax.random.split(root, 4)

    B, H, S, D = 2, 2, 256, 64
    scale = 1.0 / math.sqrt(D)
    attn = GaudiDistributedAttention(scale=scale, attention_dropout=0.0)

    # ---- test 1: f32, additive mask broadcast over heads, causal ----
    query = jax.random.normal(kq, (B, H, S, D), dtype=jnp.float32)
    key_ = jax.random.normal(kk, (B, H, S, D), dtype=jnp.float32)
    value = jax.random.normal(kv_, (B, H, S, D), dtype=jnp.float32)
    attn_mask = 0.1 * jax.random.normal(km, (B, 1, S, S), dtype=jnp.float32)

    out = attn(query, key_, value, attn_mask, 0.0, True, scale,
               "None", False, None, "left")
    out = jax.block_until_ready(out)
    ref = _reference_sdpa(query, key_, value, attn_mask, True, scale)
    assert out.shape == (B, H, S, D)
    err = float(jnp.abs(out - ref).max())
    assert err < 2e-2, f"masked causal mismatch: {err}"

    # ---- test 2: no mask (mask-free kernel variant, no mask DMA), causal ----
    out2 = attn(query, key_, value, None, 0.0, True, scale,
                "None", False, None, "left")
    out2 = jax.block_until_ready(out2)
    ref2 = _reference_sdpa(query, key_, value, None, True, scale)
    err2 = float(jnp.abs(out2 - ref2).max())
    assert err2 < 2e-2, f"maskless causal mismatch: {err2}"

    # ---- test 3: bf16 operands (production dtype), non-multiple seq length ----
    S3 = 200
    q3 = jax.random.normal(kq, (1, H, S3, D), dtype=jnp.float32).astype(jnp.bfloat16)
    k3 = jax.random.normal(kk, (1, H, S3, D), dtype=jnp.float32).astype(jnp.bfloat16)
    v3 = jax.random.normal(kv_, (1, H, S3, D), dtype=jnp.float32).astype(jnp.bfloat16)
    out3 = attn(q3, k3, v3, None, 0.0, True, scale, "None", False, None, "left")
    out3 = jax.block_until_ready(out3)
    ref3 = _reference_sdpa(q3.astype(jnp.float32), k3.astype(jnp.float32),
                           v3.astype(jnp.float32), None, True, scale)
    err3 = float(jnp.abs(out3.astype(jnp.float32) - ref3).max())
    assert out3.shape == (1, H, S3, D)
    assert err3 < 5e-2, f"bf16 ragged causal mismatch: {err3}"

    print("KERNEL_OK")
</pallas_src>

<mosaic_0001>
module attributes {stable_mosaic.version = 11 : i64} {
  func.func @_flash_kernel(%arg0: i32, %arg1: i32, %arg2: i32, %arg3: i32, %arg4: memref<1x1x256x64xf32, #tpu.memory_space<vmem>>, %arg5: memref<1x1x256x64xf32, #tpu.memory_space<vmem>>, %arg6: memref<1x1x256x64xf32, #tpu.memory_space<vmem>>, %arg7: memref<1x1x256x256xf32, #tpu.memory_space<vmem>>, %arg8: memref<1x1x256x64xf32, #tpu.memory_space<vmem>>, %arg9: memref<256x1xf32, #tpu.memory_space<vmem>>, %arg10: memref<256x1xf32, #tpu.memory_space<vmem>>, %arg11: memref<256x64xf32, #tpu.memory_space<vmem>>) attributes {dimension_semantics = [#tpu.dimension_semantics<parallel>, #tpu.dimension_semantics<parallel>, #tpu.dimension_semantics<parallel>, #tpu.dimension_semantics<arbitrary>], iteration_bounds = array<i64: 2, 2, 1, 1>, scalar_prefetch = 0 : i64, scratch_operands = 3 : i64, tpu.core_type = #tpu.core_type<tc>, window_params = [{transform_indices = @transform_0, window_bounds = array<i64: 1, 1, 256, 64>}, {transform_indices = @transform_1, window_bounds = array<i64: 1, 1, 256, 64>}, {transform_indices = @transform_2, window_bounds = array<i64: 1, 1, 256, 64>}, {transform_indices = @transform_3, window_bounds = array<i64: 1, 1, 256, 256>}, {transform_indices = @transform_4, window_bounds = array<i64: 1, 1, 256, 64>}]} {
    %c0_i32 = arith.constant 0 : i32
    %0 = arith.cmpi eq, %arg3, %c0_i32 : i32
    %1 = arith.extui %0 : i1 to i32
    %c0_i32_0 = arith.constant 0 : i32
    %2 = arith.cmpi ne, %1, %c0_i32_0 : i32
    scf.if %2 {
      %cst = arith.constant 0xFF800000 : f32
      %13 = vector.broadcast %cst : f32 to vector<256x1xf32>
      %c0 = arith.constant 0 : index
      %c0_6 = arith.constant 0 : index
      %14 = vector.load %arg9[%c0, %c0_6] : memref<256x1xf32, #tpu.memory_space<vmem>>, vector<256x1xf32>
      tpu.vector_store %arg9[%c0, %c0_6], %13 {strides = array<i32>} : memref<256x1xf32, #tpu.memory_space<vmem>>, vector<256x1xf32>,
      %cst_7 = arith.constant 0.000000e+00 : f32
      %15 = vector.broadcast %cst_7 : f32 to vector<256x1xf32>
      %c0_8 = arith.constant 0 : index
      %c0_9 = arith.constant 0 : index
      %16 = vector.load %arg10[%c0_8, %c0_9] : memref<256x1xf32, #tpu.memory_space<vmem>>, vector<256x1xf32>
      tpu.vector_store %arg10[%c0_8, %c0_9], %15 {strides = array<i32>} : memref<256x1xf32, #tpu.memory_space<vmem>>, vector<256x1xf32>,
      %cst_10 = arith.constant 0.000000e+00 : f32
      %17 = vector.broadcast %cst_10 : f32 to vector<256x64xf32>
      %c0_11 = arith.constant 0 : index
      %c0_12 = arith.constant 0 : index
      %18 = vector.load %arg11[%c0_11, %c0_12] : memref<256x64xf32, #tpu.memory_space<vmem>>, vector<256x64xf32>
      tpu.vector_store %arg11[%c0_11, %c0_12], %17 {strides = array<i32>} : memref<256x64xf32, #tpu.memory_space<vmem>>, vector<256x64xf32>,
    } else {
    }
    %c256_i32 = arith.constant 256 : i32
    %3 = arith.muli %arg3, %c256_i32 : i32
    %c256_i32_1 = arith.constant 256 : i32
    %4 = arith.muli %arg2, %c256_i32_1 : i32
    %c256_i32_2 = arith.constant 256 : i32
    %5 = arith.addi %4, %c256_i32_2 : i32
    %c1_i32 = arith.constant 1 : i32
    %6 = arith.subi %5, %c1_i32 : i32
    %7 = arith.cmpi sle, %3, %6 : i32
    %8 = arith.extui %7 : i1 to i32
    %c0_i32_3 = arith.constant 0 : i32
    %9 = arith.cmpi ne, %8, %c0_i32_3 : i32
    scf.if %9 {
      %c0 = arith.constant 0 : index
      %c0_6 = arith.constant 0 : index
      %c0_7 = arith.constant 0 : index
      %c0_8 = arith.constant 0 : index
      %13 = vector.load %arg4[%c0, %c0_6, %c0_7, %c0_8] : memref<1x1x256x64xf32, #tpu.memory_space<vmem>>, vector<1x1x256x64xf32>
      %14 = vector.shape_cast %13 : vector<1x1x256x64xf32> to vector<256x64xf32>
      %c0_9 = arith.constant 0 : index
      %c0_10 = arith.constant 0 : index
      %c0_11 = arith.constant 0 : index
      %c0_12 = arith.constant 0 : index
      %15 = vector.load %arg5[%c0_9, %c0_10, %c0_11, %c0_12] : memref<1x1x256x64xf32, #tpu.memory_space<vmem>>, vector<1x1x256x64xf32>
      %16 = vector.shape_cast %15 : vector<1x1x256x64xf32> to vector<256x64xf32>
      %c0_13 = arith.constant 0 : index
      %c0_14 = arith.constant 0 : index
      %c0_15 = arith.constant 0 : index
      %c0_16 = arith.constant 0 : index
      %17 = vector.load %arg6[%c0_13, %c0_14, %c0_15, %c0_16] : memref<1x1x256x64xf32, #tpu.memory_space<vmem>>, vector<1x1x256x64xf32>
      %18 = vector.shape_cast %17 : vector<1x1x256x64xf32> to vector<256x64xf32>
      %cst = arith.constant dense<0.000000e+00> : vector<256x256xf32>
      %19 = tpu.matmul %14, %16, %cst {dimension_numbers = #tpu.dot_dimension_numbers<[1], [1], [0], [0], [0, 0, 1, 0], [], []>} : vector<256x64xf32>, vector<256x64xf32>, vector<256x256xf32> -> vector<256x256xf32>
      %cst_17 = arith.constant 1.250000e-01 : f32
      %20 = vector.broadcast %cst_17 : f32 to vector<256x256xf32>
      %21 = arith.mulf %19, %20 : vector<256x256xf32>
      %c0_18 = arith.constant 0 : index
      %c0_19 = arith.constant 0 : index
      %c0_20 = arith.constant 0 : index
      %c0_21 = arith.constant 0 : index
      %22 = vector.load %arg7[%c0_18, %c0_19, %c0_20, %c0_21] : memref<1x1x256x256xf32, #tpu.memory_space<vmem>>, vector<1x1x256x256xf32>
      %23 = vector.shape_cast %22 : vector<1x1x256x256xf32> to vector<256x256xf32>
      %24 = arith.addf %21, %23 : vector<256x256xf32>
      %c256_i32_22 = arith.constant 256 : i32
      %25 = arith.muli %arg2, %c256_i32_22 : i32
      %26 = tpu.iota {dimensions = array<i32: 0>} : vector<256x256xi32>
      %27 = vector.broadcast %25 : i32 to vector<256x256xi32>
      %28 = arith.addi %27, %26 : vector<256x256xi32>
      %c256_i32_23 = arith.constant 256 : i32
      %29 = arith.muli %arg3, %c256_i32_23 : i32
      %30 = tpu.iota {dimensions = array<i32: 1>} : vector<256x256xi32>
      %31 = vector.broadcast %29 : i32 to vector<256x256xi32>
      %32 = arith.addi %31, %30 : vector<256x256xi32>
      %33 = arith.cmpi sle, %32, %28 : vector<256x256xi32>
      %cst_24 = arith.constant -1.000000e+30 : f32
      %34 = vector.broadcast %cst_24 : f32 to vector<256x256xf32>
      %35 = arith.select %33, %24, %34 : vector<256x256xi1>, vector<256x256xf32>
      %c0_25 = arith.constant 0 : index
      %c0_26 = arith.constant 0 : index
      %36 = vector.load %arg9[%c0_25, %c0_26] : memref<256x1xf32, #tpu.memory_space<vmem>>, vector<256x1xf32>
      %cst_27 = arith.constant dense<0xFF800000> : vector<256xf32>
      %37 = vector.multi_reduction <maximumf>, %35, %cst_27 [1] : vector<256x256xf32> to vector<256xf32>
      %38 = vector.shape_cast %37 : vector<256xf32> to vector<256x1xf32>
      %39 = arith.maximumf %36, %38 : vector<256x1xf32>
      %40 = arith.subf %36, %39 : vector<256x1xf32>
      %41 = math.exp %40 : vector<256x1xf32>
      %42 = vector.broadcast %39 : vector<256x1xf32> to vector<256x256xf32>
      %43 = arith.subf %35, %42 : vector<256x256xf32>
      %44 = math.exp %43 : vector<256x256xf32>
      %c0_28 = arith.constant 0 : index
      %c0_29 = arith.constant 0 : index
      %45 = vector.load %arg10[%c0_28, %c0_29] : memref<256x1xf32, #tpu.memory_space<vmem>>, vector<256x1xf32>
      %46 = arith.mulf %41, %45 : vector<256x1xf32>
      %cst_30 = arith.constant dense<0.000000e+00> : vector<256xf32>
      %47 = vector.multi_reduction <add>, %44, %cst_30 [1] : vector<256x256xf32> to vector<256xf32>
      %48 = vector.shape_cast %47 : vector<256xf32> to vector<256x1xf32>
      %49 = arith.addf %46, %48 : vector<256x1xf32>
      %c0_31 = arith.constant 0 : index
      %c0_32 = arith.constant 0 : index
      %50 = vector.load %arg10[%c0_31, %c0_32] : memref<256x1xf32, #tpu.memory_space<vmem>>, vector<256x1xf32>
      tpu.vector_store %arg10[%c0_31, %c0_32], %49 {strides = array<i32>} : memref<256x1xf32, #tpu.memory_space<vmem>>, vector<256x1xf32>,
      %c0_33 = arith.constant 0 : index
      %c0_34 = arith.constant 0 : index
      %51 = vector.load %arg11[%c0_33, %c0_34] : memref<256x64xf32, #tpu.memory_space<vmem>>, vector<256x64xf32>
      %52 = vector.broadcast %41 : vector<256x1xf32> to vector<256x64xf32>
      %53 = arith.mulf %52, %51 : vector<256x64xf32>
      %cst_35 = arith.constant dense<0.000000e+00> : vector<256x64xf32>
      %54 = tpu.matmul %44, %18, %cst_35 {dimension_numbers = #tpu.dot_dimension_numbers<[1], [0], [0], [1], [0, 0, 1, 1], [], []>} : vector<256x256xf32>, vector<256x64xf32>, vector<256x64xf32> -> vector<256x64xf32>
      %55 = arith.addf %53, %54 : vector<256x64xf32>
      %c0_36 = arith.constant 0 : index
      %c0_37 = arith.constant 0 : index
      %56 = vector.load %arg11[%c0_36, %c0_37] : memref<256x64xf32, #tpu.memory_space<vmem>>, vector<256x64xf32>
      tpu.vector_store %arg11[%c0_36, %c0_37], %55 {strides = array<i32>} : memref<256x64xf32, #tpu.memory_space<vmem>>, vector<256x64xf32>,
      %c0_38 = arith.constant 0 : index
      %c0_39 = arith.constant 0 : index
      %57 = vector.load %arg9[%c0_38, %c0_39] : memref<256x1xf32, #tpu.memory_space<vmem>>, vector<256x1xf32>
      tpu.vector_store %arg9[%c0_38, %c0_39], %39 {strides = array<i32>} : memref<256x1xf32, #tpu.memory_space<vmem>>, vector<256x1xf32>,
    } else {
    }
    %c0_i32_4 = arith.constant 0 : i32
    %10 = arith.cmpi eq, %arg3, %c0_i32_4 : i32
    %11 = arith.extui %10 : i1 to i32
    %c0_i32_5 = arith.constant 0 : i32
    %12 = arith.cmpi ne, %11, %c0_i32_5 : i32
    scf.if %12 {
      %c0 = arith.constant 0 : index
      %c0_6 = arith.constant 0 : index
      %13 = vector.load %arg10[%c0, %c0_6] : memref<256x1xf32, #tpu.memory_space<vmem>>, vector<256x1xf32>
      %14 = tpu.reciprocal %13 {approx = true} : vector<256x1xf32> -> vector<256x1xf32>
      %c0_7 = arith.constant 0 : index
      %c0_8 = arith.constant 0 : index
      %15 = vector.load %arg11[%c0_7, %c0_8] : memref<256x64xf32, #tpu.memory_space<vmem>>, vector<256x64xf32>
      %16 = vector.broadcast %14 : vector<256x1xf32> to vector<256x64xf32>
      %17 = arith.mulf %15, %16 : vector<256x64xf32>
      %c0_9 = arith.constant 0 : index
      %c0_10 = arith.constant 0 : index
      %c0_11 = arith.constant 0 : index
      %c0_12 = arith.constant 0 : index
      %18 = vector.load %arg8[%c0_9, %c0_10, %c0_11, %c0_12] : memref<1x1x256x64xf32, #tpu.memory_space<vmem>>, vector<1x1x256x64xf32>
      %19 = vector.shape_cast %18 : vector<1x1x256x64xf32> to vector<256x64xf32>
      %20 = vector.shape_cast %17 : vector<256x64xf32> to vector<1x1x256x64xf32>
      tpu.vector_store %arg8[%c0_9, %c0_10, %c0_11, %c0_12], %20 {strides = array<i32>} : memref<1x1x256x64xf32, #tpu.memory_space<vmem>>, vector<1x1x256x64xf32>,
    } else {
    }
    return
  }
  func.func @transform_0(%arg0: i32, %arg1: i32, %arg2: i32, %arg3: i32) -> (i32, i32, i32, i32) {
    %c0_i32 = arith.constant 0 : i32
    %c0_i32_0 = arith.constant 0 : i32
    return %arg0, %arg1, %arg2, %c0_i32 : i32, i32, i32, i32
  }
  func.func @transform_1(%arg0: i32, %arg1: i32, %arg2: i32, %arg3: i32) -> (i32, i32, i32, i32) {
    %c0_i32 = arith.constant 0 : i32
    %c0_i32_0 = arith.constant 0 : i32
    return %arg0, %arg1, %arg3, %c0_i32 : i32, i32, i32, i32
  }
  func.func @transform_2(%arg0: i32, %arg1: i32, %arg2: i32, %arg3: i32) -> (i32, i32, i32, i32) {
    %c0_i32 = arith.constant 0 : i32
    %c0_i32_0 = arith.constant 0 : i32
    return %arg0, %arg1, %arg3, %c0_i32 : i32, i32, i32, i32
  }
  func.func @transform_3(%arg0: i32, %arg1: i32, %arg2: i32, %arg3: i32) -> (i32, i32, i32, i32) {
    %c0_i32 = arith.constant 0 : i32
    %c0_i32_0 = arith.constant 0 : i32
    return %arg0, %c0_i32, %arg2, %arg3 : i32, i32, i32, i32
  }
  func.func @transform_4(%arg0: i32, %arg1: i32, %arg2: i32, %arg3: i32) -> (i32, i32, i32, i32) {
    %c0_i32 = arith.constant 0 : i32
    %c0_i32_0 = arith.constant 0 : i32
    return %arg0, %arg1, %arg2, %c0_i32 : i32, i32, i32, i32
  }
}

</mosaic_0001>

<llo_original>
// kernel: tpu_custom_call.1
$region0: #{tpu_custom_call.1}
  #allocation0 [shape = 'u32[]', space=smem, size = 0x4, offset = 0x4, fixed_abs, tag = 'smem constant byte address 0x4 - core index']
  #allocation1 [shape = 'u32[144,128]{1,0:T(1,128)}', space=vmem, size = 0x12000, scoped, tag = 'internal scratch']
  #allocation2 [shape = 'f32[256,1]{1,0:T(8,128)}', space=vmem, size = 0x20000, scoped, tag = 'scratch operand']
  #allocation3 [shape = 'f32[256,1]{1,0:T(8,128)}', space=vmem, size = 0x20000, scoped, tag = 'scratch operand']
  #allocation4 [shape = 'f32[256,64]{1,0:T(8,128)}', space=vmem, size = 0x20000, scoped, tag = 'scratch operand']
  %s0 = inlined_call_operand.vmem [shape: f32[2,2,256,64], index: 0, kind: input, shape index: {}]
  %s1 = inlined_call_operand.vmem [shape: f32[2,2,256,64], index: 1, kind: input, shape index: {}]
  %s2 = inlined_call_operand.vmem [shape: f32[2,2,256,64], index: 2, kind: input, shape index: {}]
  %s3 = inlined_call_operand.vmem [shape: f32[2,1,256,256], index: 3, kind: input, shape index: {}]
  %s4 = inlined_call_operand.vmem [shape: f32[2,2,256,64], index: 4, kind: output, shape index: {}]
  %s5 = sld [smem:[#allocation0]]
  $region61: #{tpu_custom_call.1} parent=0
    _
  %s7 = ssub.s32 1, %s5
  %s8 = scalar_select 0, %s7, %s5
  loop: start=0, step=1, limit=6
  $region2: #{tpu_custom_call.1} parent=0 // loop_pre_header
    _
  $region3: #{tpu_custom_call.1} parent=0 // loop_header
    %s10 = sphi 0, %s14
    %p11 = scmp.ge.s32.totalorder %s10, 6
    %s17 = sphi 0, %s43
    %s18 = sphi 0, %s39
    %s19 = sphi 0, %s35
    %s20 = sphi 0, %s31
    %s21 = sphi 0, %s17
    %s22 = sphi 0, %s18
    %s23 = sphi 0, %s19
    %s24 = sphi 0, %s20
    %s25 = sphi 0, %s21
    %s26 = sphi 0, %s22
    %s27 = sphi 0, %s23
    %s28 = sphi 0, %s24
    %s50 = sphi 0, %s52
    %s53 = sphi 0, %s50
    %s54 = sphi 0, %s53
    %s70 = sphi 0, %s54
    %s80 = sphi 0, %s82
    %s83 = sphi 0, %s80
    %s84 = sphi 0, %s83
    %s100 = sphi 0, %s84
    %s110 = sphi 0, %s112
    %s113 = sphi 0, %s110
    %s114 = sphi 0, %s113
    %s130 = sphi 0, %s114
    %s140 = sphi 0, %s142
    %s143 = sphi 0, %s140
    %s144 = sphi 0, %s143
    %s160 = sphi 0, %s144
    %s170 = sphi 0, %s172
    %s173 = sphi 0, %s170
    %s174 = sphi 0, %s173
    %s190 = sphi 0, %s174
  $region4: #{tpu_custom_call.1} parent=0 // loop_header_branch
    %13 = sbr.rel (%p11) target = $region8
  $region5: #{tpu_custom_call.1} parent=0 // loop_body
    %s15 = ssub.s32 %s10, 1
    %s16 = ssub.s32 %s10, 2
    %s29 = sadd.s32 1, %s20
    %p30 = scmp.ge.s32.totalorder %s29, 1
    %s31 = scalar_select %p30, 0, %s29
    %s32 = sadd.s32 1, %s19
    %s33 = scalar_select %p30, %s32, %s19
    %p34 = scmp.ge.s32.totalorder %s33, 1
    %s35 = scalar_select %p34, 0, %s33
    %s36 = sadd.s32 1, %s18
    %s37 = scalar_select %p34, %s36, %s18
    %p38 = scmp.ge.s32.totalorder %s37, 2
    %s39 = scalar_select %p38, 0, %s37
    %s40 = sadd.s32 1, %s17
    %s41 = scalar_select %p38, %s40, %s17
    %p42 = scmp.ge.s32.totalorder %s41, 2
    %s43 = scalar_select %p42, 0, %s41
    %s44 = ssub.s32 %s17, %s43
    %s45 = ssub.s32 %s18, %s39
    %s46 = sor.u32 %s44, %s45
    %s47 = ssub.s32 %s19, %s35
    %s48 = sor.u32 %s46, %s47
    %p49 = scmp.eq.s32.totalorder %s48, 0
    %s51 = sadd.s32 %s50, 1
    %s52 = scalar_select %p49, %s50, %s51
    %p55 = pneg %p49
    %p56 = scmp.eq.s32.totalorder %s10, 3
    %p57 = por %p55, %p56
    %p58 = scmp.ne.s32.totalorder %s50, %s53
    %p59 = scmp.eq.s32.totalorder %s10, 0
    %p60 = por %p58, %p59
    %p61 = scmp.ne.s32.totalorder %s50, %s53
    %p62 = scmp.eq.s32.totalorder %s15, 3
    %p63 = por %p61, %p62
    %p64 = scmp.ne.s32.totalorder %s53, %s54
    %p65 = scmp.eq.s32.totalorder %s15, 0
    %p66 = por %p64, %p65
    %p67 = scmp.ne.s32.totalorder %s53, %s54
    %p68 = scmp.eq.s32.totalorder %s16, 3
    %p69 = por %p67, %p68
    %p71 = scmp.ne.s32.totalorder %s54, %s70
    %p72 = scmp.eq.s32.totalorder %s16, 0
    %p73 = por %p71, %p72
    %s74 = ssub.s32 %s17, %s43
    %s75 = ssub.s32 %s18, %s39
    %s76 = sor.u32 %s74, %s75
    %s77 = ssub.s32 %s20, %s31
    %s78 = sor.u32 %s76, %s77
    %p79 = scmp.eq.s32.totalorder %s78, 0
    %s81 = sadd.s32 %s80, 1
    %s82 = scalar_select %p79, %s80, %s81
    %p85 = pneg %p79
    %p86 = scmp.eq.s32.totalorder %s10, 3
    %p87 = por %p85, %p86
    %p88 = scmp.ne.s32.totalorder %s80, %s83
    %p89 = scmp.eq.s32.totalorder %s10, 0
    %p90 = por %p88, %p89
    %p91 = scmp.ne.s32.totalorder %s80, %s83
    %p92 = scmp.eq.s32.totalorder %s15, 3
    %p93 = por %p91, %p92
    %p94 = scmp.ne.s32.totalorder %s83, %s84
    %p95 = scmp.eq.s32.totalorder %s15, 0
    %p96 = por %p94, %p95
    %p97 = scmp.ne.s32.totalorder %s83, %s84
    %p98 = scmp.eq.s32.totalorder %s16, 3
    %p99 = por %p97, %p98
    %p101 = scmp.ne.s32.totalorder %s84, %s100
    %p102 = scmp.eq.s32.totalorder %s16, 0
    %p103 = por %p101, %p102
    %s104 = ssub.s32 %s17, %s43
    %s105 = ssub.s32 %s18, %s39
    %s106 = sor.u32 %s104, %s105
    %s107 = ssub.s32 %s20, %s31
    %s108 = sor.u32 %s106, %s107
    %p109 = scmp.eq.s32.totalorder %s108, 0
    %s111 = sadd.s32 %s110, 1
    %s112 = scalar_select %p109, %s110, %s111
    %p115 = pneg %p109
    %p116 = scmp.eq.s32.totalorder %s10, 3
    %p117 = por %p115, %p116
    %p118 = scmp.ne.s32.totalorder %s110, %s113
    %p119 = scmp.eq.s32.totalorder %s10, 0
    %p120 = por %p118, %p119
    %p121 = scmp.ne.s32.totalorder %s110, %s113
    %p122 = scmp.eq.s32.totalorder %s15, 3
    %p123 = por %p121, %p122
    %p124 = scmp.ne.s32.totalorder %s113, %s114
    %p125 = scmp.eq.s32.totalorder %s15, 0
    %p126 = por %p124, %p125
    %p127 = scmp.ne.s32.totalorder %s113, %s114
    %p128 = scmp.eq.s32.totalorder %s16, 3
    %p129 = por %p127, %p128
    %p131 = scmp.ne.s32.totalorder %s114, %s130
    %p132 = scmp.eq.s32.totalorder %s16, 0
    %p133 = por %p131, %p132
    %s134 = ssub.s32 %s17, %s43
    %s135 = ssub.s32 %s19, %s35
    %s136 = sor.u32 %s134, %s135
    %s137 = ssub.s32 %s20, %s31
    %s138 = sor.u32 %s136, %s137
    %p139 = scmp.eq.s32.totalorder %s138, 0
    %s141 = sadd.s32 %s140, 1
    %s142 = scalar_select %p139, %s140, %s141
    %p145 = pneg %p139
    %p146 = scmp.eq.s32.totalorder %s10, 3
    %p147 = por %p145, %p146
    %p148 = scmp.ne.s32.totalorder %s140, %s143
    %p149 = scmp.eq.s32.totalorder %s10, 0
    %p150 = por %p148, %p149
    %p151 = scmp.ne.s32.totalorder %s140, %s143
    %p152 = scmp.eq.s32.totalorder %s15, 3
    %p153 = por %p151, %p152
    %p154 = scmp.ne.s32.totalorder %s143, %s144
    %p155 = scmp.eq.s32.totalorder %s15, 0
    %p156 = por %p154, %p155
    %p157 = scmp.ne.s32.totalorder %s143, %s144
    %p158 = scmp.eq.s32.totalorder %s16, 3
    %p159 = por %p157, %p158
    %p161 = scmp.ne.s32.totalorder %s144, %s160
    %p162 = scmp.eq.s32.totalorder %s16, 0
    %p163 = por %p161, %p162
    %s164 = ssub.s32 %s17, %s43
    %s165 = ssub.s32 %s18, %s39
    %s166 = sor.u32 %s164, %s165
    %s167 = ssub.s32 %s19, %s35
    %s168 = sor.u32 %s166, %s167
    %p169 = scmp.eq.s32.totalorder %s168, 0
    %s171 = sadd.s32 %s170, 1
    %s172 = scalar_select %p169, %s170, %s171
    %p175 = pneg %p169
    %p176 = scmp.eq.s32.totalorder %s10, 3
    %p177 = por %p175, %p176
    %p178 = scmp.ne.s32.totalorder %s170, %s173
    %p179 = scmp.eq.s32.totalorder %s10, 0
    %p180 = por %p178, %p179
    %p181 = scmp.ne.s32.totalorder %s170, %s173
    %p182 = scmp.eq.s32.totalorder %s15, 3
    %p183 = por %p181, %p182
    %p184 = scmp.ne.s32.totalorder %s173, %s174
    %p185 = scmp.eq.s32.totalorder %s15, 0
    %p186 = por %p184, %p185
    %p187 = scmp.ne.s32.totalorder %s173, %s174
    %p188 = scmp.eq.s32.totalorder %s16, 3
    %p189 = por %p187, %p188
    %p191 = scmp.ne.s32.totalorder %s174, %s190
    %p192 = scmp.eq.s32.totalorder %s16, 0
    %p193 = por %p191, %p192
    %p194 = scmp.le.s32.totalorder 1, %s10
    %p195 = scmp.lt.s32.totalorder %s10, 5
    %p196 = pnand %p194, %p195
    %p197 = pneg %p196
    // Predicated region
    $region9: #{tpu_custom_call.1} parent=5 // pred_check
      _
    $region10: #{tpu_custom_call.1} parent=5 // pred_check_branch
      %199 = sbr.rel (%p196) target = $region12
    $region11: #{tpu_custom_call.1} parent=5 // pred_region
      %s200 = ssub.s32 %s10, 1
    $region12: #{tpu_custom_call.1} parent=5 // pred_fallthru
      _
    %p201 = scmp.lt.s32.totalorder %s10, 4
    // Predicated region
    $region13: #{tpu_custom_call.1} parent=5 // pred_check
      %p202 = pneg %p201
    $region14: #{tpu_custom_call.1} parent=5 // pred_check_branch
      %204 = sbr.rel (%p202) target = $region16
    $region15: #{tpu_custom_call.1} parent=5 // pred_region
      // Predicated region
      $region17: #{tpu_custom_call.1} parent=15 // pred_check
        %p205 = pneg %p60
      $region18: #{tpu_custom_call.1} parent=15 // pred_check_branch
        %207 = sbr.rel (%p205) target = $region20
      $region19: #{tpu_custom_call.1} parent=15 // pred_region
        %s208 = smul.u32 32, %s19
        %p209 = scmp.lt.s32.totalorder %s17, 1
        %s210 = scalar_select %p209, %s17, 1
        %p211 = scmp.lt.s32.totalorder %s18, 1
        %s212 = scalar_select %p211, %s18, 1
        %p213 = scmp.lt.s32.totalorder %s208, 31
        %s214 = scalar_select %p213, %s208, 31
        %s215 = smul.addr %s212, 32
        %s216 = sadd.s32 %s214, %s215
        %s217 = smul.addr %s210, 64
        %s218 = sadd.s32 %s216, %s217
        %s219 = smul.addr %s218, 8
        %s220 = scalar_lea.vmem %s0, %s219
        %s221 = smul.u32 32, %s19
      $region20: #{tpu_custom_call.1} parent=15 // pred_fallthru
        _
      // Predicated region
      $region21: #{tpu_custom_call.1} parent=15 // pred_check
        %p222 = pneg %p90
      $region22: #{tpu_custom_call.1} parent=15 // pred_check_branch
        %224 = sbr.rel (%p222) target = $region24
      $region23: #{tpu_custom_call.1} parent=15 // pred_region
        %s225 = smul.u32 32, %s20
        %p226 = scmp.lt.s32.totalorder %s17, 1
        %s227 = scalar_select %p226, %s17, 1
        %p228 = scmp.lt.s32.totalorder %s18, 1
        %s229 = scalar_select %p228, %s18, 1
        %p230 = scmp.lt.s32.totalorder %s225, 31
        %s231 = scalar_select %p230, %s225, 31
        %s232 = smul.addr %s229, 32
        %s233 = sadd.s32 %s231, %s232
        %s234 = smul.addr %s227, 64
        %s235 = sadd.s32 %s233, %s234
        %s236 = smul.addr %s235, 8
        %s237 = scalar_lea.vmem %s1, %s236
        %s238 = smul.u32 32, %s20
      $region24: #{tpu_custom_call.1} parent=15 // pred_fallthru
        _
      // Predicated region
      $region25: #{tpu_custom_call.1} parent=15 // pred_check
        %p239 = pneg %p120
      $region26: #{tpu_custom_call.1} parent=15 // pred_check_branch
        %241 = sbr.rel (%p239) target = $region28
      $region27: #{tpu_custom_call.1} parent=15 // pred_region
        %s242 = smul.u32 32, %s20
        %p243 = scmp.lt.s32.totalorder %s17, 1
        %s244 = scalar_select %p243, %s17, 1
        %p245 = scmp.lt.s32.totalorder %s18, 1
        %s246 = scalar_select %p245, %s18, 1
        %p247 = scmp.lt.s32.totalorder %s242, 31
        %s248 = scalar_select %p247, %s242, 31
        %s249 = smul.addr %s246, 32
        %s250 = sadd.s32 %s248, %s249
        %s251 = smul.addr %s244, 64
        %s252 = sadd.s32 %s250, %s251
        %s253 = smul.addr %s252, 8
        %s254 = scalar_lea.vmem %s2, %s253
        %s255 = smul.u32 32, %s20
      $region28: #{tpu_custom_call.1} parent=15 // pred_fallthru
        _
      // Predicated region
      $region29: #{tpu_custom_call.1} parent=15 // pred_check
        %p256 = pneg %p150
      $region30: #{tpu_custom_call.1} parent=15 // pred_check_branch
        %258 = sbr.rel (%p256) target = $region32
      $region31: #{tpu_custom_call.1} parent=15 // pred_region
        %s259 = smul.u32 32, %s19
        %s260 = smul.u32 2, %s20
        %p261 = scmp.lt.s32.totalorder %s17, 1
        %s262 = scalar_select %p261, %s17, 1
        %p263 = scmp.lt.s32.totalorder %s259, 31
        %s264 = scalar_select %p263, %s259, 31
        %p265 = scmp.lt.s32.totalorder %s260, 1
        %s266 = scalar_select %p265, %s260, 1
        %s267 = smul.addr %s264, 2
        %s268 = sadd.s32 %s266, %s267
        %s269 = smul.addr %s262, 64
        %s270 = sadd.s32 %s268, %s269
        %s271 = smul.addr %s270, 8
        %s272 = scalar_lea.vmem %s3, %s271
        %s273 = smul.u32 32, %s19
        %s274 = smul.u32 2, %s20
      $region32: #{tpu_custom_call.1} parent=15 // pred_fallthru
        _
    $region16: #{tpu_custom_call.1} parent=5 // pred_fallthru
      _
    %p275 = scmp.le.s32.totalorder 1, %s10
    %p276 = scmp.lt.s32.totalorder %s10, 5
    %p277 = pnand %p275, %p276
    %p278 = pneg %p277
    // Predicated region
    $region33: #{tpu_custom_call.1} parent=5 // pred_check
      _
    $region34: #{tpu_custom_call.1} parent=5 // pred_check_branch
      %280 = sbr.rel (%p277) target = $region36
    $region35: #{tpu_custom_call.1} parent=5 // pred_region
      %s281 = ssub.s32 %s10, 1
      %s282 = smul.u32 32, %s23
      %p283 = scmp.lt.s32.totalorder %s21, 1
      %s284 = scalar_select %p283, %s21, 1
      %p285 = scmp.lt.s32.totalorder %s22, 1
      %s286 = scalar_select %p285, %s22, 1
      %p287 = scmp.lt.s32.totalorder %s282, 31
      %s288 = scalar_select %p287, %s282, 31
      %s289 = smul.addr %s286, 32
      %s290 = sadd.s32 %s288, %s289
      %s291 = smul.addr %s284, 64
      %s292 = sadd.s32 %s290, %s291
      %s293 = smul.addr %s292, 8
      %s294 = scalar_lea.vmem %s0, %s293
      %p295 = pneg %p66
      %p296 = pneg %p63
      %s297 = smul.u32 32, %s24
      %p298 = scmp.lt.s32.totalorder %s21, 1
      %s299 = scalar_select %p298, %s21, 1
      %p300 = scmp.lt.s32.totalorder %s22, 1
      %s301 = scalar_select %p300, %s22, 1
      %p302 = scmp.lt.s32.totalorder %s297, 31
      %s303 = scalar_select %p302, %s297, 31
      %s304 = smul.addr %s301, 32
      %s305 = sadd.s32 %s303, %s304
      %s306 = smul.addr %s299, 64
      %s307 = sadd.s32 %s305, %s306
      %s308 = smul.addr %s307, 8
      %s309 = scalar_lea.vmem %s1, %s308
      %p310 = pneg %p96
      %p311 = pneg %p93
      %s312 = smul.u32 32, %s24
      %p313 = scmp.lt.s32.totalorder %s21, 1
      %s314 = scalar_select %p313, %s21, 1
      %p315 = scmp.lt.s32.totalorder %s22, 1
      %s316 = scalar_select %p315, %s22, 1
      %p317 = scmp.lt.s32.totalorder %s312, 31
      %s318 = scalar_select %p317, %s312, 31
      %s319 = smul.addr %s316, 32
      %s320 = sadd.s32 %s318, %s319
      %s321 = smul.addr %s314, 64
      %s322 = sadd.s32 %s320, %s321
      %s323 = smul.addr %s322, 8
      %s324 = scalar_lea.vmem %s2, %s323
      %p325 = pneg %p126
      %p326 = pneg %p123
      %s327 = smul.u32 32, %s23
      %s328 = smul.u32 2, %s24
      %p329 = scmp.lt.s32.totalorder %s21, 1
      %s330 = scalar_select %p329, %s21, 1
      %p331 = scmp.lt.s32.totalorder %s327, 31
      %s332 = scalar_select %p331, %s327, 31
      %p333 = scmp.lt.s32.totalorder %s328, 1
      %s334 = scalar_select %p333, %s328, 1
      %s335 = smul.addr %s332, 2
      %s336 = sadd.s32 %s334, %s335
      %s337 = smul.addr %s330, 64
      %s338 = sadd.s32 %s336, %s337
      %s339 = smul.addr %s338, 8
      %s340 = scalar_lea.vmem %s3, %s339
      %p341 = pneg %p156
      %p342 = pneg %p153
      %p343 = pneg %p186
      %p344 = pneg %p183
      %s345 = smul.u32 32, %s23
      %p346 = scmp.lt.s32.totalorder %s21, 1
      %s347 = scalar_select %p346, %s21, 1
      %p348 = scmp.lt.s32.totalorder %s22, 1
      %s349 = scalar_select %p348, %s22, 1
      %p350 = scmp.lt.s32.totalorder %s345, 31
      %s351 = scalar_select %p350, %s345, 31
      %s352 = smul.addr %s349, 32
      %s353 = sadd.s32 %s351, %s352
      %s354 = smul.addr %s347, 64
      %s355 = sadd.s32 %s353, %s354
      %s356 = smul.addr %s355, 8
      %s357 = scalar_lea.vmem %s4, %s356
      %s358 = smul.u32 32, %s23
      %p359 = scmp.lt.s32.totalorder %s21, 1
      %s360 = scalar_select %p359, %s21, 1
      %p361 = scmp.lt.s32.totalorder %s22, 1
      %s362 = scalar_select %p361, %s22, 1
      %p363 = scmp.lt.s32.totalorder %s358, 31
      %s364 = scalar_select %p363, %s358, 31
      %s365 = smul.addr %s362, 32
      %s366 = sadd.s32 %s364, %s365
      %s367 = smul.addr %s360, 64
      %s368 = sadd.s32 %s366, %s367
      %s369 = smul.addr %s368, 8
      %s370 = scalar_lea.vmem %s0, %s369
      %s371 = smul.u32 32, %s23
      %s372 = smul.u32 32, %s24
      %p373 = scmp.lt.s32.totalorder %s21, 1
      %s374 = scalar_select %p373, %s21, 1
      %p375 = scmp.lt.s32.totalorder %s22, 1
      %s376 = scalar_select %p375, %s22, 1
      %p377 = scmp.lt.s32.totalorder %s372, 31
      %s378 = scalar_select %p377, %s372, 31
      %s379 = smul.addr %s376, 32
      %s380 = sadd.s32 %s378, %s379
      %s381 = smul.addr %s374, 64
      %s382 = sadd.s32 %s380, %s381
      %s383 = smul.addr %s382, 8
      %s384 = scalar_lea.vmem %s1, %s383
      %s385 = smul.u32 32, %s24
      %s386 = smul.u32 32, %s24
      %p387 = scmp.lt.s32.totalorder %s21, 1
      %s388 = scalar_select %p387, %s21, 1
      %p389 = scmp.lt.s32.totalorder %s22, 1
      %s390 = scalar_select %p389, %s22, 1
      %p391 = scmp.lt.s32.totalorder %s386, 31
      %s392 = scalar_select %p391, %s386, 31
      %s393 = smul.addr %s390, 32
      %s394 = sadd.s32 %s392, %s393
      %s395 = smul.addr %s388, 64
      %s396 = sadd.s32 %s394, %s395
      %s397 = smul.addr %s396, 8
      %s398 = scalar_lea.vmem %s2, %s397
      %s399 = smul.u32 32, %s24
      %s400 = smul.u32 32, %s23
      %s401 = smul.u32 2, %s24
      %p402 = scmp.lt.s32.totalorder %s21, 1
      %s403 = scalar_select %p402, %s21, 1
      %p404 = scmp.lt.s32.totalorder %s400, 31
      %s405 = scalar_select %p404, %s400, 31
      %p406 = scmp.lt.s32.totalorder %s401, 1
      %s407 = scalar_select %p406, %s401, 1
      %s408 = smul.addr %s405, 2
      %s409 = sadd.s32 %s407, %s408
      %s410 = smul.addr %s403, 64
      %s411 = sadd.s32 %s409, %s410
      %s412 = smul.addr %s411, 8
      %s413 = scalar_lea.vmem %s3, %s412
      %s414 = smul.u32 32, %s23
      %s415 = smul.u32 2, %s24
      %s416 = smul.u32 32, %s23
      %p417 = scmp.lt.s32.totalorder %s21, 1
      %s418 = scalar_select %p417, %s21, 1
      %p419 = scmp.lt.s32.totalorder %s22, 1
      %s420 = scalar_select %p419, %s22, 1
      %p421 = scmp.lt.s32.totalorder %s416, 31
      %s422 = scalar_select %p421, %s416, 31
      %s423 = smul.addr %s420, 32
      %s424 = sadd.s32 %s422, %s423
      %s425 = smul.addr %s418, 64
      %s426 = sadd.s32 %s424, %s425
      %s427 = smul.addr %s426, 8
      %s428 = scalar_lea.vmem %s4, %s427
      %s429 = smul.u32 32, %s23
      %p430 = scmp.eq.s32.totalorder %s24, 0
      // Predicated region
      $region37: #{tpu_custom_call.1} parent=35 // pred_check
        %p431 = pneg %p430
      $region38: #{tpu_custom_call.1} parent=35 // pred_check_branch
        %433 = sbr.rel (%p431) target = $region40
      $region39: #{tpu_custom_call.1} parent=35 // pred_region
        %vm434 = vcmask 7168
        %435 = vst.msk [vmem:[#allocation2] sm:$0xff] %vm434, -inf
        %436 = vst.msk [vmem:[#allocation2 + $0x8] sm:$0xff] %vm434, -inf
        %437 = vst.msk [vmem:[#allocation2 + $0x10] sm:$0xff] %vm434, -inf
        %438 = vst.msk [vmem:[#allocation2 + $0x18] sm:$0xff] %vm434, -inf
        %439 = vst.msk [vmem:[#allocation2 + $0x20] sm:$0xff] %vm434, -inf
        %440 = vst.msk [vmem:[#allocation2 + $0x28] sm:$0xff] %vm434, -inf
        %441 = vst.msk [vmem:[#allocation2 + $0x30] sm:$0xff] %vm434, -inf
        %442 = vst.msk [vmem:[#allocation2 + $0x38] sm:$0xff] %vm434, -inf
        %443 = vst.msk [vmem:[#allocation2 + $0x40] sm:$0xff] %vm434, -inf
        %444 = vst.msk [vmem:[#allocation2 + $0x48] sm:$0xff] %vm434, -inf
        %445 = vst.msk [vmem:[#allocation2 + $0x50] sm:$0xff] %vm434, -inf
        %446 = vst.msk [vmem:[#allocation2 + $0x58] sm:$0xff] %vm434, -inf
        %447 = vst.msk [vmem:[#allocation2 + $0x60] sm:$0xff] %vm434, -inf
        %448 = vst.msk [vmem:[#allocation2 + $0x68] sm:$0xff] %vm434, -inf
        %449 = vst.msk [vmem:[#allocation2 + $0x70] sm:$0xff] %vm434, -inf
        %450 = vst.msk [vmem:[#allocation2 + $0x78] sm:$0xff] %vm434, -inf
        %451 = vst.msk [vmem:[#allocation2 + $0x80] sm:$0xff] %vm434, -inf
        %452 = vst.msk [vmem:[#allocation2 + $0x88] sm:$0xff] %vm434, -inf
        %453 = vst.msk [vmem:[#allocation2 + $0x90] sm:$0xff] %vm434, -inf
        %454 = vst.msk [vmem:[#allocation2 + $0x98] sm:$0xff] %vm434, -inf
        %455 = vst.msk [vmem:[#allocation2 + $0xa0] sm:$0xff] %vm434, -inf
        %456 = vst.msk [vmem:[#allocation2 + $0xa8] sm:$0xff] %vm434, -inf
        %457 = vst.msk [vmem:[#allocation2 + $0xb0] sm:$0xff] %vm434, -inf
        %458 = vst.msk [vmem:[#allocation2 + $0xb8] sm:$0xff] %vm434, -inf
        %459 = vst.msk [vmem:[#allocation2 + $0xc0] sm:$0xff] %vm434, -inf
        %460 = vst.msk [vmem:[#allocation2 + $0xc8] sm:$0xff] %vm434, -inf
        %461 = vst.msk [vmem:[#allocation2 + $0xd0] sm:$0xff] %vm434, -inf
        %462 = vst.msk [vmem:[#allocation2 + $0xd8] sm:$0xff] %vm434, -inf
        %463 = vst.msk [vmem:[#allocation2 + $0xe0] sm:$0xff] %vm434, -inf
        %464 = vst.msk [vmem:[#allocation2 + $0xe8] sm:$0xff] %vm434, -inf
        %465 = vst.msk [vmem:[#allocation2 + $0xf0] sm:$0xff] %vm434, -inf
        %466 = vst.msk [vmem:[#allocation2 + $0xf8] sm:$0xff] %vm434, -inf
        %467 = vst.msk [vmem:[#allocation3] sm:$0xff] %vm434, 0.0
        %468 = vst.msk [vmem:[#allocation3 + $0x8] sm:$0xff] %vm434, 0.0
        %469 = vst.msk [vmem:[#allocation3 + $0x10] sm:$0xff] %vm434, 0.0
        %470 = vst.msk [vmem:[#allocation3 + $0x18] sm:$0xff] %vm434, 0.0
        %471 = vst.msk [vmem:[#allocation3 + $0x20] sm:$0xff] %vm434, 0.0
        %472 = vst.msk [vmem:[#allocation3 + $0x28] sm:$0xff] %vm434, 0.0
        %473 = vst.msk [vmem:[#allocation3 + $0x30] sm:$0xff] %vm434, 0.0
        %474 = vst.msk [vmem:[#allocation3 + $0x38] sm:$0xff] %vm434, 0.0
        %475 = vst.msk [vmem:[#allocation3 + $0x40] sm:$0xff] %vm434, 0.0
        %476 = vst.msk [vmem:[#allocation3 + $0x48] sm:$0xff] %vm434, 0.0
        %477 = vst.msk [vmem:[#allocation3 + $0x50] sm:$0xff] %vm434, 0.0
        %478 = vst.msk [vmem:[#allocation3 + $0x58] sm:$0xff] %vm434, 0.0
        %479 = vst.msk [vmem:[#allocation3 + $0x60] sm:$0xff] %vm434, 0.0
        %480 = vst.msk [vmem:[#allocation3 + $0x68] sm:$0xff] %vm434, 0.0
        %481 = vst.msk [vmem:[#allocation3 + $0x70] sm:$0xff] %vm434, 0.0
        %482 = vst.msk [vmem:[#allocation3 + $0x78] sm:$0xff] %vm434, 0.0
        %483 = vst.msk [vmem:[#allocation3 + $0x80] sm:$0xff] %vm434, 0.0
        %484 = vst.msk [vmem:[#allocation3 + $0x88] sm:$0xff] %vm434, 0.0
        %485 = vst.msk [vmem:[#allocation3 + $0x90] sm:$0xff] %vm434, 0.0
        %486 = vst.msk [vmem:[#allocation3 + $0x98] sm:$0xff] %vm434, 0.0
        %487 = vst.msk [vmem:[#allocation3 + $0xa0] sm:$0xff] %vm434, 0.0
        %488 = vst.msk [vmem:[#allocation3 + $0xa8] sm:$0xff] %vm434, 0.0
        %489 = vst.msk [vmem:[#allocation3 + $0xb0] sm:$0xff] %vm434, 0.0
        %490 = vst.msk [vmem:[#allocation3 + $0xb8] sm:$0xff] %vm434, 0.0
        %491 = vst.msk [vmem:[#allocation3 + $0xc0] sm:$0xff] %vm434, 0.0
        %492 = vst.msk [vmem:[#allocation3 + $0xc8] sm:$0xff] %vm434, 0.0
        %493 = vst.msk [vmem:[#allocation3 + $0xd0] sm:$0xff] %vm434, 0.0
        %494 = vst.msk [vmem:[#allocation3 + $0xd8] sm:$0xff] %vm434, 0.0
        %495 = vst.msk [vmem:[#allocation3 + $0xe0] sm:$0xff] %vm434, 0.0
        %496 = vst.msk [vmem:[#allocation3 + $0xe8] sm:$0xff] %vm434, 0.0
        %497 = vst.msk [vmem:[#allocation3 + $0xf0] sm:$0xff] %vm434, 0.0
        %498 = vst.msk [vmem:[#allocation3 + $0xf8] sm:$0xff] %vm434, 0.0
        %vm499 = vcmask 523264
        %500 = vst.msk [vmem:[#allocation4] sm:$0xff] %vm499, 0.0
        %501 = vst.msk [vmem:[#allocation4 + $0x8] sm:$0xff] %vm499, 0.0
        %502 = vst.msk [vmem:[#allocation4 + $0x10] sm:$0xff] %vm499, 0.0
        %503 = vst.msk [vmem:[#allocation4 + $0x18] sm:$0xff] %vm499, 0.0
        %504 = vst.msk [vmem:[#allocation4 + $0x20] sm:$0xff] %vm499, 0.0
        %505 = vst.msk [vmem:[#allocation4 + $0x28] sm:$0xff] %vm499, 0.0
        %506 = vst.msk [vmem:[#allocation4 + $0x30] sm:$0xff] %vm499, 0.0
        %507 = vst.msk [vmem:[#allocation4 + $0x38] sm:$0xff] %vm499, 0.0
        %508 = vst.msk [vmem:[#allocation4 + $0x40] sm:$0xff] %vm499, 0.0
        %509 = vst.msk [vmem:[#allocation4 + $0x48] sm:$0xff] %vm499, 0.0
        %510 = vst.msk [vmem:[#allocation4 + $0x50] sm:$0xff] %vm499, 0.0
        %511 = vst.msk [vmem:[#allocation4 + $0x58] sm:$0xff] %vm499, 0.0
        %512 = vst.msk [vmem:[#allocation4 + $0x60] sm:$0xff] %vm499, 0.0
        %513 = vst.msk [vmem:[#allocation4 + $0x68] sm:$0xff] %vm499, 0.0
        %514 = vst.msk [vmem:[#allocation4 + $0x70] sm:$0xff] %vm499, 0.0
        %515 = vst.msk [vmem:[#allocation4 + $0x78] sm:$0xff] %vm499, 0.0
        %516 = vst.msk [vmem:[#allocation4 + $0x80] sm:$0xff] %vm499, 0.0
        %517 = vst.msk [vmem:[#allocation4 + $0x88] sm:$0xff] %vm499, 0.0
        %518 = vst.msk [vmem:[#allocation4 + $0x90] sm:$0xff] %vm499, 0.0
        %519 = vst.msk [vmem:[#allocation4 + $0x98] sm:$0xff] %vm499, 0.0
        %520 = vst.msk [vmem:[#allocation4 + $0xa0] sm:$0xff] %vm499, 0.0
        %521 = vst.msk [vmem:[#allocation4 + $0xa8] sm:$0xff] %vm499, 0.0
        %522 = vst.msk [vmem:[#allocation4 + $0xb0] sm:$0xff] %vm499, 0.0
        %523 = vst.msk [vmem:[#allocation4 + $0xb8] sm:$0xff] %vm499, 0.0
        %524 = vst.msk [vmem:[#allocation4 + $0xc0] sm:$0xff] %vm499, 0.0
        %525 = vst.msk [vmem:[#allocation4 + $0xc8] sm:$0xff] %vm499, 0.0
        %526 = vst.msk [vmem:[#allocation4 + $0xd0] sm:$0xff] %vm499, 0.0
        %527 = vst.msk [vmem:[#allocation4 + $0xd8] sm:$0xff] %vm499, 0.0
        %528 = vst.msk [vmem:[#allocation4 + $0xe0] sm:$0xff] %vm499, 0.0
        %529 = vst.msk [vmem:[#allocation4 + $0xe8] sm:$0xff] %vm499, 0.0
        %530 = vst.msk [vmem:[#allocation4 + $0xf0] sm:$0xff] %vm499, 0.0
        %531 = vst.msk [vmem:[#allocation4 + $0xf8] sm:$0xff] %vm499, 0.0
      $region40: #{tpu_custom_call.1} parent=35 // pred_fallthru
        _
      %s532 = smul.u32 %s24, 256
      %s533 = smul.u32 %s23, 256
      %s534 = sadd.s32 %s533, 255
      %p535 = scmp.le.s32.totalorder %s532, %s534
      // Predicated region
      $region41: #{tpu_custom_call.1} parent=35 // pred_check
        %p536 = pneg %p535
      $region42: #{tpu_custom_call.1} parent=35 // pred_check_branch
        %538 = sbr.rel (%p536) target = $region44
      $region43: #{tpu_custom_call.1} parent=35 // pred_region
        %v539 = vld [vmem:[%s370] sm:$0xff]
        %v540 = vld [vmem:[%s370 + $0x8] sm:$0xff]
        %v541 = vld [vmem:[%s370 + $0x10] sm:$0xff]
        %v542 = vld [vmem:[%s370 + $0x18] sm:$0xff]
        %v543 = vld [vmem:[%s370 + $0x20] sm:$0xff]
        %v544 = vld [vmem:[%s370 + $0x28] sm:$0xff]
        %v545 = vld [vmem:[%s370 + $0x30] sm:$0xff]
        %v546 = vld [vmem:[%s370 + $0x38] sm:$0xff]
        %v547 = vld [vmem:[%s370 + $0x40] sm:$0xff]
        %v548 = vld [vmem:[%s370 + $0x48] sm:$0xff]
        %v549 = vld [vmem:[%s370 + $0x50] sm:$0xff]
        %v550 = vld [vmem:[%s370 + $0x58] sm:$0xff]
        %v551 = vld [vmem:[%s370 + $0x60] sm:$0xff]
        %v552 = vld [vmem:[%s370 + $0x68] sm:$0xff]
        %v553 = vld [vmem:[%s370 + $0x70] sm:$0xff]
        %v554 = vld [vmem:[%s370 + $0x78] sm:$0xff]
        %v555 = vld [vmem:[%s370 + $0x80] sm:$0xff]
        %v556 = vld [vmem:[%s370 + $0x88] sm:$0xff]
        %v557 = vld [vmem:[%s370 + $0x90] sm:$0xff]
        %v558 = vld [vmem:[%s370 + $0x98] sm:$0xff]
        %v559 = vld [vmem:[%s370 + $0xa0] sm:$0xff]
        %v560 = vld [vmem:[%s370 + $0xa8] sm:$0xff]
        %v561 = vld [vmem:[%s370 + $0xb0] sm:$0xff]
        %v562 = vld [vmem:[%s370 + $0xb8] sm:$0xff]
        %v563 = vld [vmem:[%s370 + $0xc0] sm:$0xff]
        %v564 = vld [vmem:[%s370 + $0xc8] sm:$0xff]
        %v565 = vld [vmem:[%s370 + $0xd0] sm:$0xff]
        %v566 = vld [vmem:[%s370 + $0xd8] sm:$0xff]
        %v567 = vld [vmem:[%s370 + $0xe0] sm:$0xff]
        %v568 = vld [vmem:[%s370 + $0xe8] sm:$0xff]
        %v569 = vld [vmem:[%s370 + $0xf0] sm:$0xff]
        %v570 = vld [vmem:[%s370 + $0xf8] sm:$0xff]
        %v571 = vld [vmem:[%s384] sm:$0xff]
        %v572 = vld [vmem:[%s384 + $0x8] sm:$0xff]
        %v573 = vld [vmem:[%s384 + $0x10] sm:$0xff]
        %v574 = vld [vmem:[%s384 + $0x18] sm:$0xff]
        %v575 = vld [vmem:[%s384 + $0x20] sm:$0xff]
        %v576 = vld [vmem:[%s384 + $0x28] sm:$0xff]
        %v577 = vld [vmem:[%s384 + $0x30] sm:$0xff]
        %v578 = vld [vmem:[%s384 + $0x38] sm:$0xff]
        %v579 = vld [vmem:[%s384 + $0x40] sm:$0xff]
        %v580 = vld [vmem:[%s384 + $0x48] sm:$0xff]
        %v581 = vld [vmem:[%s384 + $0x50] sm:$0xff]
        %v582 = vld [vmem:[%s384 + $0x58] sm:$0xff]
        %v583 = vld [vmem:[%s384 + $0x60] sm:$0xff]
        %v584 = vld [vmem:[%s384 + $0x68] sm:$0xff]
        %v585 = vld [vmem:[%s384 + $0x70] sm:$0xff]
        %v586 = vld [vmem:[%s384 + $0x78] sm:$0xff]
        %v587 = vld [vmem:[%s384 + $0x80] sm:$0xff]
        %v588 = vld [vmem:[%s384 + $0x88] sm:$0xff]
        %v589 = vld [vmem:[%s384 + $0x90] sm:$0xff]
        %v590 = vld [vmem:[%s384 + $0x98] sm:$0xff]
        %v591 = vld [vmem:[%s384 + $0xa0] sm:$0xff]
        %v592 = vld [vmem:[%s384 + $0xa8] sm:$0xff]
        %v593 = vld [vmem:[%s384 + $0xb0] sm:$0xff]
        %v594 = vld [vmem:[%s384 + $0xb8] sm:$0xff]
        %v595 = vld [vmem:[%s384 + $0xc0] sm:$0xff]
        %v596 = vld [vmem:[%s384 + $0xc8] sm:$0xff]
        %v597 = vld [vmem:[%s384 + $0xd0] sm:$0xff]
        %v598 = vld [vmem:[%s384 + $0xd8] sm:$0xff]
        %v599 = vld [vmem:[%s384 + $0xe0] sm:$0xff]
        %v600 = vld [vmem:[%s384 + $0xe8] sm:$0xff]
        %v601 = vld [vmem:[%s384 + $0xf0] sm:$0xff]
        %v602 = vld [vmem:[%s384 + $0xf8] sm:$0xff]
        %v603 = vld [vmem:[%s398] sm:$0xff]
        %v604 = vld [vmem:[%s398 + $0x8] sm:$0xff]
        %v605 = vld [vmem:[%s398 + $0x10] sm:$0xff]
        %v606 = vld [vmem:[%s398 + $0x18] sm:$0xff]
        %v607 = vld [vmem:[%s398 + $0x20] sm:$0xff]
        %v608 = vld [vmem:[%s398 + $0x28] sm:$0xff]
        %v609 = vld [vmem:[%s398 + $0x30] sm:$0xff]
        %v610 = vld [vmem:[%s398 + $0x38] sm:$0xff]
        %v611 = vld [vmem:[%s398 + $0x40] sm:$0xff]
        %v612 = vld [vmem:[%s398 + $0x48] sm:$0xff]
        %v613 = vld [vmem:[%s398 + $0x50] sm:$0xff]
        %v614 = vld [vmem:[%s398 + $0x58] sm:$0xff]
        %v615 = vld [vmem:[%s398 + $0x60] sm:$0xff]
        %v616 = vld [vmem:[%s398 + $0x68] sm:$0xff]
        %v617 = vld [vmem:[%s398 + $0x70] sm:$0xff]
        %v618 = vld [vmem:[%s398 + $0x78] sm:$0xff]
        %v619 = vld [vmem:[%s398 + $0x80] sm:$0xff]
        %v620 = vld [vmem:[%s398 + $0x88] sm:$0xff]
        %v621 = vld [vmem:[%s398 + $0x90] sm:$0xff]
        %v622 = vld [vmem:[%s398 + $0x98] sm:$0xff]
        %v623 = vld [vmem:[%s398 + $0xa0] sm:$0xff]
        %v624 = vld [vmem:[%s398 + $0xa8] sm:$0xff]
        %v625 = vld [vmem:[%s398 + $0xb0] sm:$0xff]
        %v626 = vld [vmem:[%s398 + $0xb8] sm:$0xff]
        %v627 = vld [vmem:[%s398 + $0xc0] sm:$0xff]
        %v628 = vld [vmem:[%s398 + $0xc8] sm:$0xff]
        %v629 = vld [vmem:[%s398 + $0xd0] sm:$0xff]
        %v630 = vld [vmem:[%s398 + $0xd8] sm:$0xff]
        %v631 = vld [vmem:[%s398 + $0xe0] sm:$0xff]
        %v632 = vld [vmem:[%s398 + $0xe8] sm:$0xff]
        %v633 = vld [vmem:[%s398 + $0xf0] sm:$0xff]
        %v634 = vld [vmem:[%s398 + $0xf8] sm:$0xff]
        %vm635 = vcmask 523264
        %v637 = vsel %vm635, %v539, 0
        %v640 = vsel %vm635, %v540, 0
        %v643 = vsel %vm635, %v541, 0
        %v646 = vsel %vm635, %v542, 0
        %v649 = vsel %vm635, %v543, 0
        %v652 = vsel %vm635, %v544, 0
        %v655 = vsel %vm635, %v545, 0
        %v658 = vsel %vm635, %v546, 0
        %v661 = vsel %vm635, %v547, 0
        %v664 = vsel %vm635, %v548, 0
        %v667 = vsel %vm635, %v549, 0
        %v670 = vsel %vm635, %v550, 0
        %v673 = vsel %vm635, %v551, 0
        %v676 = vsel %vm635, %v552, 0
        %v679 = vsel %vm635, %v553, 0
        %v682 = vsel %vm635, %v554, 0
        %v685 = vsel %vm635, %v555, 0
        %v688 = vsel %vm635, %v556, 0
        %v691 = vsel %vm635, %v557, 0
        %v694 = vsel %vm635, %v558, 0
        %v697 = vsel %vm635, %v559, 0
        %v700 = vsel %vm635, %v560, 0
        %v703 = vsel %vm635, %v561, 0
        %v706 = vsel %vm635, %v562, 0
        %v709 = vsel %vm635, %v563, 0
        %v712 = vsel %vm635, %v564, 0
        %v715 = vsel %vm635, %v565, 0
        %v718 = vsel %vm635, %v566, 0
        %v721 = vsel %vm635, %v567, 0
        %v724 = vsel %vm635, %v568, 0
        %v727 = vsel %vm635, %v569, 0
        %v730 = vsel %vm635, %v570, 0
        %v733 = vsel %vm635, %v571, 0
        %v736 = vsel %vm635, %v572, 0
        %v739 = vsel %vm635, %v573, 0
        %v742 = vsel %vm635, %v574, 0
        %v745 = vsel %vm635, %v575, 0
        %v748 = vsel %vm635, %v576, 0
        %v751 = vsel %vm635, %v577, 0
        %v754 = vsel %vm635, %v578, 0
        %v757 = vsel %vm635, %v579, 0
        %v760 = vsel %vm635, %v580, 0
        %v763 = vsel %vm635, %v581, 0
        %v766 = vsel %vm635, %v582, 0
        %v769 = vsel %vm635, %v583, 0
        %v772 = vsel %vm635, %v584, 0
        %v775 = vsel %vm635, %v585, 0
        %v778 = vsel %vm635, %v586, 0
        %v781 = vsel %vm635, %v587, 0
        %v784 = vsel %vm635, %v588, 0
        %v787 = vsel %vm635, %v589, 0
        %v790 = vsel %vm635, %v590, 0
        %v793 = vsel %vm635, %v591, 0
        %v796 = vsel %vm635, %v592, 0
        %v799 = vsel %vm635, %v593, 0
        %v802 = vsel %vm635, %v594, 0
        %v805 = vsel %vm635, %v595, 0
        %v808 = vsel %vm635, %v596, 0
        %v811 = vsel %vm635, %v597, 0
        %v814 = vsel %vm635, %v598, 0
        %v817 = vsel %vm635, %v599, 0
        %v820 = vsel %vm635, %v600, 0
        %v823 = vsel %vm635, %v601, 0
        %v826 = vsel %vm635, %v602, 0
        %828 = vmatprep.subr.mxu0 0.0
        %829 = vmatpush1.xpose.msra.mxu0 %v733
        %830 = vmatprep.subr.mxu0 0.0
        %831 = vmatpush1.xpose.msra.mxu0 %v736
        %832 = vmatprep.subr.mxu0 0.0
        %833 = vmatpush1.xpose.msra.mxu0 %v739
        %834 = vmatprep.subr.mxu0 0.0
        %835 = vmatpush1.xpose.msra.mxu0 %v742
        %836 = vmatprep.subr.mxu0 0.0
        %837 = vmatpush1.xpose.msra.mxu0 %v745
        %838 = vmatprep.subr.mxu0 0.0
        %839 = vmatpush1.xpose.msra.mxu0 %v748
        %840 = vmatprep.subr.mxu0 0.0
        %841 = vmatpush1.xpose.msra.mxu0 %v751
        %842 = vmatprep.subr.mxu0 0.0
        %843 = vmatpush1.xpose.msra.mxu0 %v754
        %844 = vmatprep.subr.mxu0 0.0
        %845 = vmatpush1.xpose.msra.mxu0 %v757
        %846 = vmatprep.subr.mxu0 0.0
        %847 = vmatpush1.xpose.msra.mxu0 %v760
        %848 = vmatprep.subr.mxu0 0.0
        %849 = vmatpush1.xpose.msra.mxu0 %v763
        %850 = vmatprep.subr.mxu0 0.0
        %851 = vmatpush1.xpose.msra.mxu0 %v766
        %852 = vmatprep.subr.mxu0 0.0
        %853 = vmatpush1.xpose.msra.mxu0 %v769
        %854 = vmatprep.subr.mxu0 0.0
        %855 = vmatpush1.xpose.msra.mxu0 %v772
        %856 = vmatprep.subr.mxu0 0.0
        %857 = vmatpush1.xpose.msra.mxu0 %v775
        %858 = vmatprep.subr.mxu0 0.0
        %859 = vmatpush1.xpose.msra.mxu0 %v778
        %860 = vmatprep.subr.mxu0 0.0
        %861 = vmatpush1.xpose.msra.mxu0 %v781
        %862 = vmatprep.subr.mxu0 0.0
        %863 = vmatpush1.xpose.msra.mxu0 %v784
        %864 = vmatprep.subr.mxu0 0.0
        %865 = vmatpush1.xpose.msra.mxu0 %v787
        %866 = vmatprep.subr.mxu0 0.0
        %867 = vmatpush1.xpose.msra.mxu0 %v790
        %868 = vmatprep.subr.mxu0 0.0
        %869 = vmatpush1.xpose.msra.mxu0 %v793
        %870 = vmatprep.subr.mxu0 0.0
        %871 = vmatpush1.xpose.msra.mxu0 %v796
        %872 = vmatprep.subr.mxu0 0.0
        %873 = vmatpush1.xpose.msra.mxu0 %v799
        %874 = vmatprep.subr.mxu0 0.0
        %875 = vmatpush1.xpose.msra.mxu0 %v802
        %876 = vmatprep.subr.mxu0 0.0
        %877 = vmatpush1.xpose.msra.mxu0 %v805
        %878 = vmatprep.subr.mxu0 0.0
        %879 = vmatpush1.xpose.msra.mxu0 %v808
        %880 = vmatprep.subr.mxu0 0.0
        %881 = vmatpush1.xpose.msra.mxu0 %v811
        %882 = vmatprep.subr.mxu0 0.0
        %883 = vmatpush1.xpose.msra.mxu0 %v814
        %884 = vmatprep.subr.mxu0 0.0
        %885 = vmatpush1.xpose.msra.mxu0 %v817
        %886 = vmatprep.subr.mxu0 0.0
        %887 = vmatpush1.xpose.msra.mxu0 %v820
        %888 = vmatprep.subr.mxu0 0.0
        %889 = vmatpush1.xpose.msra.mxu0 %v823
        %890 = vmatprep.subr.mxu0 0.0
        %891 = vmatpush1.xpose.msra.mxu0 %v826
        %892 = vmatprep.mubr.f32.mxu0 0.0
        %893 = vmatmul.mubr.f32.gmra.mrb[0].mxu0 %v637
        %v894 = vpop.f32.mrb[0].mxu0
        %v895 = vadd.f32 0.0, %v894
        %v896 = vpop.f32.mrb[0].mxu0
        %v897 = vadd.f32 0.0, %v896
        %898 = vmatprep.mubr.f32.mxu0 0.0
        %899 = vmatmul.mubr.f32.gmra.mrb[0].mxu0 %v640
        %v900 = vpop.f32.mrb[0].mxu0
        %v901 = vadd.f32 0.0, %v900
        %v902 = vpop.f32.mrb[0].mxu0
        %v903 = vadd.f32 0.0, %v902
        %904 = vmatprep.mubr.f32.mxu0 0.0
        %905 = vmatmul.mubr.f32.gmra.mrb[0].mxu0 %v643
        %v906 = vpop.f32.mrb[0].mxu0
        %v907 = vadd.f32 0.0, %v906
        %v908 = vpop.f32.mrb[0].mxu0
        %v909 = vadd.f32 0.0, %v908
        %910 = vmatprep.mubr.f32.mxu0 0.0
        %911 = vmatmul.mubr.f32.gmra.mrb[0].mxu0 %v646
        %v912 = vpop.f32.mrb[0].mxu0
        %v913 = vadd.f32 0.0, %v912
        %v914 = vpop.f32.mrb[0].mxu0
        %v915 = vadd.f32 0.0, %v914
        %916 = vmatprep.mubr.f32.mxu0 0.0
        %917 = vmatmul.mubr.f32.gmra.mrb[0].mxu0 %v649
        %v918 = vpop.f32.mrb[0].mxu0
        %v919 = vadd.f32 0.0, %v918
        %v920 = vpop.f32.mrb[0].mxu0
        %v921 = vadd.f32 0.0, %v920
        %922 = vmatprep.mubr.f32.mxu0 0.0
        %923 = vmatmul.mubr.f32.gmra.mrb[0].mxu0 %v652
        %v924 = vpop.f32.mrb[0].mxu0
        %v925 = vadd.f32 0.0, %v924
        %v926 = vpop.f32.mrb[0].mxu0
        %v927 = vadd.f32 0.0, %v926
        %928 = vmatprep.mubr.f32.mxu0 0.0
        %929 = vmatmul.mubr.f32.gmra.mrb[0].mxu0 %v655
        %v930 = vpop.f32.mrb[0].mxu0
        %v931 = vadd.f32 0.0, %v930
        %v932 = vpop.f32.mrb[0].mxu0
        %v933 = vadd.f32 0.0, %v932
        %934 = vmatprep.mubr.f32.mxu0 0.0
        %935 = vmatmul.mubr.f32.gmra.mrb[0].mxu0 %v658
        %v936 = vpop.f32.mrb[0].mxu0
        %v937 = vadd.f32 0.0, %v936
        %v938 = vpop.f32.mrb[0].mxu0
        %v939 = vadd.f32 0.0, %v938
        %940 = vmatprep.mubr.f32.mxu0 0.0
        %941 = vmatmul.mubr.f32.gmra.mrb[0].mxu0 %v661
        %v942 = vpop.f32.mrb[0].mxu0
        %v943 = vadd.f32 0.0, %v942
        %v944 = vpop.f32.mrb[0].mxu0
        %v945 = vadd.f32 0.0, %v944
        %946 = vmatprep.mubr.f32.mxu0 0.0
        %947 = vmatmul.mubr.f32.gmra.mrb[0].mxu0 %v664
        %v948 = vpop.f32.mrb[0].mxu0
        %v949 = vadd.f32 0.0, %v948
        %v950 = vpop.f32.mrb[0].mxu0
        %v951 = vadd.f32 0.0, %v950
        %952 = vmatprep.mubr.f32.mxu0 0.0
        %953 = vmatmul.mubr.f32.gmra.mrb[0].mxu0 %v667
        %v954 = vpop.f32.mrb[0].mxu0
        %v955 = vadd.f32 0.0, %v954
        %v956 = vpop.f32.mrb[0].mxu0
        %v957 = vadd.f32 0.0, %v956
        %958 = vmatprep.mubr.f32.mxu0 0.0
        %959 = vmatmul.mubr.f32.gmra.mrb[0].mxu0 %v670
        %v960 = vpop.f32.mrb[0].mxu0
        %v961 = vadd.f32 0.0, %v960
        %v962 = vpop.f32.mrb[0].mxu0
        %v963 = vadd.f32 0.0, %v962
        %964 = vmatprep.mubr.f32.mxu0 0.0
        %965 = vmatmul.mubr.f32.gmra.mrb[0].mxu0 %v673
        %v966 = vpop.f32.mrb[0].mxu0
        %v967 = vadd.f32 0.0, %v966
        %v968 = vpop.f32.mrb[0].mxu0
        %v969 = vadd.f32 0.0, %v968
        %970 = vmatprep.mubr.f32.mxu0 0.0
        %971 = vmatmul.mubr.f32.gmra.mrb[0].mxu0 %v676
        %v972 = vpop.f32.mrb[0].mxu0
        %v973 = vadd.f32 0.0, %v972
        %v974 = vpop.f32.mrb[0].mxu0
        %v975 = vadd.f32 0.0, %v974
        %976 = vmatprep.mubr.f32.mxu0 0.0
        %977 = vmatmul.mubr.f32.gmra.mrb[0].mxu0 %v679
        %v978 = vpop.f32.mrb[0].mxu0
        %v979 = vadd.f32 0.0, %v978
        %v980 = vpop.f32.mrb[0].mxu0
        %v981 = vadd.f32 0.0, %v980
        %982 = vmatprep.mubr.f32.mxu0 0.0
        %983 = vmatmul.mubr.f32.gmra.mrb[0].mxu0 %v682
        %v984 = vpop.f32.mrb[0].mxu0
        %v985 = vadd.f32 0.0, %v984
        %v986 = vpop.f32.mrb[0].mxu0
        %v987 = vadd.f32 0.0, %v986
        %988 = vmatprep.mubr.f32.mxu0 0.0
        %989 = vmatmul.mubr.f32.gmra.mrb[0].mxu0 %v685
        %v990 = vpop.f32.mrb[0].mxu0
        %v991 = vadd.f32 0.0, %v990
        %v992 = vpop.f32.mrb[0].mxu0
        %v993 = vadd.f32 0.0, %v992
        %994 = vmatprep.mubr.f32.mxu0 0.0
        %995 = vmatmul.mubr.f32.gmra.mrb[0].mxu0 %v688
        %v996 = vpop.f32.mrb[0].mxu0
        %v997 = vadd.f32 0.0, %v996
        %v998 = vpop.f32.mrb[0].mxu0
        %v999 = vadd.f32 0.0, %v998
        %1000 = vmatprep.mubr.f32.mxu0 0.0
        %1001 = vmatmul.mubr.f32.gmra.mrb[0].mxu0 %v691
        %v1002 = vpop.f32.mrb[0].mxu0
        %v1003 = vadd.f32 0.0, %v1002
        %v1004 = vpop.f32.mrb[0].mxu0
        %v1005 = vadd.f32 0.0, %v1004
        %1006 = vmatprep.mubr.f32.mxu0 0.0
        %1007 = vmatmul.mubr.f32.gmra.mrb[0].mxu0 %v694
        %v1008 = vpop.f32.mrb[0].mxu0
        %v1009 = vadd.f32 0.0, %v1008
        %v1010 = vpop.f32.mrb[0].mxu0
        %v1011 = vadd.f32 0.0, %v1010
        %1012 = vmatprep.mubr.f32.mxu0 0.0
        %1013 = vmatmul.mubr.f32.gmra.mrb[0].mxu0 %v697
        %v1014 = vpop.f32.mrb[0].mxu0
        %v1015 = vadd.f32 0.0, %v1014
        %v1016 = vpop.f32.mrb[0].mxu0
        %v1017 = vadd.f32 0.0, %v1016
        %1018 = vmatprep.mubr.f32.mxu0 0.0
        %1019 = vmatmul.mubr.f32.gmra.mrb[0].mxu0 %v700
        %v1020 = vpop.f32.mrb[0].mxu0
        %v1021 = vadd.f32 0.0, %v1020
        %v1022 = vpop.f32.mrb[0].mxu0
        %v1023 = vadd.f32 0.0, %v1022
        %1024 = vmatprep.mubr.f32.mxu0 0.0
        %1025 = vmatmul.mubr.f32.gmra.mrb[0].mxu0 %v703
        %v1026 = vpop.f32.mrb[0].mxu0
        %v1027 = vadd.f32 0.0, %v1026
        %v1028 = vpop.f32.mrb[0].mxu0
        %v1029 = vadd.f32 0.0, %v1028
        %1030 = vmatprep.mubr.f32.mxu0 0.0
        %1031 = vmatmul.mubr.f32.gmra.mrb[0].mxu0 %v706
        %v1032 = vpop.f32.mrb[0].mxu0
        %v1033 = vadd.f32 0.0, %v1032
        %v1034 = vpop.f32.mrb[0].mxu0
        %v1035 = vadd.f32 0.0, %v1034
        %1036 = vmatprep.mubr.f32.mxu0 0.0
        %1037 = vmatmul.mubr.f32.gmra.mrb[0].mxu0 %v709
        %v1038 = vpop.f32.mrb[0].mxu0
        %v1039 = vadd.f32 0.0, %v1038
        %v1040 = vpop.f32.mrb[0].mxu0
        %v1041 = vadd.f32 0.0, %v1040
        %1042 = vmatprep.mubr.f32.mxu0 0.0
        %1043 = vmatmul.mubr.f32.gmra.mrb[0].mxu0 %v712
        %v1044 = vpop.f32.mrb[0].mxu0
        %v1045 = vadd.f32 0.0, %v1044
        %v1046 = vpop.f32.mrb[0].mxu0
        %v1047 = vadd.f32 0.0, %v1046
        %1048 = vmatprep.mubr.f32.mxu0 0.0
        %1049 = vmatmul.mubr.f32.gmra.mrb[0].mxu0 %v715
        %v1050 = vpop.f32.mrb[0].mxu0
        %v1051 = vadd.f32 0.0, %v1050
        %v1052 = vpop.f32.mrb[0].mxu0
        %v1053 = vadd.f32 0.0, %v1052
        %1054 = vmatprep.mubr.f32.mxu0 0.0
        %1055 = vmatmul.mubr.f32.gmra.mrb[0].mxu0 %v718
        %v1056 = vpop.f32.mrb[0].mxu0
        %v1057 = vadd.f32 0.0, %v1056
        %v1058 = vpop.f32.mrb[0].mxu0
        %v1059 = vadd.f32 0.0, %v1058
        %1060 = vmatprep.mubr.f32.mxu0 0.0
        %1061 = vmatmul.mubr.f32.gmra.mrb[0].mxu0 %v721
        %v1062 = vpop.f32.mrb[0].mxu0
        %v1063 = vadd.f32 0.0, %v1062
        %v1064 = vpop.f32.mrb[0].mxu0
        %v1065 = vadd.f32 0.0, %v1064
        %1066 = vmatprep.mubr.f32.mxu0 0.0
        %1067 = vmatmul.mubr.f32.gmra.mrb[0].mxu0 %v724
        %v1068 = vpop.f32.mrb[0].mxu0
        %v1069 = vadd.f32 0.0, %v1068
        %v1070 = vpop.f32.mrb[0].mxu0
        %v1071 = vadd.f32 0.0, %v1070
        %1072 = vmatprep.mubr.f32.mxu0 0.0
        %1073 = vmatmul.mubr.f32.gmra.mrb[0].mxu0 %v727
        %v1074 = vpop.f32.mrb[0].mxu0
        %v1075 = vadd.f32 0.0, %v1074
        %v1076 = vpop.f32.mrb[0].mxu0
        %v1077 = vadd.f32 0.0, %v1076
        %1078 = vmatprep.mubr.f32.mxu0 0.0
        %1079 = vmatmul.mubr.f32.gmra.mrb[0].mxu0 %v730
        %v1080 = vpop.f32.mrb[0].mxu0
        %v1081 = vadd.f32 0.0, %v1080
        %v1082 = vpop.f32.mrb[0].mxu0
        %v1083 = vadd.f32 0.0, %v1082
        %1084 = vdwg.mxu0
        %v1085 = vmul.f32 %v895, 0.125
        %v1086 = vmul.f32 %v897, 0.125
        %v1087 = vmul.f32 %v901, 0.125
        %v1088 = vmul.f32 %v903, 0.125
        %v1089 = vmul.f32 %v907, 0.125
        %v1090 = vmul.f32 %v909, 0.125
        %v1091 = vmul.f32 %v913, 0.125
        %v1092 = vmul.f32 %v915, 0.125
        %v1093 = vmul.f32 %v919, 0.125
        %v1094 = vmul.f32 %v921, 0.125
        %v1095 = vmul.f32 %v925, 0.125
        %v1096 = vmul.f32 %v927, 0.125
        %v1097 = vmul.f32 %v931, 0.125
        %v1098 = vmul.f32 %v933, 0.125
        %v1099 = vmul.f32 %v937, 0.125
        %v1100 = vmul.f32 %v939, 0.125
        %v1101 = vmul.f32 %v943, 0.125
        %v1102 = vmul.f32 %v945, 0.125
        %v1103 = vmul.f32 %v949, 0.125
        %v1104 = vmul.f32 %v951, 0.125
        %v1105 = vmul.f32 %v955, 0.125
        %v1106 = vmul.f32 %v957, 0.125
        %v1107 = vmul.f32 %v961, 0.125
        %v1108 = vmul.f32 %v963, 0.125
        %v1109 = vmul.f32 %v967, 0.125
        %v1110 = vmul.f32 %v969, 0.125
        %v1111 = vmul.f32 %v973, 0.125
        %v1112 = vmul.f32 %v975, 0.125
        %v1113 = vmul.f32 %v979, 0.125
        %v1114 = vmul.f32 %v981, 0.125
        %v1115 = vmul.f32 %v985, 0.125
        %v1116 = vmul.f32 %v987, 0.125
        %v1117 = vmul.f32 %v991, 0.125
        %v1118 = vmul.f32 %v993, 0.125
        %v1119 = vmul.f32 %v997, 0.125
        %v1120 = vmul.f32 %v999, 0.125
        %v1121 = vmul.f32 %v1003, 0.125
        %v1122 = vmul.f32 %v1005, 0.125
        %v1123 = vmul.f32 %v1009, 0.125
        %v1124 = vmul.f32 %v1011, 0.125
        %v1125 = vmul.f32 %v1015, 0.125
        %v1126 = vmul.f32 %v1017, 0.125
        %v1127 = vmul.f32 %v1021, 0.125
        %v1128 = vmul.f32 %v1023, 0.125
        %v1129 = vmul.f32 %v1027, 0.125
        %v1130 = vmul.f32 %v1029, 0.125
        %v1131 = vmul.f32 %v1033, 0.125
        %v1132 = vmul.f32 %v1035, 0.125
        %v1133 = vmul.f32 %v1039, 0.125
        %v1134 = vmul.f32 %v1041, 0.125
        %v1135 = vmul.f32 %v1045, 0.125
        %v1136 = vmul.f32 %v1047, 0.125
        %v1137 = vmul.f32 %v1051, 0.125
        %v1138 = vmul.f32 %v1053, 0.125
        %v1139 = vmul.f32 %v1057, 0.125
        %v1140 = vmul.f32 %v1059, 0.125
        %v1141 = vmul.f32 %v1063, 0.125
        %v1142 = vmul.f32 %v1065, 0.125
        %v1143 = vmul.f32 %v1069, 0.125
        %v1144 = vmul.f32 %v1071, 0.125
        %v1145 = vmul.f32 %v1075, 0.125
        %v1146 = vmul.f32 %v1077, 0.125
        %v1147 = vmul.f32 %v1081, 0.125
        %v1148 = vmul.f32 %v1083, 0.125
        %v1149 = vld [vmem:[%s413] sm:$0xff]
        %v1150 = vld [vmem:[%s413 + $0x8] sm:$0xff]
        %v1151 = vld [vmem:[%s413 + $0x10] sm:$0xff]
        %v1152 = vld [vmem:[%s413 + $0x18] sm:$0xff]
        %v1153 = vld [vmem:[%s413 + $0x20] sm:$0xff]
        %v1154 = vld [vmem:[%s413 + $0x28] sm:$0xff]
        %v1155 = vld [vmem:[%s413 + $0x30] sm:$0xff]
        %v1156 = vld [vmem:[%s413 + $0x38] sm:$0xff]
        %v1157 = vld [vmem:[%s413 + $0x40] sm:$0xff]
        %v1158 = vld [vmem:[%s413 + $0x48] sm:$0xff]
        %v1159 = vld [vmem:[%s413 + $0x50] sm:$0xff]
        %v1160 = vld [vmem:[%s413 + $0x58] sm:$0xff]
        %v1161 = vld [vmem:[%s413 + $0x60] sm:$0xff]
        %v1162 = vld [vmem:[%s413 + $0x68] sm:$0xff]
        %v1163 = vld [vmem:[%s413 + $0x70] sm:$0xff]
        %v1164 = vld [vmem:[%s413 + $0x78] sm:$0xff]
        %v1165 = vld [vmem:[%s413 + $0x80] sm:$0xff]
        %v1166 = vld [vmem:[%s413 + $0x88] sm:$0xff]
        %v1167 = vld [vmem:[%s413 + $0x90] sm:$0xff]
        %v1168 = vld [vmem:[%s413 + $0x98] sm:$0xff]
        %v1169 = vld [vmem:[%s413 + $0xa0] sm:$0xff]
        %v1170 = vld [vmem:[%s413 + $0xa8] sm:$0xff]
        %v1171 = vld [vmem:[%s413 + $0xb0] sm:$0xff]
        %v1172 = vld [vmem:[%s413 + $0xb8] sm:$0xff]
        %v1173 = vld [vmem:[%s413 + $0xc0] sm:$0xff]
        %v1174 = vld [vmem:[%s413 + $0xc8] sm:$0xff]
        %v1175 = vld [vmem:[%s413 + $0xd0] sm:$0xff]
        %v1176 = vld [vmem:[%s413 + $0xd8] sm:$0xff]
        %v1177 = vld [vmem:[%s413 + $0xe0] sm:$0xff]
        %v1178 = vld [vmem:[%s413 + $0xe8] sm:$0xff]
        %v1179 = vld [vmem:[%s413 + $0xf0] sm:$0xff]
        %v1180 = vld [vmem:[%s413 + $0xf8] sm:$0xff]
        %v1181 = vld [vmem:[%s413 + $0x100] sm:$0xff]
        %v1182 = vld [vmem:[%s413 + $0x108] sm:$0xff]
        %v1183 = vld [vmem:[%s413 + $0x110] sm:$0xff]
        %v1184 = vld [vmem:[%s413 + $0x118] sm:$0xff]
        %v1185 = vld [vmem:[%s413 + $0x120] sm:$0xff]
        %v1186 = vld [vmem:[%s413 + $0x128] sm:$0xff]
        %v1187 = vld [vmem:[%s413 + $0x130] sm:$0xff]
        %v1188 = vld [vmem:[%s413 + $0x138] sm:$0xff]
        %v1189 = vld [vmem:[%s413 + $0x140] sm:$0xff]
        %v1190 = vld [vmem:[%s413 + $0x148] sm:$0xff]
        %v1191 = vld [vmem:[%s413 + $0x150] sm:$0xff]
        %v1192 = vld [vmem:[%s413 + $0x158] sm:$0xff]
        %v1193 = vld [vmem:[%s413 + $0x160] sm:$0xff]
        %v1194 = vld [vmem:[%s413 + $0x168] sm:$0xff]
        %v1195 = vld [vmem:[%s413 + $0x170] sm:$0xff]
        %v1196 = vld [vmem:[%s413 + $0x178] sm:$0xff]
        %v1197 = vld [vmem:[%s413 + $0x180] sm:$0xff]
        %v1198 = vld [vmem:[%s413 + $0x188] sm:$0xff]
        %v1199 = vld [vmem:[%s413 + $0x190] sm:$0xff]
        %v1200 = vld [vmem:[%s413 + $0x198] sm:$0xff]
        %v1201 = vld [vmem:[%s413 + $0x1a0] sm:$0xff]
        %v1202 = vld [vmem:[%s413 + $0x1a8] sm:$0xff]
        %v1203 = vld [vmem:[%s413 + $0x1b0] sm:$0xff]
        %v1204 = vld [vmem:[%s413 + $0x1b8] sm:$0xff]
        %v1205 = vld [vmem:[%s413 + $0x1c0] sm:$0xff]
        %v1206 = vld [vmem:[%s413 + $0x1c8] sm:$0xff]
        %v1207 = vld [vmem:[%s413 + $0x1d0] sm:$0xff]
        %v1208 = vld [vmem:[%s413 + $0x1d8] sm:$0xff]
        %v1209 = vld [vmem:[%s413 + $0x1e0] sm:$0xff]
        %v1210 = vld [vmem:[%s413 + $0x1e8] sm:$0xff]
        %v1211 = vld [vmem:[%s413 + $0x1f0] sm:$0xff]
        %v1212 = vld [vmem:[%s413 + $0x1f8] sm:$0xff]
        %v1213 = vadd.f32 %v1085, %v1149
        %v1214 = vadd.f32 %v1086, %v1150
        %v1215 = vadd.f32 %v1087, %v1151
        %v1216 = vadd.f32 %v1088, %v1152
        %v1217 = vadd.f32 %v1089, %v1153
        %v1218 = vadd.f32 %v1090, %v1154
        %v1219 = vadd.f32 %v1091, %v1155
        %v1220 = vadd.f32 %v1092, %v1156
        %v1221 = vadd.f32 %v1093, %v1157
        %v1222 = vadd.f32 %v1094, %v1158
        %v1223 = vadd.f32 %v1095, %v1159
        %v1224 = vadd.f32 %v1096, %v1160
        %v1225 = vadd.f32 %v1097, %v1161
        %v1226 = vadd.f32 %v1098, %v1162
        %v1227 = vadd.f32 %v1099, %v1163
        %v1228 = vadd.f32 %v1100, %v1164
        %v1229 = vadd.f32 %v1101, %v1165
        %v1230 = vadd.f32 %v1102, %v1166
        %v1231 = vadd.f32 %v1103, %v1167
        %v1232 = vadd.f32 %v1104, %v1168
        %v1233 = vadd.f32 %v1105, %v1169
        %v1234 = vadd.f32 %v1106, %v1170
        %v1235 = vadd.f32 %v1107, %v1171
        %v1236 = vadd.f32 %v1108, %v1172
        %v1237 = vadd.f32 %v1109, %v1173
        %v1238 = vadd.f32 %v1110, %v1174
        %v1239 = vadd.f32 %v1111, %v1175
        %v1240 = vadd.f32 %v1112, %v1176
        %v1241 = vadd.f32 %v1113, %v1177
        %v1242 = vadd.f32 %v1114, %v1178
        %v1243 = vadd.f32 %v1115, %v1179
        %v1244 = vadd.f32 %v1116, %v1180
        %v1245 = vadd.f32 %v1117, %v1181
        %v1246 = vadd.f32 %v1118, %v1182
        %v1247 = vadd.f32 %v1119, %v1183
        %v1248 = vadd.f32 %v1120, %v1184
        %v1249 = vadd.f32 %v1121, %v1185
        %v1250 = vadd.f32 %v1122, %v1186
        %v1251 = vadd.f32 %v1123, %v1187
        %v1252 = vadd.f32 %v1124, %v1188
        %v1253 = vadd.f32 %v1125, %v1189
        %v1254 = vadd.f32 %v1126, %v1190
        %v1255 = vadd.f32 %v1127, %v1191
        %v1256 = vadd.f32 %v1128, %v1192
        %v1257 = vadd.f32 %v1129, %v1193
        %v1258 = vadd.f32 %v1130, %v1194
        %v1259 = vadd.f32 %v1131, %v1195
        %v1260 = vadd.f32 %v1132, %v1196
        %v1261 = vadd.f32 %v1133, %v1197
        %v1262 = vadd.f32 %v1134, %v1198
        %v1263 = vadd.f32 %v1135, %v1199
        %v1264 = vadd.f32 %v1136, %v1200
        %v1265 = vadd.f32 %v1137, %v1201
        %v1266 = vadd.f32 %v1138, %v1202
        %v1267 = vadd.f32 %v1139, %v1203
        %v1268 = vadd.f32 %v1140, %v1204
        %v1269 = vadd.f32 %v1141, %v1205
        %v1270 = vadd.f32 %v1142, %v1206
        %v1271 = vadd.f32 %v1143, %v1207
        %v1272 = vadd.f32 %v1144, %v1208
        %v1273 = vadd.f32 %v1145, %v1209
        %v1274 = vadd.f32 %v1146, %v1210
        %v1275 = vadd.f32 %v1147, %v1211
        %v1276 = vadd.f32 %v1148, %v1212
        %v1277 = vlaneseq
        %v1278 = vshrl.u32 %v1277, 7
        %v1279 = vadd.s32 %v1278, 8
        %v1280 = vadd.s32 %v1278, 16
        %v1281 = vadd.s32 %v1278, 24
        %v1282 = vadd.s32 %v1278, 32
        %v1283 = vadd.s32 %v1278, 40
        %v1284 = vadd.s32 %v1278, 48
        %v1285 = vadd.s32 %v1278, 56
        %v1286 = vadd.s32 %v1278, 64
        %v1287 = vadd.s32 %v1278, 72
        %v1288 = vadd.s32 %v1278, 80
        %v1289 = vadd.s32 %v1278, 88
        %v1290 = vadd.s32 %v1278, 96
        %v1291 = vadd.s32 %v1278, 104
        %v1292 = vadd.s32 %v1278, 112
        %v1293 = vadd.s32 %v1278, 120
        %v1294 = vadd.s32 %v1278, 128
        %v1295 = vadd.s32 %v1278, 136
        %v1296 = vadd.s32 %v1278, 144
        %v1297 = vadd.s32 %v1278, 152
        %v1298 = vadd.s32 %v1278, 160
        %v1299 = vadd.s32 %v1278, 168
        %v1300 = vadd.s32 %v1278, 176
        %v1301 = vadd.s32 %v1278, 184
        %v1302 = vadd.s32 %v1278, 192
        %v1303 = vadd.s32 %v1278, 200
        %v1304 = vadd.s32 %v1278, 208
        %v1305 = vadd.s32 %v1278, 216
        %v1306 = vadd.s32 %v1278, 224
        %v1307 = vadd.s32 %v1278, 232
        %v1308 = vadd.s32 %v1278, 240
        %v1309 = vadd.s32 %v1278, 248
        %v1310 = vstv %s533
        %v1311 = vadd.s32 %v1310, %v1278
        %v1312 = vadd.s32 %v1310, %v1279
        %v1313 = vadd.s32 %v1310, %v1280
        %v1314 = vadd.s32 %v1310, %v1281
        %v1315 = vadd.s32 %v1310, %v1282
        %v1316 = vadd.s32 %v1310, %v1283
        %v1317 = vadd.s32 %v1310, %v1284
        %v1318 = vadd.s32 %v1310, %v1285
        %v1319 = vadd.s32 %v1310, %v1286
        %v1320 = vadd.s32 %v1310, %v1287
        %v1321 = vadd.s32 %v1310, %v1288
        %v1322 = vadd.s32 %v1310, %v1289
        %v1323 = vadd.s32 %v1310, %v1290
        %v1324 = vadd.s32 %v1310, %v1291
        %v1325 = vadd.s32 %v1310, %v1292
        %v1326 = vadd.s32 %v1310, %v1293
        %v1327 = vadd.s32 %v1310, %v1294
        %v1328 = vadd.s32 %v1310, %v1295
        %v1329 = vadd.s32 %v1310, %v1296
        %v1330 = vadd.s32 %v1310, %v1297
        %v1331 = vadd.s32 %v1310, %v1298
        %v1332 = vadd.s32 %v1310, %v1299
        %v1333 = vadd.s32 %v1310, %v1300
        %v1334 = vadd.s32 %v1310, %v1301
        %v1335 = vadd.s32 %v1310, %v1302
        %v1336 = vadd.s32 %v1310, %v1303
        %v1337 = vadd.s32 %v1310, %v1304
        %v1338 = vadd.s32 %v1310, %v1305
        %v1339 = vadd.s32 %v1310, %v1306
        %v1340 = vadd.s32 %v1310, %v1307
        %v1341 = vadd.s32 %v1310, %v1308
        %v1342 = vadd.s32 %v1310, %v1309
        %v1343 = vlaneseq
        %v1344 = vand.u32 %v1343, 127
        %v1345 = vadd.s32 %v1344, 128
        %v1346 = vstv %s532
        %v1347 = vadd.s32 %v1346, %v1344
        %v1348 = vadd.s32 %v1346, %v1345
        %vm1349 = vcmp.le.s32.totalorder %v1347, %v1311
        %vm1350 = vcmp.le.s32.totalorder %v1348, %v1311
        %vm1351 = vcmp.le.s32.totalorder %v1347, %v1312
        %vm1352 = vcmp.le.s32.totalorder %v1348, %v1312
        %vm1353 = vcmp.le.s32.totalorder %v1347, %v1313
        %vm1354 = vcmp.le.s32.totalorder %v1348, %v1313
        %vm1355 = vcmp.le.s32.totalorder %v1347, %v1314
        %vm1356 = vcmp.le.s32.totalorder %v1348, %v1314
        %vm1357 = vcmp.le.s32.totalorder %v1347, %v1315
        %vm1358 = vcmp.le.s32.totalorder %v1348, %v1315
        %vm1359 = vcmp.le.s32.totalorder %v1347, %v1316
        %vm1360 = vcmp.le.s32.totalorder %v1348, %v1316
        %vm1361 = vcmp.le.s32.totalorder %v1347, %v1317
        %vm1362 = vcmp.le.s32.totalorder %v1348, %v1317
        %vm1363 = vcmp.le.s32.totalorder %v1347, %v1318
        %vm1364 = vcmp.le.s32.totalorder %v1348, %v1318
        %vm1365 = vcmp.le.s32.totalorder %v1347, %v1319
        %vm1366 = vcmp.le.s32.totalorder %v1348, %v1319
        %vm1367 = vcmp.le.s32.totalorder %v1347, %v1320
        %vm1368 = vcmp.le.s32.totalorder %v1348, %v1320
        %vm1369 = vcmp.le.s32.totalorder %v1347, %v1321
        %vm1370 = vcmp.le.s32.totalorder %v1348, %v1321
        %vm1371 = vcmp.le.s32.totalorder %v1347, %v1322
        %vm1372 = vcmp.le.s32.totalorder %v1348, %v1322
        %vm1373 = vcmp.le.s32.totalorder %v1347, %v1323
        %vm1374 = vcmp.le.s32.totalorder %v1348, %v1323
        %vm1375 = vcmp.le.s32.totalorder %v1347, %v1324
        %vm1376 = vcmp.le.s32.totalorder %v1348, %v1324
        %vm1377 = vcmp.le.s32.totalorder %v1347, %v1325
        %vm1378 = vcmp.le.s32.totalorder %v1348, %v1325
        %vm1379 = vcmp.le.s32.totalorder %v1347, %v1326
        %vm1380 = vcmp.le.s32.totalorder %v1348, %v1326
        %vm1381 = vcmp.le.s32.totalorder %v1347, %v1327
        %vm1382 = vcmp.le.s32.totalorder %v1348, %v1327
        %vm1383 = vcmp.le.s32.totalorder %v1347, %v1328
        %vm1384 = vcmp.le.s32.totalorder %v1348, %v1328
        %vm1385 = vcmp.le.s32.totalorder %v1347, %v1329
        %vm1386 = vcmp.le.s32.totalorder %v1348, %v1329
        %vm1387 = vcmp.le.s32.totalorder %v1347, %v1330
        %vm1388 = vcmp.le.s32.totalorder %v1348, %v1330
        %vm1389 = vcmp.le.s32.totalorder %v1347, %v1331
        %vm1390 = vcmp.le.s32.totalorder %v1348, %v1331
        %vm1391 = vcmp.le.s32.totalorder %v1347, %v1332
        %vm1392 = vcmp.le.s32.totalorder %v1348, %v1332
        %vm1393 = vcmp.le.s32.totalorder %v1347, %v1333
        %vm1394 = vcmp.le.s32.totalorder %v1348, %v1333
        %vm1395 = vcmp.le.s32.totalorder %v1347, %v1334
        %vm1396 = vcmp.le.s32.totalorder %v1348, %v1334
        %vm1397 = vcmp.le.s32.totalorder %v1347, %v1335
        %vm1398 = vcmp.le.s32.totalorder %v1348, %v1335
        %vm1399 = vcmp.le.s32.totalorder %v1347, %v1336
        %vm1400 = vcmp.le.s32.totalorder %v1348, %v1336
        %vm1401 = vcmp.le.s32.totalorder %v1347, %v1337
        %vm1402 = vcmp.le.s32.totalorder %v1348, %v1337
        %vm1403 = vcmp.le.s32.totalorder %v1347, %v1338
        %vm1404 = vcmp.le.s32.totalorder %v1348, %v1338
        %vm1405 = vcmp.le.s32.totalorder %v1347, %v1339
        %vm1406 = vcmp.le.s32.totalorder %v1348, %v1339
        %vm1407 = vcmp.le.s32.totalorder %v1347, %v1340
        %vm1408 = vcmp.le.s32.totalorder %v1348, %v1340
        %vm1409 = vcmp.le.s32.totalorder %v1347, %v1341
        %vm1410 = vcmp.le.s32.totalorder %v1348, %v1341
        %vm1411 = vcmp.le.s32.totalorder %v1347, %v1342
        %vm1412 = vcmp.le.s32.totalorder %v1348, %v1342
        %v1413 = vsel %vm1349, %v1213, -1e+30
        %v1414 = vsel %vm1350, %v1214, -1e+30
        %v1415 = vsel %vm1351, %v1215, -1e+30
        %v1416 = vsel %vm1352, %v1216, -1e+30
        %v1417 = vsel %vm1353, %v1217, -1e+30
        %v1418 = vsel %vm1354, %v1218, -1e+30
        %v1419 = vsel %vm1355, %v1219, -1e+30
        %v1420 = vsel %vm1356, %v1220, -1e+30
        %v1421 = vsel %vm1357, %v1221, -1e+30
        %v1422 = vsel %vm1358, %v1222, -1e+30
        %v1423 = vsel %vm1359, %v1223, -1e+30
        %v1424 = vsel %vm1360, %v1224, -1e+30
        %v1425 = vsel %vm1361, %v1225, -1e+30
        %v1426 = vsel %vm1362, %v1226, -1e+30
        %v1427 = vsel %vm1363, %v1227, -1e+30
        %v1428 = vsel %vm1364, %v1228, -1e+30
        %v1429 = vsel %vm1365, %v1229, -1e+30
        %v1430 = vsel %vm1366, %v1230, -1e+30
        %v1431 = vsel %vm1367, %v1231, -1e+30
        %v1432 = vsel %vm1368, %v1232, -1e+30
        %v1433 = vsel %vm1369, %v1233, -1e+30
        %v1434 = vsel %vm1370, %v1234, -1e+30
        %v1435 = vsel %vm1371, %v1235, -1e+30
        %v1436 = vsel %vm1372, %v1236, -1e+30
        %v1437 = vsel %vm1373, %v1237, -1e+30
        %v1438 = vsel %vm1374, %v1238, -1e+30
        %v1439 = vsel %vm1375, %v1239, -1e+30
        %v1440 = vsel %vm1376, %v1240, -1e+30
        %v1441 = vsel %vm1377, %v1241, -1e+30
        %v1442 = vsel %vm1378, %v1242, -1e+30
        %v1443 = vsel %vm1379, %v1243, -1e+30
        %v1444 = vsel %vm1380, %v1244, -1e+30
        %v1445 = vsel %vm1381, %v1245, -1e+30
        %v1446 = vsel %vm1382, %v1246, -1e+30
        %v1447 = vsel %vm1383, %v1247, -1e+30
        %v1448 = vsel %vm1384, %v1248, -1e+30
        %v1449 = vsel %vm1385, %v1249, -1e+30
        %v1450 = vsel %vm1386, %v1250, -1e+30
        %v1451 = vsel %vm1387, %v1251, -1e+30
        %v1452 = vsel %vm1388, %v1252, -1e+30
        %v1453 = vsel %vm1389, %v1253, -1e+30
        %v1454 = vsel %vm1390, %v1254, -1e+30
        %v1455 = vsel %vm1391, %v1255, -1e+30
        %v1456 = vsel %vm1392, %v1256, -1e+30
        %v1457 = vsel %vm1393, %v1257, -1e+30
        %v1458 = vsel %vm1394, %v1258, -1e+30
        %v1459 = vsel %vm1395, %v1259, -1e+30
        %v1460 = vsel %vm1396, %v1260, -1e+30
        %v1461 = vsel %vm1397, %v1261, -1e+30
        %v1462 = vsel %vm1398, %v1262, -1e+30
        %v1463 = vsel %vm1399, %v1263, -1e+30
        %v1464 = vsel %vm1400, %v1264, -1e+30
        %v1465 = vsel %vm1401, %v1265, -1e+30
        %v1466 = vsel %vm1402, %v1266, -1e+30
        %v1467 = vsel %vm1403, %v1267, -1e+30
        %v1468 = vsel %vm1404, %v1268, -1e+30
        %v1469 = vsel %vm1405, %v1269, -1e+30
        %v1470 = vsel %vm1406, %v1270, -1e+30
        %v1471 = vsel %vm1407, %v1271, -1e+30
        %v1472 = vsel %vm1408, %v1272, -1e+30
        %v1473 = vsel %vm1409, %v1273, -1e+30
        %v1474 = vsel %vm1410, %v1274, -1e+30
        %v1475 = vsel %vm1411, %v1275, -1e+30
        %v1476 = vsel %vm1412, %v1276, -1e+30
        %v1477 = vld [vmem:[#allocation2] sm:$0xff]
        %v1478 = vld [vmem:[#allocation2 + $0x8] sm:$0xff]
        %v1479 = vld [vmem:[#allocation2 + $0x10] sm:$0xff]
        %v1480 = vld [vmem:[#allocation2 + $0x18] sm:$0xff]
        %v1481 = vld [vmem:[#allocation2 + $0x20] sm:$0xff]
        %v1482 = vld [vmem:[#allocation2 + $0x28] sm:$0xff]
        %v1483 = vld [vmem:[#allocation2 + $0x30] sm:$0xff]
        %v1484 = vld [vmem:[#allocation2 + $0x38] sm:$0xff]
        %v1485 = vld [vmem:[#allocation2 + $0x40] sm:$0xff]
        %v1486 = vld [vmem:[#allocation2 + $0x48] sm:$0xff]
        %v1487 = vld [vmem:[#allocation2 + $0x50] sm:$0xff]
        %v1488 = vld [vmem:[#allocation2 + $0x58] sm:$0xff]
        %v1489 = vld [vmem:[#allocation2 + $0x60] sm:$0xff]
        %v1490 = vld [vmem:[#allocation2 + $0x68] sm:$0xff]
        %v1491 = vld [vmem:[#allocation2 + $0x70] sm:$0xff]
        %v1492 = vld [vmem:[#allocation2 + $0x78] sm:$0xff]
        %v1493 = vld [vmem:[#allocation2 + $0x80] sm:$0xff]
        %v1494 = vld [vmem:[#allocation2 + $0x88] sm:$0xff]
        %v1495 = vld [vmem:[#allocation2 + $0x90] sm:$0xff]
        %v1496 = vld [vmem:[#allocation2 + $0x98] sm:$0xff]
        %v1497 = vld [vmem:[#allocation2 + $0xa0] sm:$0xff]
        %v1498 = vld [vmem:[#allocation2 + $0xa8] sm:$0xff]
        %v1499 = vld [vmem:[#allocation2 + $0xb0] sm:$0xff]
        %v1500 = vld [vmem:[#allocation2 + $0xb8] sm:$0xff]
        %v1501 = vld [vmem:[#allocation2 + $0xc0] sm:$0xff]
        %v1502 = vld [vmem:[#allocation2 + $0xc8] sm:$0xff]
        %v1503 = vld [vmem:[#allocation2 + $0xd0] sm:$0xff]
        %v1504 = vld [vmem:[#allocation2 + $0xd8] sm:$0xff]
        %v1505 = vld [vmem:[#allocation2 + $0xe0] sm:$0xff]
        %v1506 = vld [vmem:[#allocation2 + $0xe8] sm:$0xff]
        %v1507 = vld [vmem:[#allocation2 + $0xf0] sm:$0xff]
        %v1508 = vld [vmem:[#allocation2 + $0xf8] sm:$0xff]
        %v1509 = vmax.f32 %v1413, %v1414
        %1510 = vmax.xlane.f32.xlu0 %v1509
        %v1511 = vpop.xlane.xlu0 %1510
        %v1512 = vmax.f32 %v1415, %v1416
        %1513 = vmax.xlane.f32.xlu0 %v1512
        %v1514 = vpop.xlane.xlu0 %1513
        %v1515 = vmax.f32 %v1417, %v1418
        %1516 = vmax.xlane.f32.xlu0 %v1515
        %v1517 = vpop.xlane.xlu0 %1516
        %v1518 = vmax.f32 %v1419, %v1420
        %1519 = vmax.xlane.f32.xlu0 %v1518
        %v1520 = vpop.xlane.xlu0 %1519
        %v1521 = vmax.f32 %v1421, %v1422
        %1522 = vmax.xlane.f32.xlu0 %v1521
        %v1523 = vpop.xlane.xlu0 %1522
        %v1524 = vmax.f32 %v1423, %v1424
        %1525 = vmax.xlane.f32.xlu0 %v1524
        %v1526 = vpop.xlane.xlu0 %1525
        %v1527 = vmax.f32 %v1425, %v1426
        %1528 = vmax.xlane.f32.xlu0 %v1527
        %v1529 = vpop.xlane.xlu0 %1528
        %v1530 = vmax.f32 %v1427, %v1428
        %1531 = vmax.xlane.f32.xlu0 %v1530
        %v1532 = vpop.xlane.xlu0 %1531
        %v1533 = vmax.f32 %v1429, %v1430
        %1534 = vmax.xlane.f32.xlu0 %v1533
        %v1535 = vpop.xlane.xlu0 %1534
        %v1536 = vmax.f32 %v1431, %v1432
        %1537 = vmax.xlane.f32.xlu0 %v1536
        %v1538 = vpop.xlane.xlu0 %1537
        %v1539 = vmax.f32 %v1433, %v1434
        %1540 = vmax.xlane.f32.xlu0 %v1539
        %v1541 = vpop.xlane.xlu0 %1540
        %v1542 = vmax.f32 %v1435, %v1436
        %1543 = vmax.xlane.f32.xlu0 %v1542
        %v1544 = vpop.xlane.xlu0 %1543
        %v1545 = vmax.f32 %v1437, %v1438
        %1546 = vmax.xlane.f32.xlu0 %v1545
        %v1547 = vpop.xlane.xlu0 %1546
        %v1548 = vmax.f32 %v1439, %v1440
        %1549 = vmax.xlane.f32.xlu0 %v1548
        %v1550 = vpop.xlane.xlu0 %1549
        %v1551 = vmax.f32 %v1441, %v1442
        %1552 = vmax.xlane.f32.xlu0 %v1551
        %v1553 = vpop.xlane.xlu0 %1552
        %v1554 = vmax.f32 %v1443, %v1444
        %1555 = vmax.xlane.f32.xlu0 %v1554
        %v1556 = vpop.xlane.xlu0 %1555
        %v1557 = vmax.f32 %v1445, %v1446
        %1558 = vmax.xlane.f32.xlu0 %v1557
        %v1559 = vpop.xlane.xlu0 %1558
        %v1560 = vmax.f32 %v1447, %v1448
        %1561 = vmax.xlane.f32.xlu0 %v1560
        %v1562 = vpop.xlane.xlu0 %1561
        %v1563 = vmax.f32 %v1449, %v1450
        %1564 = vmax.xlane.f32.xlu0 %v1563
        %v1565 = vpop.xlane.xlu0 %1564
        %v1566 = vmax.f32 %v1451, %v1452
        %1567 = vmax.xlane.f32.xlu0 %v1566
        %v1568 = vpop.xlane.xlu0 %1567
        %v1569 = vmax.f32 %v1453, %v1454
        %1570 = vmax.xlane.f32.xlu0 %v1569
        %v1571 = vpop.xlane.xlu0 %1570
        %v1572 = vmax.f32 %v1455, %v1456
        %1573 = vmax.xlane.f32.xlu0 %v1572
        %v1574 = vpop.xlane.xlu0 %1573
        %v1575 = vmax.f32 %v1457, %v1458
        %1576 = vmax.xlane.f32.xlu0 %v1575
        %v1577 = vpop.xlane.xlu0 %1576
        %v1578 = vmax.f32 %v1459, %v1460
        %1579 = vmax.xlane.f32.xlu0 %v1578
        %v1580 = vpop.xlane.xlu0 %1579
        %v1581 = vmax.f32 %v1461, %v1462
        %1582 = vmax.xlane.f32.xlu0 %v1581
        %v1583 = vpop.xlane.xlu0 %1582
        %v1584 = vmax.f32 %v1463, %v1464
        %1585 = vmax.xlane.f32.xlu0 %v1584
        %v1586 = vpop.xlane.xlu0 %1585
        %v1587 = vmax.f32 %v1465, %v1466
        %1588 = vmax.xlane.f32.xlu0 %v1587
        %v1589 = vpop.xlane.xlu0 %1588
        %v1590 = vmax.f32 %v1467, %v1468
        %1591 = vmax.xlane.f32.xlu0 %v1590
        %v1592 = vpop.xlane.xlu0 %1591
        %v1593 = vmax.f32 %v1469, %v1470
        %1594 = vmax.xlane.f32.xlu0 %v1593
        %v1595 = vpop.xlane.xlu0 %1594
        %v1596 = vmax.f32 %v1471, %v1472
        %1597 = vmax.xlane.f32.xlu0 %v1596
        %v1598 = vpop.xlane.xlu0 %1597
        %v1599 = vmax.f32 %v1473, %v1474
        %1600 = vmax.xlane.f32.xlu0 %v1599
        %v1601 = vpop.xlane.xlu0 %1600
        %v1602 = vmax.f32 %v1475, %v1476
        %1603 = vmax.xlane.f32.xlu0 %v1602
        %v1604 = vpop.xlane.xlu0 %1603
        %v1605 = vmax.f32 %v1477, %v1511
        %v1606 = vmax.f32 %v1478, %v1514
        %v1607 = vmax.f32 %v1479, %v1517
        %v1608 = vmax.f32 %v1480, %v1520
        %v1609 = vmax.f32 %v1481, %v1523
        %v1610 = vmax.f32 %v1482, %v1526
        %v1611 = vmax.f32 %v1483, %v1529
        %v1612 = vmax.f32 %v1484, %v1532
        %v1613 = vmax.f32 %v1485, %v1535
        %v1614 = vmax.f32 %v1486, %v1538
        %v1615 = vmax.f32 %v1487, %v1541
        %v1616 = vmax.f32 %v1488, %v1544
        %v1617 = vmax.f32 %v1489, %v1547
        %v1618 = vmax.f32 %v1490, %v1550
        %v1619 = vmax.f32 %v1491, %v1553
        %v1620 = vmax.f32 %v1492, %v1556
        %v1621 = vmax.f32 %v1493, %v1559
        %v1622 = vmax.f32 %v1494, %v1562
        %v1623 = vmax.f32 %v1495, %v1565
        %v1624 = vmax.f32 %v1496, %v1568
        %v1625 = vmax.f32 %v1497, %v1571
        %v1626 = vmax.f32 %v1498, %v1574
        %v1627 = vmax.f32 %v1499, %v1577
        %v1628 = vmax.f32 %v1500, %v1580
        %v1629 = vmax.f32 %v1501, %v1583
        %v1630 = vmax.f32 %v1502, %v1586
        %v1631 = vmax.f32 %v1503, %v1589
        %v1632 = vmax.f32 %v1504, %v1592
        %v1633 = vmax.f32 %v1505, %v1595
        %v1634 = vmax.f32 %v1506, %v1598
        %v1635 = vmax.f32 %v1507, %v1601
        %v1636 = vmax.f32 %v1508, %v1604
        %v1637 = vsub.f32 %v1477, %v1605
        %v1638 = vsub.f32 %v1478, %v1606
        %v1639 = vsub.f32 %v1479, %v1607
        %v1640 = vsub.f32 %v1480, %v1608
        %v1641 = vsub.f32 %v1481, %v1609
        %v1642 = vsub.f32 %v1482, %v1610
        %v1643 = vsub.f32 %v1483, %v1611
        %v1644 = vsub.f32 %v1484, %v1612
        %v1645 = vsub.f32 %v1485, %v1613
        %v1646 = vsub.f32 %v1486, %v1614
        %v1647 = vsub.f32 %v1487, %v1615
        %v1648 = vsub.f32 %v1488, %v1616
        %v1649 = vsub.f32 %v1489, %v1617
        %v1650 = vsub.f32 %v1490, %v1618
        %v1651 = vsub.f32 %v1491, %v1619
        %v1652 = vsub.f32 %v1492, %v1620
        %v1653 = vsub.f32 %v1493, %v1621
        %v1654 = vsub.f32 %v1494, %v1622
        %v1655 = vsub.f32 %v1495, %v1623
        %v1656 = vsub.f32 %v1496, %v1624
        %v1657 = vsub.f32 %v1497, %v1625
        %v1658 = vsub.f32 %v1498, %v1626
        %v1659 = vsub.f32 %v1499, %v1627
        %v1660 = vsub.f32 %v1500, %v1628
        %v1661 = vsub.f32 %v1501, %v1629
        %v1662 = vsub.f32 %v1502, %v1630
        %v1663 = vsub.f32 %v1503, %v1631
        %v1664 = vsub.f32 %v1504, %v1632
        %v1665 = vsub.f32 %v1505, %v1633
        %v1666 = vsub.f32 %v1506, %v1634
        %v1667 = vsub.f32 %v1507, %v1635
        %v1668 = vsub.f32 %v1508, %v1636
        %v1669 = vmul.f32 %v1637, 1.442695
        %v1670 = vpow.pop %v1669
        %v1671 = vmul.f32 %v1638, 1.442695
        %v1672 = vpow.pop %v1671
        %v1673 = vmul.f32 %v1639, 1.442695
        %v1674 = vpow.pop %v1673
        %v1675 = vmul.f32 %v1640, 1.442695
        %v1676 = vpow.pop %v1675
        %v1677 = vmul.f32 %v1641, 1.442695
        %v1678 = vpow.pop %v1677
        %v1679 = vmul.f32 %v1642, 1.442695
        %v1680 = vpow.pop %v1679
        %v1681 = vmul.f32 %v1643, 1.442695
        %v1682 = vpow.pop %v1681
        %v1683 = vmul.f32 %v1644, 1.442695
        %v1684 = vpow.pop %v1683
        %v1685 = vmul.f32 %v1645, 1.442695
        %v1686 = vpow.pop %v1685
        %v1687 = vmul.f32 %v1646, 1.442695
        %v1688 = vpow.pop %v1687
        %v1689 = vmul.f32 %v1647, 1.442695
        %v1690 = vpow.pop %v1689
        %v1691 = vmul.f32 %v1648, 1.442695
        %v1692 = vpow.pop %v1691
        %v1693 = vmul.f32 %v1649, 1.442695
        %v1694 = vpow.pop %v1693
        %v1695 = vmul.f32 %v1650, 1.442695
        %v1696 = vpow.pop %v1695
        %v1697 = vmul.f32 %v1651, 1.442695
        %v1698 = vpow.pop %v1697
        %v1699 = vmul.f32 %v1652, 1.442695
        %v1700 = vpow.pop %v1699
        %v1701 = vmul.f32 %v1653, 1.442695
        %v1702 = vpow.pop %v1701
        %v1703 = vmul.f32 %v1654, 1.442695
        %v1704 = vpow.pop %v1703
        %v1705 = vmul.f32 %v1655, 1.442695
        %v1706 = vpow.pop %v1705
        %v1707 = vmul.f32 %v1656, 1.442695
        %v1708 = vpow.pop %v1707
        %v1709 = vmul.f32 %v1657, 1.442695
        %v1710 = vpow.pop %v1709
        %v1711 = vmul.f32 %v1658, 1.442695
        %v1712 = vpow.pop %v1711
        %v1713 = vmul.f32 %v1659, 1.442695
        %v1714 = vpow.pop %v1713
        %v1715 = vmul.f32 %v1660, 1.442695
        %v1716 = vpow.pop %v1715
        %v1717 = vmul.f32 %v1661, 1.442695
        %v1718 = vpow.pop %v1717
        %v1719 = vmul.f32 %v1662, 1.442695
        %v1720 = vpow.pop %v1719
        %v1721 = vmul.f32 %v1663, 1.442695
        %v1722 = vpow.pop %v1721
        %v1723 = vmul.f32 %v1664, 1.442695
        %v1724 = vpow.pop %v1723
        %v1725 = vmul.f32 %v1665, 1.442695
        %v1726 = vpow.pop %v1725
        %v1727 = vmul.f32 %v1666, 1.442695
        %v1728 = vpow.pop %v1727
        %v1729 = vmul.f32 %v1667, 1.442695
        %v1730 = vpow.pop %v1729
        %v1731 = vmul.f32 %v1668, 1.442695
        %v1732 = vpow.pop %v1731
        %1734 = vset.pattern.permute.xlu0 0
        %1735 = vperm.xlu0 %1734, %v1605
        %v1736 = vpop.permute.xlu0 %1735
        %1739 = vset.pattern.permute.xlu0 0
        %1740 = vperm.xlu0 %1739, %v1606
        %v1741 = vpop.permute.xlu0 %1740
        %1744 = vset.pattern.permute.xlu0 0
        %1745 = vperm.xlu0 %1744, %v1607
        %v1746 = vpop.permute.xlu0 %1745
        %1749 = vset.pattern.permute.xlu0 0
        %1750 = vperm.xlu0 %1749, %v1608
        %v1751 = vpop.permute.xlu0 %1750
        %1754 = vset.pattern.permute.xlu0 0
        %1755 = vperm.xlu0 %1754, %v1609
        %v1756 = vpop.permute.xlu0 %1755
        %1759 = vset.pattern.permute.xlu0 0
        %1760 = vperm.xlu0 %1759, %v1610
        %v1761 = vpop.permute.xlu0 %1760
        %1764 = vset.pattern.permute.xlu0 0
        %1765 = vperm.xlu0 %1764, %v1611
        %v1766 = vpop.permute.xlu0 %1765
        %1769 = vset.pattern.permute.xlu0 0
        %1770 = vperm.xlu0 %1769, %v1612
        %v1771 = vpop.permute.xlu0 %1770
        %1774 = vset.pattern.permute.xlu0 0
        %1775 = vperm.xlu0 %1774, %v1613
        %v1776 = vpop.permute.xlu0 %1775
        %1779 = vset.pattern.permute.xlu0 0
        %1780 = vperm.xlu0 %1779, %v1614
        %v1781 = vpop.permute.xlu0 %1780
        %1784 = vset.pattern.permute.xlu0 0
        %1785 = vperm.xlu0 %1784, %v1615
        %v1786 = vpop.permute.xlu0 %1785
        %1789 = vset.pattern.permute.xlu0 0
        %1790 = vperm.xlu0 %1789, %v1616
        %v1791 = vpop.permute.xlu0 %1790
        %1794 = vset.pattern.permute.xlu0 0
        %1795 = vperm.xlu0 %1794, %v1617
        %v1796 = vpop.permute.xlu0 %1795
        %1799 = vset.pattern.permute.xlu0 0
        %1800 = vperm.xlu0 %1799, %v1618
        %v1801 = vpop.permute.xlu0 %1800
        %1804 = vset.pattern.permute.xlu0 0
        %1805 = vperm.xlu0 %1804, %v1619
        %v1806 = vpop.permute.xlu0 %1805
        %1809 = vset.pattern.permute.xlu0 0
        %1810 = vperm.xlu0 %1809, %v1620
        %v1811 = vpop.permute.xlu0 %1810
        %1814 = vset.pattern.permute.xlu0 0
        %1815 = vperm.xlu0 %1814, %v1621
        %v1816 = vpop.permute.xlu0 %1815
        %1819 = vset.pattern.permute.xlu0 0
        %1820 = vperm.xlu0 %1819, %v1622
        %v1821 = vpop.permute.xlu0 %1820
        %1824 = vset.pattern.permute.xlu0 0
        %1825 = vperm.xlu0 %1824, %v1623
        %v1826 = vpop.permute.xlu0 %1825
        %1829 = vset.pattern.permute.xlu0 0
        %1830 = vperm.xlu0 %1829, %v1624
        %v1831 = vpop.permute.xlu0 %1830
        %1834 = vset.pattern.permute.xlu0 0
        %1835 = vperm.xlu0 %1834, %v1625
        %v1836 = vpop.permute.xlu0 %1835
        %1839 = vset.pattern.permute.xlu0 0
        %1840 = vperm.xlu0 %1839, %v1626
        %v1841 = vpop.permute.xlu0 %1840
        %1844 = vset.pattern.permute.xlu0 0
        %1845 = vperm.xlu0 %1844, %v1627
        %v1846 = vpop.permute.xlu0 %1845
        %1849 = vset.pattern.permute.xlu0 0
        %1850 = vperm.xlu0 %1849, %v1628
        %v1851 = vpop.permute.xlu0 %1850
        %1854 = vset.pattern.permute.xlu0 0
        %1855 = vperm.xlu0 %1854, %v1629
        %v1856 = vpop.permute.xlu0 %1855
        %1859 = vset.pattern.permute.xlu0 0
        %1860 = vperm.xlu0 %1859, %v1630
        %v1861 = vpop.permute.xlu0 %1860
        %1864 = vset.pattern.permute.xlu0 0
        %1865 = vperm.xlu0 %1864, %v1631
        %v1866 = vpop.permute.xlu0 %1865
        %1869 = vset.pattern.permute.xlu0 0
        %1870 = vperm.xlu0 %1869, %v1632
        %v1871 = vpop.permute.xlu0 %1870
        %1874 = vset.pattern.permute.xlu0 0
        %1875 = vperm.xlu0 %1874, %v1633
        %v1876 = vpop.permute.xlu0 %1875
        %1879 = vset.pattern.permute.xlu0 0
        %1880 = vperm.xlu0 %1879, %v1634
        %v1881 = vpop.permute.xlu0 %1880
        %1884 = vset.pattern.permute.xlu0 0
        %1885 = vperm.xlu0 %1884, %v1635
        %v1886 = vpop.permute.xlu0 %1885
        %1889 = vset.pattern.permute.xlu0 0
        %1890 = vperm.xlu0 %1889, %v1636
        %v1891 = vpop.permute.xlu0 %1890
        %v1893 = vsub.f32 %v1413, %v1736
        %v1894 = vsub.f32 %v1414, %v1736
        %v1895 = vsub.f32 %v1415, %v1741
        %v1896 = vsub.f32 %v1416, %v1741
        %v1897 = vsub.f32 %v1417, %v1746
        %v1898 = vsub.f32 %v1418, %v1746
        %v1899 = vsub.f32 %v1419, %v1751
        %v1900 = vsub.f32 %v1420, %v1751
        %v1901 = vsub.f32 %v1421, %v1756
        %v1902 = vsub.f32 %v1422, %v1756
        %v1903 = vsub.f32 %v1423, %v1761
        %v1904 = vsub.f32 %v1424, %v1761
        %v1905 = vsub.f32 %v1425, %v1766
        %v1906 = vsub.f32 %v1426, %v1766
        %v1907 = vsub.f32 %v1427, %v1771
        %v1908 = vsub.f32 %v1428, %v1771
        %v1909 = vsub.f32 %v1429, %v1776
        %v1910 = vsub.f32 %v1430, %v1776
        %v1911 = vsub.f32 %v1431, %v1781
        %v1912 = vsub.f32 %v1432, %v1781
        %v1913 = vsub.f32 %v1433, %v1786
        %v1914 = vsub.f32 %v1434, %v1786
        %v1915 = vsub.f32 %v1435, %v1791
        %v1916 = vsub.f32 %v1436, %v1791
        %v1917 = vsub.f32 %v1437, %v1796
        %v1918 = vsub.f32 %v1438, %v1796
        %v1919 = vsub.f32 %v1439, %v1801
        %v1920 = vsub.f32 %v1440, %v1801
        %v1921 = vsub.f32 %v1441, %v1806
        %v1922 = vsub.f32 %v1442, %v1806
        %v1923 = vsub.f32 %v1443, %v1811
        %v1924 = vsub.f32 %v1444, %v1811
        %v1925 = vsub.f32 %v1445, %v1816
        %v1926 = vsub.f32 %v1446, %v1816
        %v1927 = vsub.f32 %v1447, %v1821
        %v1928 = vsub.f32 %v1448, %v1821
        %v1929 = vsub.f32 %v1449, %v1826
        %v1930 = vsub.f32 %v1450, %v1826
        %v1931 = vsub.f32 %v1451, %v1831
        %v1932 = vsub.f32 %v1452, %v1831
        %v1933 = vsub.f32 %v1453, %v1836
        %v1934 = vsub.f32 %v1454, %v1836
        %v1935 = vsub.f32 %v1455, %v1841
        %v1936 = vsub.f32 %v1456, %v1841
        %v1937 = vsub.f32 %v1457, %v1846
        %v1938 = vsub.f32 %v1458, %v1846
        %v1939 = vsub.f32 %v1459, %v1851
        %v1940 = vsub.f32 %v1460, %v1851
        %v1941 = vsub.f32 %v1461, %v1856
        %v1942 = vsub.f32 %v1462, %v1856
        %v1943 = vsub.f32 %v1463, %v1861
        %v1944 = vsub.f32 %v1464, %v1861
        %v1945 = vsub.f32 %v1465, %v1866
        %v1946 = vsub.f32 %v1466, %v1866
        %v1947 = vsub.f32 %v1467, %v1871
        %v1948 = vsub.f32 %v1468, %v1871
        %v1949 = vsub.f32 %v1469, %v1876
        %v1950 = vsub.f32 %v1470, %v1876
        %v1951 = vsub.f32 %v1471, %v1881
        %v1952 = vsub.f32 %v1472, %v1881
        %v1953 = vsub.f32 %v1473, %v1886
        %v1954 = vsub.f32 %v1474, %v1886
        %v1955 = vsub.f32 %v1475, %v1891
        %v1956 = vsub.f32 %v1476, %v1891
        %v1957 = vmul.f32 %v1893, 1.442695
        %v1958 = vpow.pop %v1957
        %v1959 = vmul.f32 %v1894, 1.442695
        %v1960 = vpow.pop %v1959
        %v1961 = vmul.f32 %v1895, 1.442695
        %v1962 = vpow.pop %v1961
        %v1963 = vmul.f32 %v1896, 1.442695
        %v1964 = vpow.pop %v1963
        %v1965 = vmul.f32 %v1897, 1.442695
        %v1966 = vpow.pop %v1965
        %v1967 = vmul.f32 %v1898, 1.442695
        %v1968 = vpow.pop %v1967
        %v1969 = vmul.f32 %v1899, 1.442695
        %v1970 = vpow.pop %v1969
        %v1971 = vmul.f32 %v1900, 1.442695
        %v1972 = vpow.pop %v1971
        %v1973 = vmul.f32 %v1901, 1.442695
        %v1974 = vpow.pop %v1973
        %v1975 = vmul.f32 %v1902, 1.442695
        %v1976 = vpow.pop %v1975
        %v1977 = vmul.f32 %v1903, 1.442695
        %v1978 = vpow.pop %v1977
        %v1979 = vmul.f32 %v1904, 1.442695
        %v1980 = vpow.pop %v1979
        %v1981 = vmul.f32 %v1905, 1.442695
        %v1982 = vpow.pop %v1981
        %v1983 = vmul.f32 %v1906, 1.442695
        %v1984 = vpow.pop %v1983
        %v1985 = vmul.f32 %v1907, 1.442695
        %v1986 = vpow.pop %v1985
        %v1987 = vmul.f32 %v1908, 1.442695
        %v1988 = vpow.pop %v1987
        %v1989 = vmul.f32 %v1909, 1.442695
        %v1990 = vpow.pop %v1989
        %v1991 = vmul.f32 %v1910, 1.442695
        %v1992 = vpow.pop %v1991
        %v1993 = vmul.f32 %v1911, 1.442695
        %v1994 = vpow.pop %v1993
        %v1995 = vmul.f32 %v1912, 1.442695
        %v1996 = vpow.pop %v1995
        %v1997 = vmul.f32 %v1913, 1.442695
        %v1998 = vpow.pop %v1997
        %v1999 = vmul.f32 %v1914, 1.442695
        %v2000 = vpow.pop %v1999
        %v2001 = vmul.f32 %v1915, 1.442695
        %v2002 = vpow.pop %v2001
        %v2003 = vmul.f32 %v1916, 1.442695
        %v2004 = vpow.pop %v2003
        %v2005 = vmul.f32 %v1917, 1.442695
        %v2006 = vpow.pop %v2005
        %v2007 = vmul.f32 %v1918, 1.442695
        %v2008 = vpow.pop %v2007
        %v2009 = vmul.f32 %v1919, 1.442695
        %v2010 = vpow.pop %v2009
        %v2011 = vmul.f32 %v1920, 1.442695
        %v2012 = vpow.pop %v2011
        %v2013 = vmul.f32 %v1921, 1.442695
        %v2014 = vpow.pop %v2013
        %v2015 = vmul.f32 %v1922, 1.442695
        %v2016 = vpow.pop %v2015
        %v2017 = vmul.f32 %v1923, 1.442695
        %v2018 = vpow.pop %v2017
        %v2019 = vmul.f32 %v1924, 1.442695
        %v2020 = vpow.pop %v2019
        %v2021 = vmul.f32 %v1925, 1.442695
        %v2022 = vpow.pop %v2021
        %v2023 = vmul.f32 %v1926, 1.442695
        %v2024 = vpow.pop %v2023
        %v2025 = vmul.f32 %v1927, 1.442695
        %v2026 = vpow.pop %v2025
        %v2027 = vmul.f32 %v1928, 1.442695
        %v2028 = vpow.pop %v2027
        %v2029 = vmul.f32 %v1929, 1.442695
        %v2030 = vpow.pop %v2029
        %v2031 = vmul.f32 %v1930, 1.442695
        %v2032 = vpow.pop %v2031
        %v2033 = vmul.f32 %v1931, 1.442695
        %v2034 = vpow.pop %v2033
        %v2035 = vmul.f32 %v1932, 1.442695
        %v2036 = vpow.pop %v2035
        %v2037 = vmul.f32 %v1933, 1.442695
        %v2038 = vpow.pop %v2037
        %v2039 = vmul.f32 %v1934, 1.442695
        %v2040 = vpow.pop %v2039
        %v2041 = vmul.f32 %v1935, 1.442695
        %v2042 = vpow.pop %v2041
        %v2043 = vmul.f32 %v1936, 1.442695
        %v2044 = vpow.pop %v2043
        %v2045 = vmul.f32 %v1937, 1.442695
        %v2046 = vpow.pop %v2045
        %v2047 = vmul.f32 %v1938, 1.442695
        %v2048 = vpow.pop %v2047
        %v2049 = vmul.f32 %v1939, 1.442695
        %v2050 = vpow.pop %v2049
        %v2051 = vmul.f32 %v1940, 1.442695
        %v2052 = vpow.pop %v2051
        %v2053 = vmul.f32 %v1941, 1.442695
        %v2054 = vpow.pop %v2053
        %v2055 = vmul.f32 %v1942, 1.442695
        %v2056 = vpow.pop %v2055
        %v2057 = vmul.f32 %v1943, 1.442695
        %v2058 = vpow.pop %v2057
        %v2059 = vmul.f32 %v1944, 1.442695
        %v2060 = vpow.pop %v2059
        %v2061 = vmul.f32 %v1945, 1.442695
        %v2062 = vpow.pop %v2061
        %v2063 = vmul.f32 %v1946, 1.442695
        %v2064 = vpow.pop %v2063
        %v2065 = vmul.f32 %v1947, 1.442695
        %v2066 = vpow.pop %v2065
        %v2067 = vmul.f32 %v1948, 1.442695
        %v2068 = vpow.pop %v2067
        %v2069 = vmul.f32 %v1949, 1.442695
        %v2070 = vpow.pop %v2069
        %v2071 = vmul.f32 %v1950, 1.442695
        %v2072 = vpow.pop %v2071
        %v2073 = vmul.f32 %v1951, 1.442695
        %v2074 = vpow.pop %v2073
        %v2075 = vmul.f32 %v1952, 1.442695
        %v2076 = vpow.pop %v2075
        %v2077 = vmul.f32 %v1953, 1.442695
        %v2078 = vpow.pop %v2077
        %v2079 = vmul.f32 %v1954, 1.442695
        %v2080 = vpow.pop %v2079
        %v2081 = vmul.f32 %v1955, 1.442695
        %v2082 = vpow.pop %v2081
        %v2083 = vmul.f32 %v1956, 1.442695
        %v2084 = vpow.pop %v2083
        %v2085 = vld [vmem:[#allocation3] sm:$0xff]
        %v2086 = vld [vmem:[#allocation3 + $0x8] sm:$0xff]
        %v2087 = vld [vmem:[#allocation3 + $0x10] sm:$0xff]
        %v2088 = vld [vmem:[#allocation3 + $0x18] sm:$0xff]
        %v2089 = vld [vmem:[#allocation3 + $0x20] sm:$0xff]
        %v2090 = vld [vmem:[#allocation3 + $0x28] sm:$0xff]
        %v2091 = vld [vmem:[#allocation3 + $0x30] sm:$0xff]
        %v2092 = vld [vmem:[#allocation3 + $0x38] sm:$0xff]
        %v2093 = vld [vmem:[#allocation3 + $0x40] sm:$0xff]
        %v2094 = vld [vmem:[#allocation3 + $0x48] sm:$0xff]
        %v2095 = vld [vmem:[#allocation3 + $0x50] sm:$0xff]
        %v2096 = vld [vmem:[#allocation3 + $0x58] sm:$0xff]
        %v2097 = vld [vmem:[#allocation3 + $0x60] sm:$0xff]
        %v2098 = vld [vmem:[#allocation3 + $0x68] sm:$0xff]
        %v2099 = vld [vmem:[#allocation3 + $0x70] sm:$0xff]
        %v2100 = vld [vmem:[#allocation3 + $0x78] sm:$0xff]
        %v2101 = vld [vmem:[#allocation3 + $0x80] sm:$0xff]
        %v2102 = vld [vmem:[#allocation3 + $0x88] sm:$0xff]
        %v2103 = vld [vmem:[#allocation3 + $0x90] sm:$0xff]
        %v2104 = vld [vmem:[#allocation3 + $0x98] sm:$0xff]
        %v2105 = vld [vmem:[#allocation3 + $0xa0] sm:$0xff]
        %v2106 = vld [vmem:[#allocation3 + $0xa8] sm:$0xff]
        %v2107 = vld [vmem:[#allocation3 + $0xb0] sm:$0xff]
        %v2108 = vld [vmem:[#allocation3 + $0xb8] sm:$0xff]
        %v2109 = vld [vmem:[#allocation3 + $0xc0] sm:$0xff]
        %v2110 = vld [vmem:[#allocation3 + $0xc8] sm:$0xff]
        %v2111 = vld [vmem:[#allocation3 + $0xd0] sm:$0xff]
        %v2112 = vld [vmem:[#allocation3 + $0xd8] sm:$0xff]
        %v2113 = vld [vmem:[#allocation3 + $0xe0] sm:$0xff]
        %v2114 = vld [vmem:[#allocation3 + $0xe8] sm:$0xff]
        %v2115 = vld [vmem:[#allocation3 + $0xf0] sm:$0xff]
        %v2116 = vld [vmem:[#allocation3 + $0xf8] sm:$0xff]
        %v2117 = vmul.f32 %v1670, %v2085
        %v2118 = vmul.f32 %v1672, %v2086
        %v2119 = vmul.f32 %v1674, %v2087
        %v2120 = vmul.f32 %v1676, %v2088
        %v2121 = vmul.f32 %v1678, %v2089
        %v2122 = vmul.f32 %v1680, %v2090
        %v2123 = vmul.f32 %v1682, %v2091
        %v2124 = vmul.f32 %v1684, %v2092
        %v2125 = vmul.f32 %v1686, %v2093
        %v2126 = vmul.f32 %v1688, %v2094
        %v2127 = vmul.f32 %v1690, %v2095
        %v2128 = vmul.f32 %v1692, %v2096
        %v2129 = vmul.f32 %v1694, %v2097
        %v2130 = vmul.f32 %v1696, %v2098
        %v2131 = vmul.f32 %v1698, %v2099
        %v2132 = vmul.f32 %v1700, %v2100
        %v2133 = vmul.f32 %v1702, %v2101
        %v2134 = vmul.f32 %v1704, %v2102
        %v2135 = vmul.f32 %v1706, %v2103
        %v2136 = vmul.f32 %v1708, %v2104
        %v2137 = vmul.f32 %v1710, %v2105
        %v2138 = vmul.f32 %v1712, %v2106
        %v2139 = vmul.f32 %v1714, %v2107
        %v2140 = vmul.f32 %v1716, %v2108
        %v2141 = vmul.f32 %v1718, %v2109
        %v2142 = vmul.f32 %v1720, %v2110
        %v2143 = vmul.f32 %v1722, %v2111
        %v2144 = vmul.f32 %v1724, %v2112
        %v2145 = vmul.f32 %v1726, %v2113
        %v2146 = vmul.f32 %v1728, %v2114
        %v2147 = vmul.f32 %v1730, %v2115
        %v2148 = vmul.f32 %v1732, %v2116
        %v2149 = vadd.f32 %v1958, %v1960
        %2150 = vadd.xlane.f32.xlu0 %v2149
        %v2151 = vpop.xlane.xlu0 %2150
        %v2152 = vadd.f32 %v1962, %v1964
        %2153 = vadd.xlane.f32.xlu0 %v2152
        %v2154 = vpop.xlane.xlu0 %2153
        %v2155 = vadd.f32 %v1966, %v1968
        %2156 = vadd.xlane.f32.xlu0 %v2155
        %v2157 = vpop.xlane.xlu0 %2156
        %v2158 = vadd.f32 %v1970, %v1972
        %2159 = vadd.xlane.f32.xlu0 %v2158
        %v2160 = vpop.xlane.xlu0 %2159
        %v2161 = vadd.f32 %v1974, %v1976
        %2162 = vadd.xlane.f32.xlu0 %v2161
        %v2163 = vpop.xlane.xlu0 %2162
        %v2164 = vadd.f32 %v1978, %v1980
        %2165 = vadd.xlane.f32.xlu0 %v2164
        %v2166 = vpop.xlane.xlu0 %2165
        %v2167 = vadd.f32 %v1982, %v1984
        %2168 = vadd.xlane.f32.xlu0 %v2167
        %v2169 = vpop.xlane.xlu0 %2168
        %v2170 = vadd.f32 %v1986, %v1988
        %2171 = vadd.xlane.f32.xlu0 %v2170
        %v2172 = vpop.xlane.xlu0 %2171
        %v2173 = vadd.f32 %v1990, %v1992
        %2174 = vadd.xlane.f32.xlu0 %v2173
        %v2175 = vpop.xlane.xlu0 %2174
        %v2176 = vadd.f32 %v1994, %v1996
        %2177 = vadd.xlane.f32.xlu0 %v2176
        %v2178 = vpop.xlane.xlu0 %2177
        %v2179 = vadd.f32 %v1998, %v2000
        %2180 = vadd.xlane.f32.xlu0 %v2179
        %v2181 = vpop.xlane.xlu0 %2180
        %v2182 = vadd.f32 %v2002, %v2004
        %2183 = vadd.xlane.f32.xlu0 %v2182
        %v2184 = vpop.xlane.xlu0 %2183
        %v2185 = vadd.f32 %v2006, %v2008
        %2186 = vadd.xlane.f32.xlu0 %v2185
        %v2187 = vpop.xlane.xlu0 %2186
        %v2188 = vadd.f32 %v2010, %v2012
        %2189 = vadd.xlane.f32.xlu0 %v2188
        %v2190 = vpop.xlane.xlu0 %2189
        %v2191 = vadd.f32 %v2014, %v2016
        %2192 = vadd.xlane.f32.xlu0 %v2191
        %v2193 = vpop.xlane.xlu0 %2192
        %v2194 = vadd.f32 %v2018, %v2020
        %2195 = vadd.xlane.f32.xlu0 %v2194
        %v2196 = vpop.xlane.xlu0 %2195
        %v2197 = vadd.f32 %v2022, %v2024
        %2198 = vadd.xlane.f32.xlu0 %v2197
        %v2199 = vpop.xlane.xlu0 %2198
        %v2200 = vadd.f32 %v2026, %v2028
        %2201 = vadd.xlane.f32.xlu0 %v2200
        %v2202 = vpop.xlane.xlu0 %2201
        %v2203 = vadd.f32 %v2030, %v2032
        %2204 = vadd.xlane.f32.xlu0 %v2203
        %v2205 = vpop.xlane.xlu0 %2204
        %v2206 = vadd.f32 %v2034, %v2036
        %2207 = vadd.xlane.f32.xlu0 %v2206
        %v2208 = vpop.xlane.xlu0 %2207
        %v2209 = vadd.f32 %v2038, %v2040
        %2210 = vadd.xlane.f32.xlu0 %v2209
        %v2211 = vpop.xlane.xlu0 %2210
        %v2212 = vadd.f32 %v2042, %v2044
        %2213 = vadd.xlane.f32.xlu0 %v2212
        %v2214 = vpop.xlane.xlu0 %2213
        %v2215 = vadd.f32 %v2046, %v2048
        %2216 = vadd.xlane.f32.xlu0 %v2215
        %v2217 = vpop.xlane.xlu0 %2216
        %v2218 = vadd.f32 %v2050, %v2052
        %2219 = vadd.xlane.f32.xlu0 %v2218
        %v2220 = vpop.xlane.xlu0 %2219
        %v2221 = vadd.f32 %v2054, %v2056
        %2222 = vadd.xlane.f32.xlu0 %v2221
        %v2223 = vpop.xlane.xlu0 %2222
        %v2224 = vadd.f32 %v2058, %v2060
        %2225 = vadd.xlane.f32.xlu0 %v2224
        %v2226 = vpop.xlane.xlu0 %2225
        %v2227 = vadd.f32 %v2062, %v2064
        %2228 = vadd.xlane.f32.xlu0 %v2227
        %v2229 = vpop.xlane.xlu0 %2228
        %v2230 = vadd.f32 %v2066, %v2068
        %2231 = vadd.xlane.f32.xlu0 %v2230
        %v2232 = vpop.xlane.xlu0 %2231
        %v2233 = vadd.f32 %v2070, %v2072
        %2234 = vadd.xlane.f32.xlu0 %v2233
        %v2235 = vpop.xlane.xlu0 %2234
        %v2236 = vadd.f32 %v2074, %v2076
        %2237 = vadd.xlane.f32.xlu0 %v2236
        %v2238 = vpop.xlane.xlu0 %2237
        %v2239 = vadd.f32 %v2078, %v2080
        %2240 = vadd.xlane.f32.xlu0 %v2239
        %v2241 = vpop.xlane.xlu0 %2240
        %v2242 = vadd.f32 %v2082, %v2084
        %2243 = vadd.xlane.f32.xlu0 %v2242
        %v2244 = vpop.xlane.xlu0 %2243
        %v2245 = vadd.f32 %v2117, %v2151
        %v2246 = vadd.f32 %v2118, %v2154
        %v2247 = vadd.f32 %v2119, %v2157
        %v2248 = vadd.f32 %v2120, %v2160
        %v2249 = vadd.f32 %v2121, %v2163
        %v2250 = vadd.f32 %v2122, %v2166
        %v2251 = vadd.f32 %v2123, %v2169
        %v2252 = vadd.f32 %v2124, %v2172
        %v2253 = vadd.f32 %v2125, %v2175
        %v2254 = vadd.f32 %v2126, %v2178
        %v2255 = vadd.f32 %v2127, %v2181
        %v2256 = vadd.f32 %v2128, %v2184
        %v2257 = vadd.f32 %v2129, %v2187
        %v2258 = vadd.f32 %v2130, %v2190
        %v2259 = vadd.f32 %v2131, %v2193
        %v2260 = vadd.f32 %v2132, %v2196
        %v2261 = vadd.f32 %v2133, %v2199
        %v2262 = vadd.f32 %v2134, %v2202
        %v2263 = vadd.f32 %v2135, %v2205
        %v2264 = vadd.f32 %v2136, %v2208
        %v2265 = vadd.f32 %v2137, %v2211
        %v2266 = vadd.f32 %v2138, %v2214
        %v2267 = vadd.f32 %v2139, %v2217
        %v2268 = vadd.f32 %v2140, %v2220
        %v2269 = vadd.f32 %v2141, %v2223
        %v2270 = vadd.f32 %v2142, %v2226
        %v2271 = vadd.f32 %v2143, %v2229
        %v2272 = vadd.f32 %v2144, %v2232
        %v2273 = vadd.f32 %v2145, %v2235
        %v2274 = vadd.f32 %v2146, %v2238
        %v2275 = vadd.f32 %v2147, %v2241
        %v2276 = vadd.f32 %v2148, %v2244
        %vm2277 = vcmask 7168
        %2278 = vst.msk [vmem:[#allocation3] sm:$0xff] %vm2277, %v2245
        %2279 = vst.msk [vmem:[#allocation3 + $0x8] sm:$0xff] %vm2277, %v2246
        %2280 = vst.msk [vmem:[#allocation3 + $0x10] sm:$0xff] %vm2277, %v2247
        %2281 = vst.msk [vmem:[#allocation3 + $0x18] sm:$0xff] %vm2277, %v2248
        %2282 = vst.msk [vmem:[#allocation3 + $0x20] sm:$0xff] %vm2277, %v2249
        %2283 = vst.msk [vmem:[#allocation3 + $0x28] sm:$0xff] %vm2277, %v2250
        %2284 = vst.msk [vmem:[#allocation3 + $0x30] sm:$0xff] %vm2277, %v2251
        %2285 = vst.msk [vmem:[#allocation3 + $0x38] sm:$0xff] %vm2277, %v2252
        %2286 = vst.msk [vmem:[#allocation3 + $0x40] sm:$0xff] %vm2277, %v2253
        %2287 = vst.msk [vmem:[#allocation3 + $0x48] sm:$0xff] %vm2277, %v2254
        %2288 = vst.msk [vmem:[#allocation3 + $0x50] sm:$0xff] %vm2277, %v2255
        %2289 = vst.msk [vmem:[#allocation3 + $0x58] sm:$0xff] %vm2277, %v2256
        %2290 = vst.msk [vmem:[#allocation3 + $0x60] sm:$0xff] %vm2277, %v2257
        %2291 = vst.msk [vmem:[#allocation3 + $0x68] sm:$0xff] %vm2277, %v2258
        %2292 = vst.msk [vmem:[#allocation3 + $0x70] sm:$0xff] %vm2277, %v2259
        %2293 = vst.msk [vmem:[#allocation3 + $0x78] sm:$0xff] %vm2277, %v2260
        %2294 = vst.msk [vmem:[#allocation3 + $0x80] sm:$0xff] %vm2277, %v2261
        %2295 = vst.msk [vmem:[#allocation3 + $0x88] sm:$0xff] %vm2277, %v2262
        %2296 = vst.msk [vmem:[#allocation3 + $0x90] sm:$0xff] %vm2277, %v2263
        %2297 = vst.msk [vmem:[#allocation3 + $0x98] sm:$0xff] %vm2277, %v2264
        %2298 = vst.msk [vmem:[#allocation3 + $0xa0] sm:$0xff] %vm2277, %v2265
        %2299 = vst.msk [vmem:[#allocation3 + $0xa8] sm:$0xff] %vm2277, %v2266
        %2300 = vst.msk [vmem:[#allocation3 + $0xb0] sm:$0xff] %vm2277, %v2267
        %2301 = vst.msk [vmem:[#allocation3 + $0xb8] sm:$0xff] %vm2277, %v2268
        %2302 = vst.msk [vmem:[#allocation3 + $0xc0] sm:$0xff] %vm2277, %v2269
        %2303 = vst.msk [vmem:[#allocation3 + $0xc8] sm:$0xff] %vm2277, %v2270
        %2304 = vst.msk [vmem:[#allocation3 + $0xd0] sm:$0xff] %vm2277, %v2271
        %2305 = vst.msk [vmem:[#allocation3 + $0xd8] sm:$0xff] %vm2277, %v2272
        %2306 = vst.msk [vmem:[#allocation3 + $0xe0] sm:$0xff] %vm2277, %v2273
        %2307 = vst.msk [vmem:[#allocation3 + $0xe8] sm:$0xff] %vm2277, %v2274
        %2308 = vst.msk [vmem:[#allocation3 + $0xf0] sm:$0xff] %vm2277, %v2275
        %2309 = vst.msk [vmem:[#allocation3 + $0xf8] sm:$0xff] %vm2277, %v2276
        %v2310 = vld [vmem:[#allocation4] sm:$0xff]
        %v2311 = vld [vmem:[#allocation4 + $0x8] sm:$0xff]
        %v2312 = vld [vmem:[#allocation4 + $0x10] sm:$0xff]
        %v2313 = vld [vmem:[#allocation4 + $0x18] sm:$0xff]
        %v2314 = vld [vmem:[#allocation4 + $0x20] sm:$0xff]
        %v2315 = vld [vmem:[#allocation4 + $0x28] sm:$0xff]
        %v2316 = vld [vmem:[#allocation4 + $0x30] sm:$0xff]
        %v2317 = vld [vmem:[#allocation4 + $0x38] sm:$0xff]
        %v2318 = vld [vmem:[#allocation4 + $0x40] sm:$0xff]
        %v2319 = vld [vmem:[#allocation4 + $0x48] sm:$0xff]
        %v2320 = vld [vmem:[#allocation4 + $0x50] sm:$0xff]
        %v2321 = vld [vmem:[#allocation4 + $0x58] sm:$0xff]
        %v2322 = vld [vmem:[#allocation4 + $0x60] sm:$0xff]
        %v2323 = vld [vmem:[#allocation4 + $0x68] sm:$0xff]
        %v2324 = vld [vmem:[#allocation4 + $0x70] sm:$0xff]
        %v2325 = vld [vmem:[#allocation4 + $0x78] sm:$0xff]
        %v2326 = vld [vmem:[#allocation4 + $0x80] sm:$0xff]
        %v2327 = vld [vmem:[#allocation4 + $0x88] sm:$0xff]
        %v2328 = vld [vmem:[#allocation4 + $0x90] sm:$0xff]
        %v2329 = vld [vmem:[#allocation4 + $0x98] sm:$0xff]
        %v2330 = vld [vmem:[#allocation4 + $0xa0] sm:$0xff]
        %v2331 = vld [vmem:[#allocation4 + $0xa8] sm:$0xff]
        %v2332 = vld [vmem:[#allocation4 + $0xb0] sm:$0xff]
        %v2333 = vld [vmem:[#allocation4 + $0xb8] sm:$0xff]
        %v2334 = vld [vmem:[#allocation4 + $0xc0] sm:$0xff]
        %v2335 = vld [vmem:[#allocation4 + $0xc8] sm:$0xff]
        %v2336 = vld [vmem:[#allocation4 + $0xd0] sm:$0xff]
        %v2337 = vld [vmem:[#allocation4 + $0xd8] sm:$0xff]
        %v2338 = vld [vmem:[#allocation4 + $0xe0] sm:$0xff]
        %v2339 = vld [vmem:[#allocation4 + $0xe8] sm:$0xff]
        %v2340 = vld [vmem:[#allocation4 + $0xf0] sm:$0xff]
        %v2341 = vld [vmem:[#allocation4 + $0xf8] sm:$0xff]
        %2343 = vset.pattern.permute.xlu0 0
        %2344 = vperm.xlu0 %2343, %v1670
        %v2345 = vpop.permute.xlu0 %2344
        %2348 = vset.pattern.permute.xlu0 0
        %2349 = vperm.xlu0 %2348, %v1672
        %v2350 = vpop.permute.xlu0 %2349
        %2353 = vset.pattern.permute.xlu0 0
        %2354 = vperm.xlu0 %2353, %v1674
        %v2355 = vpop.permute.xlu0 %2354
        %2358 = vset.pattern.permute.xlu0 0
        %2359 = vperm.xlu0 %2358, %v1676
        %v2360 = vpop.permute.xlu0 %2359
        %2363 = vset.pattern.permute.xlu0 0
        %2364 = vperm.xlu0 %2363, %v1678
        %v2365 = vpop.permute.xlu0 %2364
        %2368 = vset.pattern.permute.xlu0 0
        %2369 = vperm.xlu0 %2368, %v1680
        %v2370 = vpop.permute.xlu0 %2369
        %2373 = vset.pattern.permute.xlu0 0
        %2374 = vperm.xlu0 %2373, %v1682
        %v2375 = vpop.permute.xlu0 %2374
        %2378 = vset.pattern.permute.xlu0 0
        %2379 = vperm.xlu0 %2378, %v1684
        %v2380 = vpop.permute.xlu0 %2379
        %2383 = vset.pattern.permute.xlu0 0
        %2384 = vperm.xlu0 %2383, %v1686
        %v2385 = vpop.permute.xlu0 %2384
        %2388 = vset.pattern.permute.xlu0 0
        %2389 = vperm.xlu0 %2388, %v1688
        %v2390 = vpop.permute.xlu0 %2389
        %2393 = vset.pattern.permute.xlu0 0
        %2394 = vperm.xlu0 %2393, %v1690
        %v2395 = vpop.permute.xlu0 %2394
        %2398 = vset.pattern.permute.xlu0 0
        %2399 = vperm.xlu0 %2398, %v1692
        %v2400 = vpop.permute.xlu0 %2399
        %2403 = vset.pattern.permute.xlu0 0
        %2404 = vperm.xlu0 %2403, %v1694
        %v2405 = vpop.permute.xlu0 %2404
        %2408 = vset.pattern.permute.xlu0 0
        %2409 = vperm.xlu0 %2408, %v1696
        %v2410 = vpop.permute.xlu0 %2409
        %2413 = vset.pattern.permute.xlu0 0
        %2414 = vperm.xlu0 %2413, %v1698
        %v2415 = vpop.permute.xlu0 %2414
        %2418 = vset.pattern.permute.xlu0 0
        %2419 = vperm.xlu0 %2418, %v1700
        %v2420 = vpop.permute.xlu0 %2419
        %2423 = vset.pattern.permute.xlu0 0
        %2424 = vperm.xlu0 %2423, %v1702
        %v2425 = vpop.permute.xlu0 %2424
        %2428 = vset.pattern.permute.xlu0 0
        %2429 = vperm.xlu0 %2428, %v1704
        %v2430 = vpop.permute.xlu0 %2429
        %2433 = vset.pattern.permute.xlu0 0
        %2434 = vperm.xlu0 %2433, %v1706
        %v2435 = vpop.permute.xlu0 %2434
        %2438 = vset.pattern.permute.xlu0 0
        %2439 = vperm.xlu0 %2438, %v1708
        %v2440 = vpop.permute.xlu0 %2439
        %2443 = vset.pattern.permute.xlu0 0
        %2444 = vperm.xlu0 %2443, %v1710
        %v2445 = vpop.permute.xlu0 %2444
        %2448 = vset.pattern.permute.xlu0 0
        %2449 = vperm.xlu0 %2448, %v1712
        %v2450 = vpop.permute.xlu0 %2449
        %2453 = vset.pattern.permute.xlu0 0
        %2454 = vperm.xlu0 %2453, %v1714
        %v2455 = vpop.permute.xlu0 %2454
        %2458 = vset.pattern.permute.xlu0 0
        %2459 = vperm.xlu0 %2458, %v1716
        %v2460 = vpop.permute.xlu0 %2459
        %2463 = vset.pattern.permute.xlu0 0
        %2464 = vperm.xlu0 %2463, %v1718
        %v2465 = vpop.permute.xlu0 %2464
        %2468 = vset.pattern.permute.xlu0 0
        %2469 = vperm.xlu0 %2468, %v1720
        %v2470 = vpop.permute.xlu0 %2469
        %2473 = vset.pattern.permute.xlu0 0
        %2474 = vperm.xlu0 %2473, %v1722
        %v2475 = vpop.permute.xlu0 %2474
        %2478 = vset.pattern.permute.xlu0 0
        %2479 = vperm.xlu0 %2478, %v1724
        %v2480 = vpop.permute.xlu0 %2479
        %2483 = vset.pattern.permute.xlu0 0
        %2484 = vperm.xlu0 %2483, %v1726
        %v2485 = vpop.permute.xlu0 %2484
        %2488 = vset.pattern.permute.xlu0 0
        %2489 = vperm.xlu0 %2488, %v1728
        %v2490 = vpop.permute.xlu0 %2489
        %2493 = vset.pattern.permute.xlu0 0
        %2494 = vperm.xlu0 %2493, %v1730
        %v2495 = vpop.permute.xlu0 %2494
        %2498 = vset.pattern.permute.xlu0 0
        %2499 = vperm.xlu0 %2498, %v1732
        %v2500 = vpop.permute.xlu0 %2499
        %v2502 = vmul.f32 %v2345, %v2310
        %v2503 = vmul.f32 %v2350, %v2311
        %v2504 = vmul.f32 %v2355, %v2312
        %v2505 = vmul.f32 %v2360, %v2313
        %v2506 = vmul.f32 %v2365, %v2314
        %v2507 = vmul.f32 %v2370, %v2315
        %v2508 = vmul.f32 %v2375, %v2316
        %v2509 = vmul.f32 %v2380, %v2317
        %v2510 = vmul.f32 %v2385, %v2318
        %v2511 = vmul.f32 %v2390, %v2319
        %v2512 = vmul.f32 %v2395, %v2320
        %v2513 = vmul.f32 %v2400, %v2321
        %v2514 = vmul.f32 %v2405, %v2322
        %v2515 = vmul.f32 %v2410, %v2323
        %v2516 = vmul.f32 %v2415, %v2324
        %v2517 = vmul.f32 %v2420, %v2325
        %v2518 = vmul.f32 %v2425, %v2326
        %v2519 = vmul.f32 %v2430, %v2327
        %v2520 = vmul.f32 %v2435, %v2328
        %v2521 = vmul.f32 %v2440, %v2329
        %v2522 = vmul.f32 %v2445, %v2330
        %v2523 = vmul.f32 %v2450, %v2331
        %v2524 = vmul.f32 %v2455, %v2332
        %v2525 = vmul.f32 %v2460, %v2333
        %v2526 = vmul.f32 %v2465, %v2334
        %v2527 = vmul.f32 %v2470, %v2335
        %v2528 = vmul.f32 %v2475, %v2336
        %v2529 = vmul.f32 %v2480, %v2337
        %v2530 = vmul.f32 %v2485, %v2338
        %v2531 = vmul.f32 %v2490, %v2339
        %v2532 = vmul.f32 %v2495, %v2340
        %v2533 = vmul.f32 %v2500, %v2341
        %2534 = vmatprep.subr.mxu0 0.0
        %2535 = vmatpush1.msra.mxu0 %v603
        %2536 = vmatprep.subr.mxu0 0.0
        %2537 = vmatpush1.msra.mxu0 %v604
        %2538 = vmatprep.subr.mxu0 0.0
        %2539 = vmatpush1.msra.mxu0 %v605
        %2540 = vmatprep.subr.mxu0 0.0
        %2541 = vmatpush1.msra.mxu0 %v606
        %2542 = vmatprep.subr.mxu0 0.0
        %2543 = vmatpush1.msra.mxu0 %v607
        %2544 = vmatprep.subr.mxu0 0.0
        %2545 = vmatpush1.msra.mxu0 %v608
        %2546 = vmatprep.subr.mxu0 0.0
        %2547 = vmatpush1.msra.mxu0 %v609
        %2548 = vmatprep.subr.mxu0 0.0
        %2549 = vmatpush1.msra.mxu0 %v610
        %2550 = vmatprep.subr.mxu0 0.0
        %2551 = vmatpush1.msra.mxu0 %v611
        %2552 = vmatprep.subr.mxu0 0.0
        %2553 = vmatpush1.msra.mxu0 %v612
        %2554 = vmatprep.subr.mxu0 0.0
        %2555 = vmatpush1.msra.mxu0 %v613
        %2556 = vmatprep.subr.mxu0 0.0
        %2557 = vmatpush1.msra.mxu0 %v614
        %2558 = vmatprep.subr.mxu0 0.0
        %2559 = vmatpush1.msra.mxu0 %v615
        %2560 = vmatprep.subr.mxu0 0.0
        %2561 = vmatpush1.msra.mxu0 %v616
        %2562 = vmatprep.subr.mxu0 0.0
        %2563 = vmatpush1.msra.mxu0 %v617
        %2564 = vmatprep.subr.mxu0 0.0
        %2565 = vmatpush1.msra.mxu0 %v618
        %2566 = vmatprep.subr.mxu0 0.0
        %2567 = vmatpush1.msra.mxu0 %v619
        %2568 = vmatprep.subr.mxu0 0.0
        %2569 = vmatpush1.msra.mxu0 %v620
        %2570 = vmatprep.subr.mxu0 0.0
        %2571 = vmatpush1.msra.mxu0 %v621
        %2572 = vmatprep.subr.mxu0 0.0
        %2573 = vmatpush1.msra.mxu0 %v622
        %2574 = vmatprep.subr.mxu0 0.0
        %2575 = vmatpush1.msra.mxu0 %v623
        %2576 = vmatprep.subr.mxu0 0.0
        %2577 = vmatpush1.msra.mxu0 %v624
        %2578 = vmatprep.subr.mxu0 0.0
        %2579 = vmatpush1.msra.mxu0 %v625
        %2580 = vmatprep.subr.mxu0 0.0
        %2581 = vmatpush1.msra.mxu0 %v626
        %2582 = vmatprep.subr.mxu0 0.0
        %2583 = vmatpush1.msra.mxu0 %v627
        %2584 = vmatprep.subr.mxu0 0.0
        %2585 = vmatpush1.msra.mxu0 %v628
        %2586 = vmatprep.subr.mxu0 0.0
        %2587 = vmatpush1.msra.mxu0 %v629
        %2588 = vmatprep.subr.mxu0 0.0
        %2589 = vmatpush1.msra.mxu0 %v630
        %2590 = vmatprep.subr.mxu0 0.0
        %2591 = vmatpush1.msra.mxu0 %v631
        %2592 = vmatprep.subr.mxu0 0.0
        %2593 = vmatpush1.msra.mxu0 %v632
        %2594 = vmatprep.subr.mxu0 0.0
        %2595 = vmatpush1.msra.mxu0 %v633
        %2596 = vmatprep.subr.mxu0 0.0
        %2597 = vmatpush1.msra.mxu0 %v634
        %2598 = vmatprep.mubr.f32.mxu0 %v1960
        %2599 = vmatmul.mubr.f32.gmra.mrb[0].mxu0 %v1958
        %v2600 = vpop.f32.mrb[0].mxu0
        %v2601 = vadd.f32 0.0, %v2600
        %v2602 = vpop.f32.mrb[0].mxu0
        %2603 = vmatprep.mubr.f32.mxu0 %v1964
        %2604 = vmatmul.mubr.f32.gmra.mrb[0].mxu0 %v1962
        %v2605 = vpop.f32.mrb[0].mxu0
        %v2606 = vadd.f32 0.0, %v2605
        %v2607 = vpop.f32.mrb[0].mxu0
        %2608 = vmatprep.mubr.f32.mxu0 %v1968
        %2609 = vmatmul.mubr.f32.gmra.mrb[0].mxu0 %v1966
        %v2610 = vpop.f32.mrb[0].mxu0
        %v2611 = vadd.f32 0.0, %v2610
        %v2612 = vpop.f32.mrb[0].mxu0
        %2613 = vmatprep.mubr.f32.mxu0 %v1972
        %2614 = vmatmul.mubr.f32.gmra.mrb[0].mxu0 %v1970
        %v2615 = vpop.f32.mrb[0].mxu0
        %v2616 = vadd.f32 0.0, %v2615
        %v2617 = vpop.f32.mrb[0].mxu0
        %2618 = vmatprep.mubr.f32.mxu0 %v1976
        %2619 = vmatmul.mubr.f32.gmra.mrb[0].mxu0 %v1974
        %v2620 = vpop.f32.mrb[0].mxu0
        %v2621 = vadd.f32 0.0, %v2620
        %v2622 = vpop.f32.mrb[0].mxu0
        %2623 = vmatprep.mubr.f32.mxu0 %v1980
        %2624 = vmatmul.mubr.f32.gmra.mrb[0].mxu0 %v1978
        %v2625 = vpop.f32.mrb[0].mxu0
        %v2626 = vadd.f32 0.0, %v2625
        %v2627 = vpop.f32.mrb[0].mxu0
        %2628 = vmatprep.mubr.f32.mxu0 %v1984
        %2629 = vmatmul.mubr.f32.gmra.mrb[0].mxu0 %v1982
        %v2630 = vpop.f32.mrb[0].mxu0
        %v2631 = vadd.f32 0.0, %v2630
        %v2632 = vpop.f32.mrb[0].mxu0
        %2633 = vmatprep.mubr.f32.mxu0 %v1988
        %2634 = vmatmul.mubr.f32.gmra.mrb[0].mxu0 %v1986
        %v2635 = vpop.f32.mrb[0].mxu0
        %v2636 = vadd.f32 0.0, %v2635
        %v2637 = vpop.f32.mrb[0].mxu0
        %2638 = vmatprep.mubr.f32.mxu0 %v1992
        %2639 = vmatmul.mubr.f32.gmra.mrb[0].mxu0 %v1990
        %v2640 = vpop.f32.mrb[0].mxu0
        %v2641 = vadd.f32 0.0, %v2640
        %v2642 = vpop.f32.mrb[0].mxu0
        %2643 = vmatprep.mubr.f32.mxu0 %v1996
        %2644 = vmatmul.mubr.f32.gmra.mrb[0].mxu0 %v1994
        %v2645 = vpop.f32.mrb[0].mxu0
        %v2646 = vadd.f32 0.0, %v2645
        %v2647 = vpop.f32.mrb[0].mxu0
        %2648 = vmatprep.mubr.f32.mxu0 %v2000
        %2649 = vmatmul.mubr.f32.gmra.mrb[0].mxu0 %v1998
        %v2650 = vpop.f32.mrb[0].mxu0
        %v2651 = vadd.f32 0.0, %v2650
        %v2652 = vpop.f32.mrb[0].mxu0
        %2653 = vmatprep.mubr.f32.mxu0 %v2004
        %2654 = vmatmul.mubr.f32.gmra.mrb[0].mxu0 %v2002
        %v2655 = vpop.f32.mrb[0].mxu0
        %v2656 = vadd.f32 0.0, %v2655
        %v2657 = vpop.f32.mrb[0].mxu0
        %2658 = vmatprep.mubr.f32.mxu0 %v2008
        %2659 = vmatmul.mubr.f32.gmra.mrb[0].mxu0 %v2006
        %v2660 = vpop.f32.mrb[0].mxu0
        %v2661 = vadd.f32 0.0, %v2660
        %v2662 = vpop.f32.mrb[0].mxu0
        %2663 = vmatprep.mubr.f32.mxu0 %v2012
        %2664 = vmatmul.mubr.f32.gmra.mrb[0].mxu0 %v2010
        %v2665 = vpop.f32.mrb[0].mxu0
        %v2666 = vadd.f32 0.0, %v2665
        %v2667 = vpop.f32.mrb[0].mxu0
        %2668 = vmatprep.mubr.f32.mxu0 %v2016
        %2669 = vmatmul.mubr.f32.gmra.mrb[0].mxu0 %v2014
        %v2670 = vpop.f32.mrb[0].mxu0
        %v2671 = vadd.f32 0.0, %v2670
        %v2672 = vpop.f32.mrb[0].mxu0
        %2673 = vmatprep.mubr.f32.mxu0 %v2020
        %2674 = vmatmul.mubr.f32.gmra.mrb[0].mxu0 %v2018
        %v2675 = vpop.f32.mrb[0].mxu0
        %v2676 = vadd.f32 0.0, %v2675
        %v2677 = vpop.f32.mrb[0].mxu0
        %2678 = vmatprep.mubr.f32.mxu0 %v2024
        %2679 = vmatmul.mubr.f32.gmra.mrb[0].mxu0 %v2022
        %v2680 = vpop.f32.mrb[0].mxu0
        %v2681 = vadd.f32 0.0, %v2680
        %v2682 = vpop.f32.mrb[0].mxu0
        %2683 = vmatprep.mubr.f32.mxu0 %v2028
        %2684 = vmatmul.mubr.f32.gmra.mrb[0].mxu0 %v2026
        %v2685 = vpop.f32.mrb[0].mxu0
        %v2686 = vadd.f32 0.0, %v2685
        %v2687 = vpop.f32.mrb[0].mxu0
        %2688 = vmatprep.mubr.f32.mxu0 %v2032
        %2689 = vmatmul.mubr.f32.gmra.mrb[0].mxu0 %v2030
        %v2690 = vpop.f32.mrb[0].mxu0
        %v2691 = vadd.f32 0.0, %v2690
        %v2692 = vpop.f32.mrb[0].mxu0
        %2693 = vmatprep.mubr.f32.mxu0 %v2036
        %2694 = vmatmul.mubr.f32.gmra.mrb[0].mxu0 %v2034
        %v2695 = vpop.f32.mrb[0].mxu0
        %v2696 = vadd.f32 0.0, %v2695
        %v2697 = vpop.f32.mrb[0].mxu0
        %2698 = vmatprep.mubr.f32.mxu0 %v2040
        %2699 = vmatmul.mubr.f32.gmra.mrb[0].mxu0 %v2038
        %v2700 = vpop.f32.mrb[0].mxu0
        %v2701 = vadd.f32 0.0, %v2700
        %v2702 = vpop.f32.mrb[0].mxu0
        %2703 = vmatprep.mubr.f32.mxu0 %v2044
        %2704 = vmatmul.mubr.f32.gmra.mrb[0].mxu0 %v2042
        %v2705 = vpop.f32.mrb[0].mxu0
        %v2706 = vadd.f32 0.0, %v2705
        %v2707 = vpop.f32.mrb[0].mxu0
        %2708 = vmatprep.mubr.f32.mxu0 %v2048
        %2709 = vmatmul.mubr.f32.gmra.mrb[0].mxu0 %v2046
        %v2710 = vpop.f32.mrb[0].mxu0
        %v2711 = vadd.f32 0.0, %v2710
        %v2712 = vpop.f32.mrb[0].mxu0
        %2713 = vmatprep.mubr.f32.mxu0 %v2052
        %2714 = vmatmul.mubr.f32.gmra.mrb[0].mxu0 %v2050
        %v2715 = vpop.f32.mrb[0].mxu0
        %v2716 = vadd.f32 0.0, %v2715
        %v2717 = vpop.f32.mrb[0].mxu0
        %2718 = vmatprep.mubr.f32.mxu0 %v2056
        %2719 = vmatmul.mubr.f32.gmra.mrb[0].mxu0 %v2054
        %v2720 = vpop.f32.mrb[0].mxu0
        %v2721 = vadd.f32 0.0, %v2720
        %v2722 = vpop.f32.mrb[0].mxu0
        %2723 = vmatprep.mubr.f32.mxu0 %v2060
        %2724 = vmatmul.mubr.f32.gmra.mrb[0].mxu0 %v2058
        %v2725 = vpop.f32.mrb[0].mxu0
        %v2726 = vadd.f32 0.0, %v2725
        %v2727 = vpop.f32.mrb[0].mxu0
        %2728 = vmatprep.mubr.f32.mxu0 %v2064
        %2729 = vmatmul.mubr.f32.gmra.mrb[0].mxu0 %v2062
        %v2730 = vpop.f32.mrb[0].mxu0
        %v2731 = vadd.f32 0.0, %v2730
        %v2732 = vpop.f32.mrb[0].mxu0
        %2733 = vmatprep.mubr.f32.mxu0 %v2068
        %2734 = vmatmul.mubr.f32.gmra.mrb[0].mxu0 %v2066
        %v2735 = vpop.f32.mrb[0].mxu0
        %v2736 = vadd.f32 0.0, %v2735
        %v2737 = vpop.f32.mrb[0].mxu0
        %2738 = vmatprep.mubr.f32.mxu0 %v2072
        %2739 = vmatmul.mubr.f32.gmra.mrb[0].mxu0 %v2070
        %v2740 = vpop.f32.mrb[0].mxu0
        %v2741 = vadd.f32 0.0, %v2740
        %v2742 = vpop.f32.mrb[0].mxu0
        %2743 = vmatprep.mubr.f32.mxu0 %v2076
        %2744 = vmatmul.mubr.f32.gmra.mrb[0].mxu0 %v2074
        %v2745 = vpop.f32.mrb[0].mxu0
        %v2746 = vadd.f32 0.0, %v2745
        %v2747 = vpop.f32.mrb[0].mxu0
        %2748 = vmatprep.mubr.f32.mxu0 %v2080
        %2749 = vmatmul.mubr.f32.gmra.mrb[0].mxu0 %v2078
        %v2750 = vpop.f32.mrb[0].mxu0
        %v2751 = vadd.f32 0.0, %v2750
        %v2752 = vpop.f32.mrb[0].mxu0
        %2753 = vmatprep.mubr.f32.mxu0 %v2084
        %2754 = vmatmul.mubr.f32.gmra.mrb[0].mxu0 %v2082
        %v2755 = vpop.f32.mrb[0].mxu0
        %v2756 = vadd.f32 0.0, %v2755
        %v2757 = vpop.f32.mrb[0].mxu0
        %2758 = vdwg.mxu0
        %v2759 = vadd.f32 %v2502, %v2601
        %v2760 = vadd.f32 %v2503, %v2606
        %v2761 = vadd.f32 %v2504, %v2611
        %v2762 = vadd.f32 %v2505, %v2616
        %v2763 = vadd.f32 %v2506, %v2621
        %v2764 = vadd.f32 %v2507, %v2626
        %v2765 = vadd.f32 %v2508, %v2631
        %v2766 = vadd.f32 %v2509, %v2636
        %v2767 = vadd.f32 %v2510, %v2641
        %v2768 = vadd.f32 %v2511, %v2646
        %v2769 = vadd.f32 %v2512, %v2651
        %v2770 = vadd.f32 %v2513, %v2656
        %v2771 = vadd.f32 %v2514, %v2661
        %v2772 = vadd.f32 %v2515, %v2666
        %v2773 = vadd.f32 %v2516, %v2671
        %v2774 = vadd.f32 %v2517, %v2676
        %v2775 = vadd.f32 %v2518, %v2681
        %v2776 = vadd.f32 %v2519, %v2686
        %v2777 = vadd.f32 %v2520, %v2691
        %v2778 = vadd.f32 %v2521, %v2696
        %v2779 = vadd.f32 %v2522, %v2701
        %v2780 = vadd.f32 %v2523, %v2706
        %v2781 = vadd.f32 %v2524, %v2711
        %v2782 = vadd.f32 %v2525, %v2716
        %v2783 = vadd.f32 %v2526, %v2721
        %v2784 = vadd.f32 %v2527, %v2726
        %v2785 = vadd.f32 %v2528, %v2731
        %v2786 = vadd.f32 %v2529, %v2736
        %v2787 = vadd.f32 %v2530, %v2741
        %v2788 = vadd.f32 %v2531, %v2746
        %v2789 = vadd.f32 %v2532, %v2751
        %v2790 = vadd.f32 %v2533, %v2756
        %2791 = vst.msk [vmem:[#allocation4] sm:$0xff] %vm635, %v2759
        %2792 = vst.msk [vmem:[#allocation4 + $0x8] sm:$0xff] %vm635, %v2760
        %2793 = vst.msk [vmem:[#allocation4 + $0x10] sm:$0xff] %vm635, %v2761
        %2794 = vst.msk [vmem:[#allocation4 + $0x18] sm:$0xff] %vm635, %v2762
        %2795 = vst.msk [vmem:[#allocation4 + $0x20] sm:$0xff] %vm635, %v2763
        %2796 = vst.msk [vmem:[#allocation4 + $0x28] sm:$0xff] %vm635, %v2764
        %2797 = vst.msk [vmem:[#allocation4 + $0x30] sm:$0xff] %vm635, %v2765
        %2798 = vst.msk [vmem:[#allocation4 + $0x38] sm:$0xff] %vm635, %v2766
        %2799 = vst.msk [vmem:[#allocation4 + $0x40] sm:$0xff] %vm635, %v2767
        %2800 = vst.msk [vmem:[#allocation4 + $0x48] sm:$0xff] %vm635, %v2768
        %2801 = vst.msk [vmem:[#allocation4 + $0x50] sm:$0xff] %vm635, %v2769
        %2802 = vst.msk [vmem:[#allocation4 + $0x58] sm:$0xff] %vm635, %v2770
        %2803 = vst.msk [vmem:[#allocation4 + $0x60] sm:$0xff] %vm635, %v2771
        %2804 = vst.msk [vmem:[#allocation4 + $0x68] sm:$0xff] %vm635, %v2772
        %2805 = vst.msk [vmem:[#allocation4 + $0x70] sm:$0xff] %vm635, %v2773
        %2806 = vst.msk [vmem:[#allocation4 + $0x78] sm:$0xff] %vm635, %v2774
        %2807 = vst.msk [vmem:[#allocation4 + $0x80] sm:$0xff] %vm635, %v2775
        %2808 = vst.msk [vmem:[#allocation4 + $0x88] sm:$0xff] %vm635, %v2776
        %2809 = vst.msk [vmem:[#allocation4 + $0x90] sm:$0xff] %vm635, %v2777
        %2810 = vst.msk [vmem:[#allocation4 + $0x98] sm:$0xff] %vm635, %v2778
        %2811 = vst.msk [vmem:[#allocation4 + $0xa0] sm:$0xff] %vm635, %v2779
        %2812 = vst.msk [vmem:[#allocation4 + $0xa8] sm:$0xff] %vm635, %v2780
        %2813 = vst.msk [vmem:[#allocation4 + $0xb0] sm:$0xff] %vm635, %v2781
        %2814 = vst.msk [vmem:[#allocation4 + $0xb8] sm:$0xff] %vm635, %v2782
        %2815 = vst.msk [vmem:[#allocation4 + $0xc0] sm:$0xff] %vm635, %v2783
        %2816 = vst.msk [vmem:[#allocation4 + $0xc8] sm:$0xff] %vm635, %v2784
        %2817 = vst.msk [vmem:[#allocation4 + $0xd0] sm:$0xff] %vm635, %v2785
        %2818 = vst.msk [vmem:[#allocation4 + $0xd8] sm:$0xff] %vm635, %v2786
        %2819 = vst.msk [vmem:[#allocation4 + $0xe0] sm:$0xff] %vm635, %v2787
        %2820 = vst.msk [vmem:[#allocation4 + $0xe8] sm:$0xff] %vm635, %v2788
        %2821 = vst.msk [vmem:[#allocation4 + $0xf0] sm:$0xff] %vm635, %v2789
        %2822 = vst.msk [vmem:[#allocation4 + $0xf8] sm:$0xff] %vm635, %v2790
        %2823 = vst.msk [vmem:[#allocation2] sm:$0xff] %vm2277, %v1605
        %2824 = vst.msk [vmem:[#allocation2 + $0x8] sm:$0xff] %vm2277, %v1606
        %2825 = vst.msk [vmem:[#allocation2 + $0x10] sm:$0xff] %vm2277, %v1607
        %2826 = vst.msk [vmem:[#allocation2 + $0x18] sm:$0xff] %vm2277, %v1608
        %2827 = vst.msk [vmem:[#allocation2 + $0x20] sm:$0xff] %vm2277, %v1609
        %2828 = vst.msk [vmem:[#allocation2 + $0x28] sm:$0xff] %vm2277, %v1610
        %2829 = vst.msk [vmem:[#allocation2 + $0x30] sm:$0xff] %vm2277, %v1611
        %2830 = vst.msk [vmem:[#allocation2 + $0x38] sm:$0xff] %vm2277, %v1612
        %2831 = vst.msk [vmem:[#allocation2 + $0x40] sm:$0xff] %vm2277, %v1613
        %2832 = vst.msk [vmem:[#allocation2 + $0x48] sm:$0xff] %vm2277, %v1614
        %2833 = vst.msk [vmem:[#allocation2 + $0x50] sm:$0xff] %vm2277, %v1615
        %2834 = vst.msk [vmem:[#allocation2 + $0x58] sm:$0xff] %vm2277, %v1616
        %2835 = vst.msk [vmem:[#allocation2 + $0x60] sm:$0xff] %vm2277, %v1617
        %2836 = vst.msk [vmem:[#allocation2 + $0x68] sm:$0xff] %vm2277, %v1618
        %2837 = vst.msk [vmem:[#allocation2 + $0x70] sm:$0xff] %vm2277, %v1619
        %2838 = vst.msk [vmem:[#allocation2 + $0x78] sm:$0xff] %vm2277, %v1620
        %2839 = vst.msk [vmem:[#allocation2 + $0x80] sm:$0xff] %vm2277, %v1621
        %2840 = vst.msk [vmem:[#allocation2 + $0x88] sm:$0xff] %vm2277, %v1622
        %2841 = vst.msk [vmem:[#allocation2 + $0x90] sm:$0xff] %vm2277, %v1623
        %2842 = vst.msk [vmem:[#allocation2 + $0x98] sm:$0xff] %vm2277, %v1624
        %2843 = vst.msk [vmem:[#allocation2 + $0xa0] sm:$0xff] %vm2277, %v1625
        %2844 = vst.msk [vmem:[#allocation2 + $0xa8] sm:$0xff] %vm2277, %v1626
        %2845 = vst.msk [vmem:[#allocation2 + $0xb0] sm:$0xff] %vm2277, %v1627
        %2846 = vst.msk [vmem:[#allocation2 + $0xb8] sm:$0xff] %vm2277, %v1628
        %2847 = vst.msk [vmem:[#allocation2 + $0xc0] sm:$0xff] %vm2277, %v1629
        %2848 = vst.msk [vmem:[#allocation2 + $0xc8] sm:$0xff] %vm2277, %v1630
        %2849 = vst.msk [vmem:[#allocation2 + $0xd0] sm:$0xff] %vm2277, %v1631
        %2850 = vst.msk [vmem:[#allocation2 + $0xd8] sm:$0xff] %vm2277, %v1632
        %2851 = vst.msk [vmem:[#allocation2 + $0xe0] sm:$0xff] %vm2277, %v1633
        %2852 = vst.msk [vmem:[#allocation2 + $0xe8] sm:$0xff] %vm2277, %v1634
        %2853 = vst.msk [vmem:[#allocation2 + $0xf0] sm:$0xff] %vm2277, %v1635
        %2854 = vst.msk [vmem:[#allocation2 + $0xf8] sm:$0xff] %vm2277, %v1636
      $region44: #{tpu_custom_call.1} parent=35 // pred_fallthru
        _
      // Predicated region
      $region45: #{tpu_custom_call.1} parent=35 // pred_check
        %p2855 = pneg %p430
      $region46: #{tpu_custom_call.1} parent=35 // pred_check_branch
        %2857 = sbr.rel (%p2855) target = $region48
      $region47: #{tpu_custom_call.1} parent=35 // pred_region
        %v2858 = vld [vmem:[#allocation3] sm:$0xff]
        %v2859 = vld [vmem:[#allocation3 + $0x8] sm:$0xff]
        %v2860 = vld [vmem:[#allocation3 + $0x10] sm:$0xff]
        %v2861 = vld [vmem:[#allocation3 + $0x18] sm:$0xff]
        %v2862 = vld [vmem:[#allocation3 + $0x20] sm:$0xff]
        %v2863 = vld [vmem:[#allocation3 + $0x28] sm:$0xff]
        %v2864 = vld [vmem:[#allocation3 + $0x30] sm:$0xff]
        %v2865 = vld [vmem:[#allocation3 + $0x38] sm:$0xff]
        %v2866 = vld [vmem:[#allocation3 + $0x40] sm:$0xff]
        %v2867 = vld [vmem:[#allocation3 + $0x48] sm:$0xff]
        %v2868 = vld [vmem:[#allocation3 + $0x50] sm:$0xff]
        %v2869 = vld [vmem:[#allocation3 + $0x58] sm:$0xff]
        %v2870 = vld [vmem:[#allocation3 + $0x60] sm:$0xff]
        %v2871 = vld [vmem:[#allocation3 + $0x68] sm:$0xff]
        %v2872 = vld [vmem:[#allocation3 + $0x70] sm:$0xff]
        %v2873 = vld [vmem:[#allocation3 + $0x78] sm:$0xff]
        %v2874 = vld [vmem:[#allocation3 + $0x80] sm:$0xff]
        %v2875 = vld [vmem:[#allocation3 + $0x88] sm:$0xff]
        %v2876 = vld [vmem:[#allocation3 + $0x90] sm:$0xff]
        %v2877 = vld [vmem:[#allocation3 + $0x98] sm:$0xff]
        %v2878 = vld [vmem:[#allocation3 + $0xa0] sm:$0xff]
        %v2879 = vld [vmem:[#allocation3 + $0xa8] sm:$0xff]
        %v2880 = vld [vmem:[#allocation3 + $0xb0] sm:$0xff]
        %v2881 = vld [vmem:[#allocation3 + $0xb8] sm:$0xff]
        %v2882 = vld [vmem:[#allocation3 + $0xc0] sm:$0xff]
        %v2883 = vld [vmem:[#allocation3 + $0xc8] sm:$0xff]
        %v2884 = vld [vmem:[#allocation3 + $0xd0] sm:$0xff]
        %v2885 = vld [vmem:[#allocation3 + $0xd8] sm:$0xff]
        %v2886 = vld [vmem:[#allocation3 + $0xe0] sm:$0xff]
        %v2887 = vld [vmem:[#allocation3 + $0xe8] sm:$0xff]
        %v2888 = vld [vmem:[#allocation3 + $0xf0] sm:$0xff]
        %v2889 = vld [vmem:[#allocation3 + $0xf8] sm:$0xff]
        %v2890 = vrcp.pop %v2858
        %v2891 = vrcp.pop %v2859
        %v2892 = vrcp.pop %v2860
        %v2893 = vrcp.pop %v2861
        %v2894 = vrcp.pop %v2862
        %v2895 = vrcp.pop %v2863
        %v2896 = vrcp.pop %v2864
        %v2897 = vrcp.pop %v2865
        %v2898 = vrcp.pop %v2866
        %v2899 = vrcp.pop %v2867
        %v2900 = vrcp.pop %v2868
        %v2901 = vrcp.pop %v2869
        %v2902 = vrcp.pop %v2870
        %v2903 = vrcp.pop %v2871
        %v2904 = vrcp.pop %v2872
        %v2905 = vrcp.pop %v2873
        %v2906 = vrcp.pop %v2874
        %v2907 = vrcp.pop %v2875
        %v2908 = vrcp.pop %v2876
        %v2909 = vrcp.pop %v2877
        %v2910 = vrcp.pop %v2878
        %v2911 = vrcp.pop %v2879
        %v2912 = vrcp.pop %v2880
        %v2913 = vrcp.pop %v2881
        %v2914 = vrcp.pop %v2882
        %v2915 = vrcp.pop %v2883
        %v2916 = vrcp.pop %v2884
        %v2917 = vrcp.pop %v2885
        %v2918 = vrcp.pop %v2886
        %v2919 = vrcp.pop %v2887
        %v2920 = vrcp.pop %v2888
        %v2921 = vrcp.pop %v2889
        %v2922 = vld [vmem:[#allocation4] sm:$0xff]
        %v2923 = vld [vmem:[#allocation4 + $0x8] sm:$0xff]
        %v2924 = vld [vmem:[#allocation4 + $0x10] sm:$0xff]
        %v2925 = vld [vmem:[#allocation4 + $0x18] sm:$0xff]
        %v2926 = vld [vmem:[#allocation4 + $0x20] sm:$0xff]
        %v2927 = vld [vmem:[#allocation4 + $0x28] sm:$0xff]
        %v2928 = vld [vmem:[#allocation4 + $0x30] sm:$0xff]
        %v2929 = vld [vmem:[#allocation4 + $0x38] sm:$0xff]
        %v2930 = vld [vmem:[#allocation4 + $0x40] sm:$0xff]
        %v2931 = vld [vmem:[#allocation4 + $0x48] sm:$0xff]
        %v2932 = vld [vmem:[#allocation4 + $0x50] sm:$0xff]
        %v2933 = vld [vmem:[#allocation4 + $0x58] sm:$0xff]
        %v2934 = vld [vmem:[#allocation4 + $0x60] sm:$0xff]
        %v2935 = vld [vmem:[#allocation4 + $0x68] sm:$0xff]
        %v2936 = vld [vmem:[#allocation4 + $0x70] sm:$0xff]
        %v2937 = vld [vmem:[#allocation4 + $0x78] sm:$0xff]
        %v2938 = vld [vmem:[#allocation4 + $0x80] sm:$0xff]
        %v2939 = vld [vmem:[#allocation4 + $0x88] sm:$0xff]
        %v2940 = vld [vmem:[#allocation4 + $0x90] sm:$0xff]
        %v2941 = vld [vmem:[#allocation4 + $0x98] sm:$0xff]
        %v2942 = vld [vmem:[#allocation4 + $0xa0] sm:$0xff]
        %v2943 = vld [vmem:[#allocation4 + $0xa8] sm:$0xff]
        %v2944 = vld [vmem:[#allocation4 + $0xb0] sm:$0xff]
        %v2945 = vld [vmem:[#allocation4 + $0xb8] sm:$0xff]
        %v2946 = vld [vmem:[#allocation4 + $0xc0] sm:$0xff]
        %v2947 = vld [vmem:[#allocation4 + $0xc8] sm:$0xff]
        %v2948 = vld [vmem:[#allocation4 + $0xd0] sm:$0xff]
        %v2949 = vld [vmem:[#allocation4 + $0xd8] sm:$0xff]
        %v2950 = vld [vmem:[#allocation4 + $0xe0] sm:$0xff]
        %v2951 = vld [vmem:[#allocation4 + $0xe8] sm:$0xff]
        %v2952 = vld [vmem:[#allocation4 + $0xf0] sm:$0xff]
        %v2953 = vld [vmem:[#allocation4 + $0xf8] sm:$0xff]
        %2955 = vset.pattern.permute.xlu0 0
        %2956 = vperm.xlu0 %2955, %v2890
        %v2957 = vpop.permute.xlu0 %2956
        %2960 = vset.pattern.permute.xlu0 0
        %2961 = vperm.xlu0 %2960, %v2891
        %v2962 = vpop.permute.xlu0 %2961
        %2965 = vset.pattern.permute.xlu0 0
        %2966 = vperm.xlu0 %2965, %v2892
        %v2967 = vpop.permute.xlu0 %2966
        %2970 = vset.pattern.permute.xlu0 0
        %2971 = vperm.xlu0 %2970, %v2893
        %v2972 = vpop.permute.xlu0 %2971
        %2975 = vset.pattern.permute.xlu0 0
        %2976 = vperm.xlu0 %2975, %v2894
        %v2977 = vpop.permute.xlu0 %2976
        %2980 = vset.pattern.permute.xlu0 0
        %2981 = vperm.xlu0 %2980, %v2895
        %v2982 = vpop.permute.xlu0 %2981
        %2985 = vset.pattern.permute.xlu0 0
        %2986 = vperm.xlu0 %2985, %v2896
        %v2987 = vpop.permute.xlu0 %2986
        %2990 = vset.pattern.permute.xlu0 0
        %2991 = vperm.xlu0 %2990, %v2897
        %v2992 = vpop.permute.xlu0 %2991
        %2995 = vset.pattern.permute.xlu0 0
        %2996 = vperm.xlu0 %2995, %v2898
        %v2997 = vpop.permute.xlu0 %2996
        %3000 = vset.pattern.permute.xlu0 0
        %3001 = vperm.xlu0 %3000, %v2899
        %v3002 = vpop.permute.xlu0 %3001
        %3005 = vset.pattern.permute.xlu0 0
        %3006 = vperm.xlu0 %3005, %v2900
        %v3007 = vpop.permute.xlu0 %3006
        %3010 = vset.pattern.permute.xlu0 0
        %3011 = vperm.xlu0 %3010, %v2901
        %v3012 = vpop.permute.xlu0 %3011
        %3015 = vset.pattern.permute.xlu0 0
        %3016 = vperm.xlu0 %3015, %v2902
        %v3017 = vpop.permute.xlu0 %3016
        %3020 = vset.pattern.permute.xlu0 0
        %3021 = vperm.xlu0 %3020, %v2903
        %v3022 = vpop.permute.xlu0 %3021
        %3025 = vset.pattern.permute.xlu0 0
        %3026 = vperm.xlu0 %3025, %v2904
        %v3027 = vpop.permute.xlu0 %3026
        %3030 = vset.pattern.permute.xlu0 0
        %3031 = vperm.xlu0 %3030, %v2905
        %v3032 = vpop.permute.xlu0 %3031
        %3035 = vset.pattern.permute.xlu0 0
        %3036 = vperm.xlu0 %3035, %v2906
        %v3037 = vpop.permute.xlu0 %3036
        %3040 = vset.pattern.permute.xlu0 0
        %3041 = vperm.xlu0 %3040, %v2907
        %v3042 = vpop.permute.xlu0 %3041
        %3045 = vset.pattern.permute.xlu0 0
        %3046 = vperm.xlu0 %3045, %v2908
        %v3047 = vpop.permute.xlu0 %3046
        %3050 = vset.pattern.permute.xlu0 0
        %3051 = vperm.xlu0 %3050, %v2909
        %v3052 = vpop.permute.xlu0 %3051
        %3055 = vset.pattern.permute.xlu0 0
        %3056 = vperm.xlu0 %3055, %v2910
        %v3057 = vpop.permute.xlu0 %3056
        %3060 = vset.pattern.permute.xlu0 0
        %3061 = vperm.xlu0 %3060, %v2911
        %v3062 = vpop.permute.xlu0 %3061
        %3065 = vset.pattern.permute.xlu0 0
        %3066 = vperm.xlu0 %3065, %v2912
        %v3067 = vpop.permute.xlu0 %3066
        %3070 = vset.pattern.permute.xlu0 0
        %3071 = vperm.xlu0 %3070, %v2913
        %v3072 = vpop.permute.xlu0 %3071
        %3075 = vset.pattern.permute.xlu0 0
        %3076 = vperm.xlu0 %3075, %v2914
        %v3077 = vpop.permute.xlu0 %3076
        %3080 = vset.pattern.permute.xlu0 0
        %3081 = vperm.xlu0 %3080, %v2915
        %v3082 = vpop.permute.xlu0 %3081
        %3085 = vset.pattern.permute.xlu0 0
        %3086 = vperm.xlu0 %3085, %v2916
        %v3087 = vpop.permute.xlu0 %3086
        %3090 = vset.pattern.permute.xlu0 0
        %3091 = vperm.xlu0 %3090, %v2917
        %v3092 = vpop.permute.xlu0 %3091
        %3095 = vset.pattern.permute.xlu0 0
        %3096 = vperm.xlu0 %3095, %v2918
        %v3097 = vpop.permute.xlu0 %3096
        %3100 = vset.pattern.permute.xlu0 0
        %3101 = vperm.xlu0 %3100, %v2919
        %v3102 = vpop.permute.xlu0 %3101
        %3105 = vset.pattern.permute.xlu0 0
        %3106 = vperm.xlu0 %3105, %v2920
        %v3107 = vpop.permute.xlu0 %3106
        %3110 = vset.pattern.permute.xlu0 0
        %3111 = vperm.xlu0 %3110, %v2921
        %v3112 = vpop.permute.xlu0 %3111
        %v3114 = vmul.f32 %v2922, %v2957
        %v3115 = vmul.f32 %v2923, %v2962
        %v3116 = vmul.f32 %v2924, %v2967
        %v3117 = vmul.f32 %v2925, %v2972
        %v3118 = vmul.f32 %v2926, %v2977
        %v3119 = vmul.f32 %v2927, %v2982
        %v3120 = vmul.f32 %v2928, %v2987
        %v3121 = vmul.f32 %v2929, %v2992
        %v3122 = vmul.f32 %v2930, %v2997
        %v3123 = vmul.f32 %v2931, %v3002
        %v3124 = vmul.f32 %v2932, %v3007
        %v3125 = vmul.f32 %v2933, %v3012
        %v3126 = vmul.f32 %v2934, %v3017
        %v3127 = vmul.f32 %v2935, %v3022
        %v3128 = vmul.f32 %v2936, %v3027
        %v3129 = vmul.f32 %v2937, %v3032
        %v3130 = vmul.f32 %v2938, %v3037
        %v3131 = vmul.f32 %v2939, %v3042
        %v3132 = vmul.f32 %v2940, %v3047
        %v3133 = vmul.f32 %v2941, %v3052
        %v3134 = vmul.f32 %v2942, %v3057
        %v3135 = vmul.f32 %v2943, %v3062
        %v3136 = vmul.f32 %v2944, %v3067
        %v3137 = vmul.f32 %v2945, %v3072
        %v3138 = vmul.f32 %v2946, %v3077
        %v3139 = vmul.f32 %v2947, %v3082
        %v3140 = vmul.f32 %v2948, %v3087
        %v3141 = vmul.f32 %v2949, %v3092
        %v3142 = vmul.f32 %v2950, %v3097
        %v3143 = vmul.f32 %v2951, %v3102
        %v3144 = vmul.f32 %v2952, %v3107
        %v3145 = vmul.f32 %v2953, %v3112
        %vm3146 = vcmask 523264
        %3147 = vst.msk [vmem:[%s428] sm:$0xff] %vm3146, %v3114
        %3148 = vst.msk [vmem:[%s428 + $0x8] sm:$0xff] %vm3146, %v3115
        %3149 = vst.msk [vmem:[%s428 + $0x10] sm:$0xff] %vm3146, %v3116
        %3150 = vst.msk [vmem:[%s428 + $0x18] sm:$0xff] %vm3146, %v3117
        %3151 = vst.msk [vmem:[%s428 + $0x20] sm:$0xff] %vm3146, %v3118
        %3152 = vst.msk [vmem:[%s428 + $0x28] sm:$0xff] %vm3146, %v3119
        %3153 = vst.msk [vmem:[%s428 + $0x30] sm:$0xff] %vm3146, %v3120
        %3154 = vst.msk [vmem:[%s428 + $0x38] sm:$0xff] %vm3146, %v3121
        %3155 = vst.msk [vmem:[%s428 + $0x40] sm:$0xff] %vm3146, %v3122
        %3156 = vst.msk [vmem:[%s428 + $0x48] sm:$0xff] %vm3146, %v3123
        %3157 = vst.msk [vmem:[%s428 + $0x50] sm:$0xff] %vm3146, %v3124
        %3158 = vst.msk [vmem:[%s428 + $0x58] sm:$0xff] %vm3146, %v3125
        %3159 = vst.msk [vmem:[%s428 + $0x60] sm:$0xff] %vm3146, %v3126
        %3160 = vst.msk [vmem:[%s428 + $0x68] sm:$0xff] %vm3146, %v3127
        %3161 = vst.msk [vmem:[%s428 + $0x70] sm:$0xff] %vm3146, %v3128
        %3162 = vst.msk [vmem:[%s428 + $0x78] sm:$0xff] %vm3146, %v3129
        %3163 = vst.msk [vmem:[%s428 + $0x80] sm:$0xff] %vm3146, %v3130
        %3164 = vst.msk [vmem:[%s428 + $0x88] sm:$0xff] %vm3146, %v3131
        %3165 = vst.msk [vmem:[%s428 + $0x90] sm:$0xff] %vm3146, %v3132
        %3166 = vst.msk [vmem:[%s428 + $0x98] sm:$0xff] %vm3146, %v3133
        %3167 = vst.msk [vmem:[%s428 + $0xa0] sm:$0xff] %vm3146, %v3134
        %3168 = vst.msk [vmem:[%s428 + $0xa8] sm:$0xff] %vm3146, %v3135
        %3169 = vst.msk [vmem:[%s428 + $0xb0] sm:$0xff] %vm3146, %v3136
        %3170 = vst.msk [vmem:[%s428 + $0xb8] sm:$0xff] %vm3146, %v3137
        %3171 = vst.msk [vmem:[%s428 + $0xc0] sm:$0xff] %vm3146, %v3138
        %3172 = vst.msk [vmem:[%s428 + $0xc8] sm:$0xff] %vm3146, %v3139
        %3173 = vst.msk [vmem:[%s428 + $0xd0] sm:$0xff] %vm3146, %v3140
        %3174 = vst.msk [vmem:[%s428 + $0xd8] sm:$0xff] %vm3146, %v3141
        %3175 = vst.msk [vmem:[%s428 + $0xe0] sm:$0xff] %vm3146, %v3142
        %3176 = vst.msk [vmem:[%s428 + $0xe8] sm:$0xff] %vm3146, %v3143
        %3177 = vst.msk [vmem:[%s428 + $0xf0] sm:$0xff] %vm3146, %v3144
        %3178 = vst.msk [vmem:[%s428 + $0xf8] sm:$0xff] %vm3146, %v3145
      $region48: #{tpu_custom_call.1} parent=35 // pred_fallthru
        _
      %s3179 = smul.u32 32, %s23
      %p3180 = scmp.lt.s32.totalorder %s21, 1
      %s3181 = scalar_select %p3180, %s21, 1
      %p3182 = scmp.lt.s32.totalorder %s22, 1
      %s3183 = scalar_select %p3182, %s22, 1
      %p3184 = scmp.lt.s32.totalorder %s3179, 31
      %s3185 = scalar_select %p3184, %s3179, 31
      %s3186 = smul.addr %s3183, 32
      %s3187 = sadd.s32 %s3185, %s3186
      %s3188 = smul.addr %s3181, 64
      %s3189 = sadd.s32 %s3187, %s3188
      %s3190 = smul.addr %s3189, 8
      %s3191 = scalar_lea.vmem %s4, %s3190
      // Predicated region
      $region49: #{tpu_custom_call.1} parent=35 // pred_check
        %p3192 = pneg %p183
      $region50: #{tpu_custom_call.1} parent=35 // pred_check_branch
        %3194 = sbr.rel (%p3192) target = $region52
      $region51: #{tpu_custom_call.1} parent=35 // pred_region
        %s3195 = smul.u32 32, %s23
      $region52: #{tpu_custom_call.1} parent=35 // pred_fallthru
        _
    $region36: #{tpu_custom_call.1} parent=5 // pred_fallthru
      _
    %p3196 = scmp.le.s32.totalorder 2, %s10
    // Predicated region
    $region53: #{tpu_custom_call.1} parent=5 // pred_check
      %p3197 = pneg %p3196
    $region54: #{tpu_custom_call.1} parent=5 // pred_check_branch
      %3199 = sbr.rel (%p3197) target = $region56
    $region55: #{tpu_custom_call.1} parent=5 // pred_region
      %s3200 = ssub.s32 %s10, 2
      // Predicated region
      $region57: #{tpu_custom_call.1} parent=55 // pred_check
        %p3201 = pneg %p189
      $region58: #{tpu_custom_call.1} parent=55 // pred_check_branch
        %3203 = sbr.rel (%p3201) target = $region60
      $region59: #{tpu_custom_call.1} parent=55 // pred_region
        %s3204 = smul.u32 32, %s27
        %p3205 = scmp.lt.s32.totalorder %s25, 1
        %s3206 = scalar_select %p3205, %s25, 1
        %p3207 = scmp.lt.s32.totalorder %s26, 1
        %s3208 = scalar_select %p3207, %s26, 1
        %p3209 = scmp.lt.s32.totalorder %s3204, 31
        %s3210 = scalar_select %p3209, %s3204, 31
        %s3211 = smul.addr %s3208, 32
        %s3212 = sadd.s32 %s3210, %s3211
        %s3213 = smul.addr %s3206, 64
        %s3214 = sadd.s32 %s3212, %s3213
        %s3215 = smul.addr %s3214, 8
        %s3216 = scalar_lea.vmem %s4, %s3215
      $region60: #{tpu_custom_call.1} parent=55 // pred_fallthru
        _
    $region56: #{tpu_custom_call.1} parent=5 // pred_fallthru
      _
  $region6: #{tpu_custom_call.1} parent=0 // loop_footer
    %s14 = sadd.s32 1, %s10
  $region7: #{tpu_custom_call.1} parent=0 // loop_footer_branch
    %9 = sbr.rel target = $region3
  $region8: #{tpu_custom_call.1} parent=0 // loop_exit
    _

</llo_original>
